<compile_context>
chip_gen: v6e
topology: v6e:2x2x1
jax: 0.10.0
libtpu: 0.0.40
codegen_flags: <defaults>
</compile_context>

<pallas_src>
import functools

import jax
import jax.numpy as jnp
from jax import lax
from jax.experimental import pallas as pl
from jax.experimental.pallas import tpu as pltpu


def _round_up(x: int, m: int) -> int:
    return (x + m - 1) // m * m


# --------------------------- hardware-aware sizing ---------------------------
def _tpu_hw():
    """(physical per-core VMEM bytes, MXU tile alignment) for the local TPU."""
    kind = ""
    try:
        kind = jax.devices()[0].device_kind.lower()
    except Exception:
        pass
    vmem = None
    try:
        vmem = int(pltpu.get_tpu_info().vmem_capacity_bytes)
    except Exception:
        pass
    if vmem is None:
        if "v7" in kind:
            vmem = 64 << 20                      # per TensorCore on v7x
        elif any(g in kind for g in ("v4", "v5", "v6")):
            vmem = 128 << 20
        else:
            vmem = 64 << 20                      # conservative default
    mxu = 256 if any(g in kind for g in ("v6", "v7")) else 128
    return vmem, mxu


def _plan_resident(n_pad, d_pad, vmem_budget):
    """Pick the feature-column tile TD for the resident-A path.

    Returns (td, use_ax0_scratch); (None, None) if single-buffered A plus the
    streaming feature/output blocks cannot fit the VMEM budget.
    """
    a_bytes = n_pad * n_pad * 2                  # bf16 adjacency, single-buffered

    def fits(td, nblocks):
        return a_bytes + nblocks * n_pad * td * 4 <= vmem_budget

    # 5 blocks = double-buffered x + double-buffered o + alpha*x0 scratch;
    # 4 blocks = drop the scratch when VMEM is tight (v7x).
    for nblocks, use_scratch in ((5, True), (4, False)):
        feasible = [t for t in (512, 256, 128)
                    if t <= d_pad and d_pad % t == 0 and fits(t, nblocks)]
        if not feasible:
            continue
        # Prefer >= 2 column blocks so v7x's second TensorCore gets work and the
        # x/o DMAs pipeline behind compute; among those, the widest tile.
        multi = [t for t in feasible if d_pad // t >= 2]
        return (max(multi) if multi else max(feasible)), use_scratch
    return None, None


def _largest_divisor_tile(total, prefs):
    for t in prefs:
        if total % t == 0:
            return t
    return total


# ------------------------------ Pallas kernels -------------------------------
def _appnp_resident_kernel(a_ref, x_ref, o_ref, *scratch, k, alpha, unroll, split):
    """k steps of personalized-PageRank propagation on one feature column block.

    a_ref  : (Np, Np) bf16 normalized adjacency (resident across the grid)
    x_ref  : (Np, TD) f32  feature column block (feat_0)
    o_ref  : (Np, TD) f32  output block, doubles as the running h buffer
    scratch: optional (Np, TD) f32 VMEM buffer holding alpha * feat_0
    """
    x0 = x_ref[...].astype(jnp.float32)
    if scratch:
        ax0_ref = scratch[0]
        ax0_ref[...] = alpha * x0            # teleport term, computed once per block

        def teleport(off, width):
            return ax0_ref[:, pl.ds(off, width)]
    else:
        # VMEM-tight configuration: recompute alpha*x0 every step (one vmul per
        # element, hidden under the MXU once Np is non-trivial).
        def teleport(off, width):
            return alpha * x_ref[:, pl.ds(off, width)].astype(jnp.float32)

    o_ref[...] = x0                          # h <- feat_0

    td = x_ref.shape[-1]
    if split and td % 256 == 0:
        # Two independent column halves: one half's MXU matmul hides the other
        # half's VPU epilogue (worthwhile in the small-Np regime).
        cols = ((0, td // 2), (td // 2, td // 2))
    else:
        cols = ((0, td),)

    def body(_, carry):
        for off, width in cols:              # static Python loop (independent cols)
            h = o_ref[:, pl.ds(off, width)].astype(jnp.bfloat16)
            agg = jnp.dot(a_ref[...], h, preferred_element_type=jnp.float32)
            o_ref[:, pl.ds(off, width)] = (1.0 - alpha) * agg + teleport(off, width)
        return carry

    lax.fori_loop(0, k, body, 0, unroll=unroll)


def _appnp_streamed_step_kernel(a_ref, h_ref, x0_ref, o_ref, acc_ref, *, alpha):
    """One propagation step with A streamed from HBM, tiled (rows, cols, contraction)."""
    kk = pl.program_id(2)

    @pl.when(kk == 0)
    def _():
        acc_ref[...] = jnp.zeros_like(acc_ref)

    acc_ref[...] += jnp.dot(a_ref[...], h_ref[...].astype(jnp.bfloat16),
                            preferred_element_type=jnp.float32)

    @pl.when(kk == pl.num_programs(2) - 1)
    def _():
        o_ref[...] = (1.0 - alpha) * acc_ref[...] + alpha * x0_ref[...]


# ------------------------------- host wrappers --------------------------------
def _resident_pallas_call(a_bf16, x_pad, *, k, alpha, td, use_scratch,
                          vmem_limit, single_buffer_a):
    n_pad = a_bf16.shape[0]
    d_pad = x_pad.shape[1]
    kernel = functools.partial(
        _appnp_resident_kernel, k=k, alpha=alpha,
        unroll=(True if k <= 8 else 4),               # partial unroll for large k
        split=(n_pad <= 512 and td % 256 == 0))       # epilogue hiding at small Np

    if single_buffer_a:
        # A's index_map is constant -> one pipeline buffer suffices; halves its
        # VMEM footprint versus the default double-buffering.
        a_spec = pl.BlockSpec((n_pad, n_pad), lambda j: (0, 0),
                              pipeline_mode=pl.Buffered(1))
    else:
        a_spec = pl.BlockSpec((n_pad, n_pad), lambda j: (0, 0))

    scratch_shapes = [pltpu.VMEM((n_pad, td), jnp.float32)] if use_scratch else []

    cost = pl.CostEstimate(
        flops=2 * k * n_pad * n_pad * d_pad,
        transcendentals=0,
        bytes_accessed=n_pad * n_pad * 2 + 2 * n_pad * d_pad * 4,
    )
    return pl.pallas_call(
        kernel,
        out_shape=jax.ShapeDtypeStruct((n_pad, d_pad), jnp.float32),
        grid=(d_pad // td,),
        in_specs=[a_spec,                                        # A: resident
                  pl.BlockSpec((n_pad, td), lambda j: (0, j))],  # feat_0 columns
        out_specs=pl.BlockSpec((n_pad, td), lambda j: (0, j)),
        scratch_shapes=scratch_shapes,
        compiler_params=pltpu.CompilerParams(
            dimension_semantics=("parallel",),
            vmem_limit_bytes=vmem_limit),
        cost_estimate=cost,
    )(a_bf16, x_pad)


def _streamed_propagate(a_bf16, x_pad, *, k, alpha, vmem_budget):
    """Fallback for graphs whose adjacency cannot stay resident in VMEM."""
    n_pad = a_bf16.shape[0]
    d_pad = x_pad.shape[1]
    tm = _largest_divisor_tile(n_pad, (256, 128))
    tk = _largest_divisor_tile(n_pad, (512, 256, 128))
    tn = _largest_divisor_tile(d_pad, (256, 128))

    tile_bytes = (2 * tm * tk * 2          # A blocks (bf16, double-buffered)
                  + 2 * tk * tn * 4        # h blocks
                  + 2 * tm * tn * 4        # feat_0 blocks
                  + 2 * tm * tn * 4        # output blocks
                  + tm * tn * 4)           # f32 accumulator scratch
    vmem_limit = int(min(max(tile_bytes + (8 << 20), 32 << 20), vmem_budget))

    cost = pl.CostEstimate(
        flops=2 * n_pad * n_pad * d_pad,
        transcendentals=0,
        bytes_accessed=n_pad * n_pad * 2 + 3 * n_pad * d_pad * 4,
    )
    step = pl.pallas_call(
        functools.partial(_appnp_streamed_step_kernel, alpha=alpha),
        out_shape=jax.ShapeDtypeStruct((n_pad, d_pad), jnp.float32),
        grid=(n_pad // tm, d_pad // tn, n_pad // tk),
        in_specs=[
            pl.BlockSpec((tm, tk), lambda i, j, kk: (i, kk)),   # A (streamed)
            pl.BlockSpec((tk, tn), lambda i, j, kk: (kk, j)),   # running h
            pl.BlockSpec((tm, tn), lambda i, j, kk: (i, j)),    # feat_0
        ],
        out_specs=pl.BlockSpec((tm, tn), lambda i, j, kk: (i, j)),
        scratch_shapes=[pltpu.VMEM((tm, tn), jnp.float32)],
        compiler_params=pltpu.CompilerParams(
            dimension_semantics=("parallel", "parallel", "arbitrary"),
            vmem_limit_bytes=vmem_limit),
        cost_estimate=cost,
    )
    h = x_pad
    for _ in range(k):                      # k is a small static Python int
        h = step(a_bf16, h, x_pad)
    return h


def appnp_propagate(a_hat, feat, *, k, alpha, force_streamed=False):
    """APPNP propagation: feat <- (1-alpha) * (A_hat @ feat) + alpha * feat_0, k times."""
    n, d = feat.shape
    assert a_hat.shape == (n, n)

    vmem_phys, mxu_align = _tpu_hw()
    # Usable VMEM budget per generation: ~104 MiB of the 128 MiB on v5e/v6e,
    # physical-minus-headroom (~58 MiB) on v7x's 64 MiB-per-TC chips.
    if vmem_phys >= (128 << 20):
        vmem_budget = 104 << 20
    else:
        vmem_budget = max(vmem_phys - (6 << 20), 32 << 20)

    n_pad = max(_round_up(n, mxu_align), 128)   # MXU-aligned (256 on v6e/v7x)
    d_pad = max(_round_up(d, 128), 128)         # lane-aligned

    # Zero padding is numerically inert for this recurrence.
    a_bf16 = jnp.zeros((n_pad, n_pad), jnp.bfloat16).at[:n, :n].set(
        a_hat.astype(jnp.bfloat16))
    x_pad = jnp.zeros((n_pad, d_pad), jnp.float32).at[:n, :d].set(
        feat.astype(jnp.float32))

    td = use_scratch = None
    if not force_streamed:
        td, use_scratch = _plan_resident(n_pad, d_pad, vmem_budget)

    if td is None:
        # A_hat does not fit residently in the per-core VMEM budget: stream it.
        out_pad = _streamed_propagate(a_bf16, x_pad, k=k, alpha=alpha,
                                      vmem_budget=vmem_budget)
    else:
        a_bytes = n_pad * n_pad * 2
        blk_bytes = (5 if use_scratch else 4) * n_pad * td * 4
        lim_single = int(min(max(a_bytes + blk_bytes + (4 << 20), 32 << 20),
                             vmem_budget))
        lim_double = int(min(max(2 * a_bytes + blk_bytes + (4 << 20), 32 << 20),
                             vmem_budget))
        try:
            out_pad = jax.block_until_ready(_resident_pallas_call(
                a_bf16, x_pad, k=k, alpha=alpha, td=td, use_scratch=use_scratch,
                vmem_limit=lim_single, single_buffer_a=True))
        except Exception:
            # pipeline_mode=pl.Buffered(1) unavailable on this jax/libtpu:
            # fall back to the default double-buffered adjacency spec.
            out_pad = jax.block_until_ready(_resident_pallas_call(
                a_bf16, x_pad, k=k, alpha=alpha, td=td, use_scratch=use_scratch,
                vmem_limit=lim_double, single_buffer_a=False))

    return out_pad[:n, :d].astype(feat.dtype)


# ------------------------------ JAX glue (graph) ------------------------------
def build_normalized_adjacency(src, dst, num_nodes, *, norm="both",
                               edge_weight=None, add_self_loop=True):
    """Dense A_hat[v, u] = normalized weight of edge u -> v (dgl_normalize)."""
    src = jnp.asarray(src, jnp.int32)
    dst = jnp.asarray(dst, jnp.int32)
    if edge_weight is None:
        edge_weight = jnp.ones((src.shape[0],), jnp.float32)
    if add_self_loop:
        loop = jnp.arange(num_nodes, dtype=jnp.int32)
        src = jnp.concatenate([src, loop])
        dst = jnp.concatenate([dst, loop])
        edge_weight = jnp.concatenate(
            [edge_weight, jnp.ones((num_nodes,), edge_weight.dtype)])

    # A_hat[v, u] += w_{u->v}   (multi-edges accumulate, as in DGL)
    a = jnp.zeros((num_nodes, num_nodes), jnp.float32)
    a = a.at[dst, src].add(edge_weight.astype(jnp.float32))

    in_deg = a.sum(axis=1)    # weighted in-degree of destination v
    out_deg = a.sum(axis=0)   # weighted out-degree of source u

    def safe_pow(x, p):
        y = jnp.where(x > 0, x, 1.0) ** p
        return jnp.where(x > 0, y, 0.0)

    if norm == "both":
        a = a * safe_pow(in_deg, -0.5)[:, None] * safe_pow(out_deg, -0.5)[None, :]
    elif norm == "right":
        a = a * safe_pow(in_deg, -1.0)[:, None]
    elif norm == "left":
        a = a * safe_pow(out_deg, -1.0)[None, :]
    elif norm == "none":
        pass
    else:
        raise ValueError(f"invalid norm {norm!r}")
    return a


def appnp_reference_f32(a_hat, feat, *, k, alpha):
    """Full-precision reference (module semantics)."""
    h = feat
    for _ in range(k):
        h = (1.0 - alpha) * (a_hat @ h) + alpha * feat
    return h


def appnp_reference_matched(a_hat, feat, *, k, alpha):
    """Reference matching the kernel's bf16-matmul / f32-accumulate path."""
    a_bf16 = a_hat.astype(jnp.bfloat16)
    x0 = feat.astype(jnp.float32)
    h = x0
    for _ in range(k):
        agg = jnp.dot(a_bf16, h.astype(jnp.bfloat16),
                      preferred_element_type=jnp.float32)
        h = (1.0 - alpha) * agg + alpha * x0
    return h


# ----------------------------------- main -------------------------------------
if __name__ == "__main__":
    # Module config (small k for the demo).
    K = 4
    ALPHA = 0.1
    NORM = "both"
    ADD_SELF_LOOP = True
    # TODO(synk): edge_drop (nn.Dropout on edge weights) is p=0.0 by default /
    # identity at inference, so it is intentionally omitted.

    N_NODES = 16      # N
    D_FEAT = 512      # D_in == D_out (multi-column grid + split-epilogue path)
    N_EDGES = 48

    key = jax.random.PRNGKey(0)
    k_src, k_dst, k_feat = jax.random.split(key, 3)
    src = jax.random.randint(k_src, (N_EDGES,), 0, N_NODES)
    dst = jax.random.randint(k_dst, (N_EDGES,), 0, N_NODES)
    feat = jax.random.normal(k_feat, (N_NODES, D_FEAT), jnp.float32)

    a_hat = build_normalized_adjacency(
        src, dst, N_NODES, norm=NORM, edge_weight=None,
        add_self_loop=ADD_SELF_LOOP)

    # Resident-A path.
    out = jax.block_until_ready(appnp_propagate(a_hat, feat, k=K, alpha=ALPHA))
    assert out.shape == (N_NODES, D_FEAT) and out.dtype == jnp.float32

    # Bit-compatible reference (bf16 matmul, f32 accumulate).
    ref_matched = appnp_reference_matched(a_hat, feat, k=K, alpha=ALPHA)
    assert jnp.allclose(out, ref_matched, rtol=1e-3, atol=1e-3), \
        "mismatch vs matched-precision reference"

    # Full-precision semantic reference (looser tolerance for bf16 adjacency).
    ref_f32 = appnp_reference_f32(a_hat, feat, k=K, alpha=ALPHA)
    assert jnp.allclose(out, ref_f32, rtol=5e-2, atol=5e-2), \
        "mismatch vs f32 reference"

    # Exercise the streamed-A fallback path (used when the adjacency cannot stay
    # resident in VMEM) on the same small problem.
    out_s = jax.block_until_ready(
        appnp_propagate(a_hat, feat, k=K, alpha=ALPHA, force_streamed=True))
    assert jnp.allclose(out_s, ref_matched, rtol=1e-3, atol=1e-3), \
        "streamed path mismatch vs matched-precision reference"

    print("KERNEL_OK")
</pallas_src>

<mosaic_0001>
module attributes {stable_mosaic.version = 11 : i64} {
  func.func @_appnp_resident_kernel(%arg0: i32, %arg1: memref<128x128xbf16, #tpu.memory_space<vmem>>, %arg2: memref<128x256xf32, #tpu.memory_space<vmem>>, %arg3: memref<128x256xf32, #tpu.memory_space<vmem>>, %arg4: memref<128x256xf32, #tpu.memory_space<vmem>>) attributes {dimension_semantics = [#tpu.dimension_semantics<parallel>], iteration_bounds = array<i64: 2>, scalar_prefetch = 0 : i64, scratch_operands = 1 : i64, tpu.core_type = #tpu.core_type<tc>, window_params = [{pipeline_mode = #tpu.pipeline_mode<synchronous>, transform_indices = @transform_0, window_bounds = array<i64: 128, 128>}, {transform_indices = @transform_1, window_bounds = array<i64: 128, 256>}, {transform_indices = @transform_2, window_bounds = array<i64: 128, 256>}]} {
    %c0 = arith.constant 0 : index
    %c0_0 = arith.constant 0 : index
    %0 = vector.load %arg2[%c0, %c0_0] : memref<128x256xf32, #tpu.memory_space<vmem>>, vector<128x256xf32>
    %cst = arith.constant 1.000000e-01 : f32
    %1 = vector.broadcast %cst : f32 to vector<128x256xf32>
    %2 = arith.mulf %1, %0 : vector<128x256xf32>
    %c0_1 = arith.constant 0 : index
    %c0_2 = arith.constant 0 : index
    %3 = vector.load %arg4[%c0_1, %c0_2] : memref<128x256xf32, #tpu.memory_space<vmem>>, vector<128x256xf32>
    tpu.vector_store %arg4[%c0_1, %c0_2], %2 {strides = array<i32>} : memref<128x256xf32, #tpu.memory_space<vmem>>, vector<128x256xf32>,
    %c0_3 = arith.constant 0 : index
    %c0_4 = arith.constant 0 : index
    %4 = vector.load %arg3[%c0_3, %c0_4] : memref<128x256xf32, #tpu.memory_space<vmem>>, vector<128x256xf32>
    tpu.vector_store %arg3[%c0_3, %c0_4], %0 {strides = array<i32>} : memref<128x256xf32, #tpu.memory_space<vmem>>, vector<128x256xf32>,
    %c0_i32 = arith.constant 0 : i32
    %c0_5 = arith.constant 0 : index
    %c0_6 = arith.constant 0 : index
    %5 = vector.load %arg3[%c0_5, %c0_6] : memref<128x256xf32, #tpu.memory_space<vmem>>, vector<128x128xf32>
    %6 = arith.truncf %5 : vector<128x128xf32> to vector<128x128xbf16>
    %c0_7 = arith.constant 0 : index
    %c0_8 = arith.constant 0 : index
    %7 = vector.load %arg1[%c0_7, %c0_8] : memref<128x128xbf16, #tpu.memory_space<vmem>>, vector<128x128xbf16>
    %cst_9 = arith.constant dense<0.000000e+00> : vector<128x128xf32>
    %8 = tpu.matmul %7, %6, %cst_9 {dimension_numbers = #tpu.dot_dimension_numbers<[1], [0], [0], [1], [0, 0, 1, 1], [], []>} : vector<128x128xbf16>, vector<128x128xbf16>, vector<128x128xf32> -> vector<128x128xf32>
    %cst_10 = arith.constant 0.899999976 : f32
    %9 = vector.broadcast %cst_10 : f32 to vector<128x128xf32>
    %10 = arith.mulf %9, %8 : vector<128x128xf32>
    %c0_11 = arith.constant 0 : index
    %c0_12 = arith.constant 0 : index
    %11 = vector.load %arg4[%c0_11, %c0_12] : memref<128x256xf32, #tpu.memory_space<vmem>>, vector<128x128xf32>
    %12 = arith.addf %10, %11 : vector<128x128xf32>
    %c0_13 = arith.constant 0 : index
    %c0_14 = arith.constant 0 : index
    %13 = vector.load %arg3[%c0_13, %c0_14] : memref<128x256xf32, #tpu.memory_space<vmem>>, vector<128x128xf32>
    tpu.vector_store %arg3[%c0_13, %c0_14], %12 {strides = array<i32>} : memref<128x256xf32, #tpu.memory_space<vmem>>, vector<128x128xf32>,
    %c0_15 = arith.constant 0 : index
    %c128 = arith.constant 128 : index
    %14 = vector.load %arg3[%c0_15, %c128] : memref<128x256xf32, #tpu.memory_space<vmem>>, vector<128x128xf32>
    %15 = arith.truncf %14 : vector<128x128xf32> to vector<128x128xbf16>
    %c0_16 = arith.constant 0 : index
    %c0_17 = arith.constant 0 : index
    %16 = vector.load %arg1[%c0_16, %c0_17] : memref<128x128xbf16, #tpu.memory_space<vmem>>, vector<128x128xbf16>
    %cst_18 = arith.constant dense<0.000000e+00> : vector<128x128xf32>
    %17 = tpu.matmul %16, %15, %cst_18 {dimension_numbers = #tpu.dot_dimension_numbers<[1], [0], [0], [1], [0, 0, 1, 1], [], []>} : vector<128x128xbf16>, vector<128x128xbf16>, vector<128x128xf32> -> vector<128x128xf32>
    %cst_19 = arith.constant 0.899999976 : f32
    %18 = vector.broadcast %cst_19 : f32 to vector<128x128xf32>
    %19 = arith.mulf %18, %17 : vector<128x128xf32>
    %c0_20 = arith.constant 0 : index
    %c128_21 = arith.constant 128 : index
    %20 = vector.load %arg4[%c0_20, %c128_21] : memref<128x256xf32, #tpu.memory_space<vmem>>, vector<128x128xf32>
    %21 = arith.addf %19, %20 : vector<128x128xf32>
    %c0_22 = arith.constant 0 : index
    %c128_23 = arith.constant 128 : index
    %22 = vector.load %arg3[%c0_22, %c128_23] : memref<128x256xf32, #tpu.memory_space<vmem>>, vector<128x128xf32>
    tpu.vector_store %arg3[%c0_22, %c128_23], %21 {strides = array<i32>} : memref<128x256xf32, #tpu.memory_space<vmem>>, vector<128x128xf32>,
    %c1_i32 = arith.constant 1 : i32
    %c0_24 = arith.constant 0 : index
    %c0_25 = arith.constant 0 : index
    %23 = vector.load %arg3[%c0_24, %c0_25] : memref<128x256xf32, #tpu.memory_space<vmem>>, vector<128x128xf32>
    %24 = arith.truncf %23 : vector<128x128xf32> to vector<128x128xbf16>
    %c0_26 = arith.constant 0 : index
    %c0_27 = arith.constant 0 : index
    %25 = vector.load %arg1[%c0_26, %c0_27] : memref<128x128xbf16, #tpu.memory_space<vmem>>, vector<128x128xbf16>
    %cst_28 = arith.constant dense<0.000000e+00> : vector<128x128xf32>
    %26 = tpu.matmul %25, %24, %cst_28 {dimension_numbers = #tpu.dot_dimension_numbers<[1], [0], [0], [1], [0, 0, 1, 1], [], []>} : vector<128x128xbf16>, vector<128x128xbf16>, vector<128x128xf32> -> vector<128x128xf32>
    %cst_29 = arith.constant 0.899999976 : f32
    %27 = vector.broadcast %cst_29 : f32 to vector<128x128xf32>
    %28 = arith.mulf %27, %26 : vector<128x128xf32>
    %c0_30 = arith.constant 0 : index
    %c0_31 = arith.constant 0 : index
    %29 = vector.load %arg4[%c0_30, %c0_31] : memref<128x256xf32, #tpu.memory_space<vmem>>, vector<128x128xf32>
    %30 = arith.addf %28, %29 : vector<128x128xf32>
    %c0_32 = arith.constant 0 : index
    %c0_33 = arith.constant 0 : index
    %31 = vector.load %arg3[%c0_32, %c0_33] : memref<128x256xf32, #tpu.memory_space<vmem>>, vector<128x128xf32>
    tpu.vector_store %arg3[%c0_32, %c0_33], %30 {strides = array<i32>} : memref<128x256xf32, #tpu.memory_space<vmem>>, vector<128x128xf32>,
    %c0_34 = arith.constant 0 : index
    %c128_35 = arith.constant 128 : index
    %32 = vector.load %arg3[%c0_34, %c128_35] : memref<128x256xf32, #tpu.memory_space<vmem>>, vector<128x128xf32>
    %33 = arith.truncf %32 : vector<128x128xf32> to vector<128x128xbf16>
    %c0_36 = arith.constant 0 : index
    %c0_37 = arith.constant 0 : index
    %34 = vector.load %arg1[%c0_36, %c0_37] : memref<128x128xbf16, #tpu.memory_space<vmem>>, vector<128x128xbf16>
    %cst_38 = arith.constant dense<0.000000e+00> : vector<128x128xf32>
    %35 = tpu.matmul %34, %33, %cst_38 {dimension_numbers = #tpu.dot_dimension_numbers<[1], [0], [0], [1], [0, 0, 1, 1], [], []>} : vector<128x128xbf16>, vector<128x128xbf16>, vector<128x128xf32> -> vector<128x128xf32>
    %cst_39 = arith.constant 0.899999976 : f32
    %36 = vector.broadcast %cst_39 : f32 to vector<128x128xf32>
    %37 = arith.mulf %36, %35 : vector<128x128xf32>
    %c0_40 = arith.constant 0 : index
    %c128_41 = arith.constant 128 : index
    %38 = vector.load %arg4[%c0_40, %c128_41] : memref<128x256xf32, #tpu.memory_space<vmem>>, vector<128x128xf32>
    %39 = arith.addf %37, %38 : vector<128x128xf32>
    %c0_42 = arith.constant 0 : index
    %c128_43 = arith.constant 128 : index
    %40 = vector.load %arg3[%c0_42, %c128_43] : memref<128x256xf32, #tpu.memory_space<vmem>>, vector<128x128xf32>
    tpu.vector_store %arg3[%c0_42, %c128_43], %39 {strides = array<i32>} : memref<128x256xf32, #tpu.memory_space<vmem>>, vector<128x128xf32>,
    %c2_i32 = arith.constant 2 : i32
    %c0_44 = arith.constant 0 : index
    %c0_45 = arith.constant 0 : index
    %41 = vector.load %arg3[%c0_44, %c0_45] : memref<128x256xf32, #tpu.memory_space<vmem>>, vector<128x128xf32>
    %42 = arith.truncf %41 : vector<128x128xf32> to vector<128x128xbf16>
    %c0_46 = arith.constant 0 : index
    %c0_47 = arith.constant 0 : index
    %43 = vector.load %arg1[%c0_46, %c0_47] : memref<128x128xbf16, #tpu.memory_space<vmem>>, vector<128x128xbf16>
    %cst_48 = arith.constant dense<0.000000e+00> : vector<128x128xf32>
    %44 = tpu.matmul %43, %42, %cst_48 {dimension_numbers = #tpu.dot_dimension_numbers<[1], [0], [0], [1], [0, 0, 1, 1], [], []>} : vector<128x128xbf16>, vector<128x128xbf16>, vector<128x128xf32> -> vector<128x128xf32>
    %cst_49 = arith.constant 0.899999976 : f32
    %45 = vector.broadcast %cst_49 : f32 to vector<128x128xf32>
    %46 = arith.mulf %45, %44 : vector<128x128xf32>
    %c0_50 = arith.constant 0 : index
    %c0_51 = arith.constant 0 : index
    %47 = vector.load %arg4[%c0_50, %c0_51] : memref<128x256xf32, #tpu.memory_space<vmem>>, vector<128x128xf32>
    %48 = arith.addf %46, %47 : vector<128x128xf32>
    %c0_52 = arith.constant 0 : index
    %c0_53 = arith.constant 0 : index
    %49 = vector.load %arg3[%c0_52, %c0_53] : memref<128x256xf32, #tpu.memory_space<vmem>>, vector<128x128xf32>
    tpu.vector_store %arg3[%c0_52, %c0_53], %48 {strides = array<i32>} : memref<128x256xf32, #tpu.memory_space<vmem>>, vector<128x128xf32>,
    %c0_54 = arith.constant 0 : index
    %c128_55 = arith.constant 128 : index
    %50 = vector.load %arg3[%c0_54, %c128_55] : memref<128x256xf32, #tpu.memory_space<vmem>>, vector<128x128xf32>
    %51 = arith.truncf %50 : vector<128x128xf32> to vector<128x128xbf16>
    %c0_56 = arith.constant 0 : index
    %c0_57 = arith.constant 0 : index
    %52 = vector.load %arg1[%c0_56, %c0_57] : memref<128x128xbf16, #tpu.memory_space<vmem>>, vector<128x128xbf16>
    %cst_58 = arith.constant dense<0.000000e+00> : vector<128x128xf32>
    %53 = tpu.matmul %52, %51, %cst_58 {dimension_numbers = #tpu.dot_dimension_numbers<[1], [0], [0], [1], [0, 0, 1, 1], [], []>} : vector<128x128xbf16>, vector<128x128xbf16>, vector<128x128xf32> -> vector<128x128xf32>
    %cst_59 = arith.constant 0.899999976 : f32
    %54 = vector.broadcast %cst_59 : f32 to vector<128x128xf32>
    %55 = arith.mulf %54, %53 : vector<128x128xf32>
    %c0_60 = arith.constant 0 : index
    %c128_61 = arith.constant 128 : index
    %56 = vector.load %arg4[%c0_60, %c128_61] : memref<128x256xf32, #tpu.memory_space<vmem>>, vector<128x128xf32>
    %57 = arith.addf %55, %56 : vector<128x128xf32>
    %c0_62 = arith.constant 0 : index
    %c128_63 = arith.constant 128 : index
    %58 = vector.load %arg3[%c0_62, %c128_63] : memref<128x256xf32, #tpu.memory_space<vmem>>, vector<128x128xf32>
    tpu.vector_store %arg3[%c0_62, %c128_63], %57 {strides = array<i32>} : memref<128x256xf32, #tpu.memory_space<vmem>>, vector<128x128xf32>,
    %c3_i32 = arith.constant 3 : i32
    %c0_64 = arith.constant 0 : index
    %c0_65 = arith.constant 0 : index
    %59 = vector.load %arg3[%c0_64, %c0_65] : memref<128x256xf32, #tpu.memory_space<vmem>>, vector<128x128xf32>
    %60 = arith.truncf %59 : vector<128x128xf32> to vector<128x128xbf16>
    %c0_66 = arith.constant 0 : index
    %c0_67 = arith.constant 0 : index
    %61 = vector.load %arg1[%c0_66, %c0_67] : memref<128x128xbf16, #tpu.memory_space<vmem>>, vector<128x128xbf16>
    %cst_68 = arith.constant dense<0.000000e+00> : vector<128x128xf32>
    %62 = tpu.matmul %61, %60, %cst_68 {dimension_numbers = #tpu.dot_dimension_numbers<[1], [0], [0], [1], [0, 0, 1, 1], [], []>} : vector<128x128xbf16>, vector<128x128xbf16>, vector<128x128xf32> -> vector<128x128xf32>
    %cst_69 = arith.constant 0.899999976 : f32
    %63 = vector.broadcast %cst_69 : f32 to vector<128x128xf32>
    %64 = arith.mulf %63, %62 : vector<128x128xf32>
    %c0_70 = arith.constant 0 : index
    %c0_71 = arith.constant 0 : index
    %65 = vector.load %arg4[%c0_70, %c0_71] : memref<128x256xf32, #tpu.memory_space<vmem>>, vector<128x128xf32>
    %66 = arith.addf %64, %65 : vector<128x128xf32>
    %c0_72 = arith.constant 0 : index
    %c0_73 = arith.constant 0 : index
    %67 = vector.load %arg3[%c0_72, %c0_73] : memref<128x256xf32, #tpu.memory_space<vmem>>, vector<128x128xf32>
    tpu.vector_store %arg3[%c0_72, %c0_73], %66 {strides = array<i32>} : memref<128x256xf32, #tpu.memory_space<vmem>>, vector<128x128xf32>,
    %c0_74 = arith.constant 0 : index
    %c128_75 = arith.constant 128 : index
    %68 = vector.load %arg3[%c0_74, %c128_75] : memref<128x256xf32, #tpu.memory_space<vmem>>, vector<128x128xf32>
    %69 = arith.truncf %68 : vector<128x128xf32> to vector<128x128xbf16>
    %c0_76 = arith.constant 0 : index
    %c0_77 = arith.constant 0 : index
    %70 = vector.load %arg1[%c0_76, %c0_77] : memref<128x128xbf16, #tpu.memory_space<vmem>>, vector<128x128xbf16>
    %cst_78 = arith.constant dense<0.000000e+00> : vector<128x128xf32>
    %71 = tpu.matmul %70, %69, %cst_78 {dimension_numbers = #tpu.dot_dimension_numbers<[1], [0], [0], [1], [0, 0, 1, 1], [], []>} : vector<128x128xbf16>, vector<128x128xbf16>, vector<128x128xf32> -> vector<128x128xf32>
    %cst_79 = arith.constant 0.899999976 : f32
    %72 = vector.broadcast %cst_79 : f32 to vector<128x128xf32>
    %73 = arith.mulf %72, %71 : vector<128x128xf32>
    %c0_80 = arith.constant 0 : index
    %c128_81 = arith.constant 128 : index
    %74 = vector.load %arg4[%c0_80, %c128_81] : memref<128x256xf32, #tpu.memory_space<vmem>>, vector<128x128xf32>
    %75 = arith.addf %73, %74 : vector<128x128xf32>
    %c0_82 = arith.constant 0 : index
    %c128_83 = arith.constant 128 : index
    %76 = vector.load %arg3[%c0_82, %c128_83] : memref<128x256xf32, #tpu.memory_space<vmem>>, vector<128x128xf32>
    tpu.vector_store %arg3[%c0_82, %c128_83], %75 {strides = array<i32>} : memref<128x256xf32, #tpu.memory_space<vmem>>, vector<128x128xf32>,
    return
  }
  func.func @transform_0(%arg0: i32) -> (i32, i32) {
    %c0_i32 = arith.constant 0 : i32
    %c0_i32_0 = arith.constant 0 : i32
    %c0_i32_1 = arith.constant 0 : i32
    return %c0_i32, %c0_i32_0 : i32, i32
  }
  func.func @transform_1(%arg0: i32) -> (i32, i32) {
    %c0_i32 = arith.constant 0 : i32
    %c0_i32_0 = arith.constant 0 : i32
    return %c0_i32, %arg0 : i32, i32
  }
  func.func @transform_2(%arg0: i32) -> (i32, i32) {
    %c0_i32 = arith.constant 0 : i32
    %c0_i32_0 = arith.constant 0 : i32
    return %c0_i32, %arg0 : i32, i32
  }
}

module attributes {stable_mosaic.version = 11 : i64} {
  func.func @_appnp_resident_kernel(%arg0: i32, %arg1: memref<128x128xbf16, #tpu.memory_space<vmem>>, %arg2: memref<128x256xf32, #tpu.memory_space<vmem>>, %arg3: memref<128x256xf32, #tpu.memory_space<vmem>>, %arg4: memref<128x256xf32, #tpu.memory_space<vmem>>) attributes {dimension_semantics = [#tpu.dimension_semantics<parallel>], iteration_bounds = array<i64: 2>, scalar_prefetch = 0 : i64, scratch_operands = 1 : i64, tpu.core_type = #tpu.core_type<tc>, window_params = [{pipeline_mode = #tpu.pipeline_mode<synchronous>, transform_indices = @transform_0, window_bounds = array<i64: 128, 128>}, {transform_indices = @transform_1, window_bounds = array<i64: 128, 256>}, {transform_indices = @transform_2, window_bounds = array<i64: 128, 256>}]} {
    %c0 = arith.constant 0 : index
    %c0_0 = arith.constant 0 : index
    %0 = vector.load %arg2[%c0, %c0_0] : memref<128x256xf32, #tpu.memory_space<vmem>>, vector<128x256xf32>
    %cst = arith.constant 1.000000e-01 : f32
    %1 = vector.broadcast %cst : f32 to vector<128x256xf32>
    %2 = arith.mulf %1, %0 : vector<128x256xf32>
    %c0_1 = arith.constant 0 : index
    %c0_2 = arith.constant 0 : index
    %3 = vector.load %arg4[%c0_1, %c0_2] : memref<128x256xf32, #tpu.memory_space<vmem>>, vector<128x256xf32>
    tpu.vector_store %arg4[%c0_1, %c0_2], %2 {strides = array<i32>} : memref<128x256xf32, #tpu.memory_space<vmem>>, vector<128x256xf32>,
    %c0_3 = arith.constant 0 : index
    %c0_4 = arith.constant 0 : index
    %4 = vector.load %arg3[%c0_3, %c0_4] : memref<128x256xf32, #tpu.memory_space<vmem>>, vector<128x256xf32>
    tpu.vector_store %arg3[%c0_3, %c0_4], %0 {strides = array<i32>} : memref<128x256xf32, #tpu.memory_space<vmem>>, vector<128x256xf32>,
    %c0_i32 = arith.constant 0 : i32
    %c0_5 = arith.constant 0 : index
    %c0_6 = arith.constant 0 : index
    %5 = vector.load %arg3[%c0_5, %c0_6] : memref<128x256xf32, #tpu.memory_space<vmem>>, vector<128x128xf32>
    %6 = arith.truncf %5 : vector<128x128xf32> to vector<128x128xbf16>
    %c0_7 = arith.constant 0 : index
    %c0_8 = arith.constant 0 : index
    %7 = vector.load %arg1[%c0_7, %c0_8] : memref<128x128xbf16, #tpu.memory_space<vmem>>, vector<128x128xbf16>
    %cst_9 = arith.constant dense<0.000000e+00> : vector<128x128xf32>
    %8 = tpu.matmul %7, %6, %cst_9 {dimension_numbers = #tpu.dot_dimension_numbers<[1], [0], [0], [1], [0, 0, 1, 1], [], []>} : vector<128x128xbf16>, vector<128x128xbf16>, vector<128x128xf32> -> vector<128x128xf32>
    %cst_10 = arith.constant 0.899999976 : f32
    %9 = vector.broadcast %cst_10 : f32 to vector<128x128xf32>
    %10 = arith.mulf %9, %8 : vector<128x128xf32>
    %c0_11 = arith.constant 0 : index
    %c0_12 = arith.constant 0 : index
    %11 = vector.load %arg4[%c0_11, %c0_12] : memref<128x256xf32, #tpu.memory_space<vmem>>, vector<128x128xf32>
    %12 = arith.addf %10, %11 : vector<128x128xf32>
    %c0_13 = arith.constant 0 : index
    %c0_14 = arith.constant 0 : index
    %13 = vector.load %arg3[%c0_13, %c0_14] : memref<128x256xf32, #tpu.memory_space<vmem>>, vector<128x128xf32>
    tpu.vector_store %arg3[%c0_13, %c0_14], %12 {strides = array<i32>} : memref<128x256xf32, #tpu.memory_space<vmem>>, vector<128x128xf32>,
    %c0_15 = arith.constant 0 : index
    %c128 = arith.constant 128 : index
    %14 = vector.load %arg3[%c0_15, %c128] : memref<128x256xf32, #tpu.memory_space<vmem>>, vector<128x128xf32>
    %15 = arith.truncf %14 : vector<128x128xf32> to vector<128x128xbf16>
    %c0_16 = arith.constant 0 : index
    %c0_17 = arith.constant 0 : index
    %16 = vector.load %arg1[%c0_16, %c0_17] : memref<128x128xbf16, #tpu.memory_space<vmem>>, vector<128x128xbf16>
    %cst_18 = arith.constant dense<0.000000e+00> : vector<128x128xf32>
    %17 = tpu.matmul %16, %15, %cst_18 {dimension_numbers = #tpu.dot_dimension_numbers<[1], [0], [0], [1], [0, 0, 1, 1], [], []>} : vector<128x128xbf16>, vector<128x128xbf16>, vector<128x128xf32> -> vector<128x128xf32>
    %cst_19 = arith.constant 0.899999976 : f32
    %18 = vector.broadcast %cst_19 : f32 to vector<128x128xf32>
    %19 = arith.mulf %18, %17 : vector<128x128xf32>
    %c0_20 = arith.constant 0 : index
    %c128_21 = arith.constant 128 : index
    %20 = vector.load %arg4[%c0_20, %c128_21] : memref<128x256xf32, #tpu.memory_space<vmem>>, vector<128x128xf32>
    %21 = arith.addf %19, %20 : vector<128x128xf32>
    %c0_22 = arith.constant 0 : index
    %c128_23 = arith.constant 128 : index
    %22 = vector.load %arg3[%c0_22, %c128_23] : memref<128x256xf32, #tpu.memory_space<vmem>>, vector<128x128xf32>
    tpu.vector_store %arg3[%c0_22, %c128_23], %21 {strides = array<i32>} : memref<128x256xf32, #tpu.memory_space<vmem>>, vector<128x128xf32>,
    %c1_i32 = arith.constant 1 : i32
    %c0_24 = arith.constant 0 : index
    %c0_25 = arith.constant 0 : index
    %23 = vector.load %arg3[%c0_24, %c0_25] : memref<128x256xf32, #tpu.memory_space<vmem>>, vector<128x128xf32>
    %24 = arith.truncf %23 : vector<128x128xf32> to vector<128x128xbf16>
    %c0_26 = arith.constant 0 : index
    %c0_27 = arith.constant 0 : index
    %25 = vector.load %arg1[%c0_26, %c0_27] : memref<128x128xbf16, #tpu.memory_space<vmem>>, vector<128x128xbf16>
    %cst_28 = arith.constant dense<0.000000e+00> : vector<128x128xf32>
    %26 = tpu.matmul %25, %24, %cst_28 {dimension_numbers = #tpu.dot_dimension_numbers<[1], [0], [0], [1], [0, 0, 1, 1], [], []>} : vector<128x128xbf16>, vector<128x128xbf16>, vector<128x128xf32> -> vector<128x128xf32>
    %cst_29 = arith.constant 0.899999976 : f32
    %27 = vector.broadcast %cst_29 : f32 to vector<128x128xf32>
    %28 = arith.mulf %27, %26 : vector<128x128xf32>
    %c0_30 = arith.constant 0 : index
    %c0_31 = arith.constant 0 : index
    %29 = vector.load %arg4[%c0_30, %c0_31] : memref<128x256xf32, #tpu.memory_space<vmem>>, vector<128x128xf32>
    %30 = arith.addf %28, %29 : vector<128x128xf32>
    %c0_32 = arith.constant 0 : index
    %c0_33 = arith.constant 0 : index
    %31 = vector.load %arg3[%c0_32, %c0_33] : memref<128x256xf32, #tpu.memory_space<vmem>>, vector<128x128xf32>
    tpu.vector_store %arg3[%c0_32, %c0_33], %30 {strides = array<i32>} : memref<128x256xf32, #tpu.memory_space<vmem>>, vector<128x128xf32>,
    %c0_34 = arith.constant 0 : index
    %c128_35 = arith.constant 128 : index
    %32 = vector.load %arg3[%c0_34, %c128_35] : memref<128x256xf32, #tpu.memory_space<vmem>>, vector<128x128xf32>
    %33 = arith.truncf %32 : vector<128x128xf32> to vector<128x128xbf16>
    %c0_36 = arith.constant 0 : index
    %c0_37 = arith.constant 0 : index
    %34 = vector.load %arg1[%c0_36, %c0_37] : memref<128x128xbf16, #tpu.memory_space<vmem>>, vector<128x128xbf16>
    %cst_38 = arith.constant dense<0.000000e+00> : vector<128x128xf32>
    %35 = tpu.matmul %34, %33, %cst_38 {dimension_numbers = #tpu.dot_dimension_numbers<[1], [0], [0], [1], [0, 0, 1, 1], [], []>} : vector<128x128xbf16>, vector<128x128xbf16>, vector<128x128xf32> -> vector<128x128xf32>
    %cst_39 = arith.constant 0.899999976 : f32
    %36 = vector.broadcast %cst_39 : f32 to vector<128x128xf32>
    %37 = arith.mulf %36, %35 : vector<128x128xf32>
    %c0_40 = arith.constant 0 : index
    %c128_41 = arith.constant 128 : index
    %38 = vector.load %arg4[%c0_40, %c128_41] : memref<128x256xf32, #tpu.memory_space<vmem>>, vector<128x128xf32>
    %39 = arith.addf %37, %38 : vector<128x128xf32>
    %c0_42 = arith.constant 0 : index
    %c128_43 = arith.constant 128 : index
    %40 = vector.load %arg3[%c0_42, %c128_43] : memref<128x256xf32, #tpu.memory_space<vmem>>, vector<128x128xf32>
    tpu.vector_store %arg3[%c0_42, %c128_43], %39 {strides = array<i32>} : memref<128x256xf32, #tpu.memory_space<vmem>>, vector<128x128xf32>,
    %c2_i32 = arith.constant 2 : i32
    %c0_44 = arith.constant 0 : index
    %c0_45 = arith.constant 0 : index
    %41 = vector.load %arg3[%c0_44, %c0_45] : memref<128x256xf32, #tpu.memory_space<vmem>>, vector<128x128xf32>
    %42 = arith.truncf %41 : vector<128x128xf32> to vector<128x128xbf16>
    %c0_46 = arith.constant 0 : index
    %c0_47 = arith.constant 0 : index
    %43 = vector.load %arg1[%c0_46, %c0_47] : memref<128x128xbf16, #tpu.memory_space<vmem>>, vector<128x128xbf16>
    %cst_48 = arith.constant dense<0.000000e+00> : vector<128x128xf32>
    %44 = tpu.matmul %43, %42, %cst_48 {dimension_numbers = #tpu.dot_dimension_numbers<[1], [0], [0], [1], [0, 0, 1, 1], [], []>} : vector<128x128xbf16>, vector<128x128xbf16>, vector<128x128xf32> -> vector<128x128xf32>
    %cst_49 = arith.constant 0.899999976 : f32
    %45 = vector.broadcast %cst_49 : f32 to vector<128x128xf32>
    %46 = arith.mulf %45, %44 : vector<128x128xf32>
    %c0_50 = arith.constant 0 : index
    %c0_51 = arith.constant 0 : index
    %47 = vector.load %arg4[%c0_50, %c0_51] : memref<128x256xf32, #tpu.memory_space<vmem>>, vector<128x128xf32>
    %48 = arith.addf %46, %47 : vector<128x128xf32>
    %c0_52 = arith.constant 0 : index
    %c0_53 = arith.constant 0 : index
    %49 = vector.load %arg3[%c0_52, %c0_53] : memref<128x256xf32, #tpu.memory_space<vmem>>, vector<128x128xf32>
    tpu.vector_store %arg3[%c0_52, %c0_53], %48 {strides = array<i32>} : memref<128x256xf32, #tpu.memory_space<vmem>>, vector<128x128xf32>,
    %c0_54 = arith.constant 0 : index
    %c128_55 = arith.constant 128 : index
    %50 = vector.load %arg3[%c0_54, %c128_55] : memref<128x256xf32, #tpu.memory_space<vmem>>, vector<128x128xf32>
    %51 = arith.truncf %50 : vector<128x128xf32> to vector<128x128xbf16>
    %c0_56 = arith.constant 0 : index
    %c0_57 = arith.constant 0 : index
    %52 = vector.load %arg1[%c0_56, %c0_57] : memref<128x128xbf16, #tpu.memory_space<vmem>>, vector<128x128xbf16>
    %cst_58 = arith.constant dense<0.000000e+00> : vector<128x128xf32>
    %53 = tpu.matmul %52, %51, %cst_58 {dimension_numbers = #tpu.dot_dimension_numbers<[1], [0], [0], [1], [0, 0, 1, 1], [], []>} : vector<128x128xbf16>, vector<128x128xbf16>, vector<128x128xf32> -> vector<128x128xf32>
    %cst_59 = arith.constant 0.899999976 : f32
    %54 = vector.broadcast %cst_59 : f32 to vector<128x128xf32>
    %55 = arith.mulf %54, %53 : vector<128x128xf32>
    %c0_60 = arith.constant 0 : index
    %c128_61 = arith.constant 128 : index
    %56 = vector.load %arg4[%c0_60, %c128_61] : memref<128x256xf32, #tpu.memory_space<vmem>>, vector<128x128xf32>
    %57 = arith.addf %55, %56 : vector<128x128xf32>
    %c0_62 = arith.constant 0 : index
    %c128_63 = arith.constant 128 : index
    %58 = vector.load %arg3[%c0_62, %c128_63] : memref<128x256xf32, #tpu.memory_space<vmem>>, vector<128x128xf32>
    tpu.vector_store %arg3[%c0_62, %c128_63], %57 {strides = array<i32>} : memref<128x256xf32, #tpu.memory_space<vmem>>, vector<128x128xf32>,
    %c3_i32 = arith.constant 3 : i32
    %c0_64 = arith.constant 0 : index
    %c0_65 = arith.constant 0 : index
    %59 = vector.load %arg3[%c0_64, %c0_65] : memref<128x256xf32, #tpu.memory_space<vmem>>, vector<128x128xf32>
    %60 = arith.truncf %59 : vector<128x128xf32> to vector<128x128xbf16>
    %c0_66 = arith.constant 0 : index
    %c0_67 = arith.constant 0 : index
    %61 = vector.load %arg1[%c0_66, %c0_67] : memref<128x128xbf16, #tpu.memory_space<vmem>>, vector<128x128xbf16>
    %cst_68 = arith.constant dense<0.000000e+00> : vector<128x128xf32>
    %62 = tpu.matmul %61, %60, %cst_68 {dimension_numbers = #tpu.dot_dimension_numbers<[1], [0], [0], [1], [0, 0, 1, 1], [], []>} : vector<128x128xbf16>, vector<128x128xbf16>, vector<128x128xf32> -> vector<128x128xf32>
    %cst_69 = arith.constant 0.899999976 : f32
    %63 = vector.broadcast %cst_69 : f32 to vector<128x128xf32>
    %64 = arith.mulf %63, %62 : vector<128x128xf32>
    %c0_70 = arith.constant 0 : index
    %c0_71 = arith.constant 0 : index
    %65 = vector.load %arg4[%c0_70, %c0_71] : memref<128x256xf32, #tpu.memory_space<vmem>>, vector<128x128xf32>
    %66 = arith.addf %64, %65 : vector<128x128xf32>
    %c0_72 = arith.constant 0 : index
    %c0_73 = arith.constant 0 : index
    %67 = vector.load %arg3[%c0_72, %c0_73] : memref<128x256xf32, #tpu.memory_space<vmem>>, vector<128x128xf32>
    tpu.vector_store %arg3[%c0_72, %c0_73], %66 {strides = array<i32>} : memref<128x256xf32, #tpu.memory_space<vmem>>, vector<128x128xf32>,
    %c0_74 = arith.constant 0 : index
    %c128_75 = arith.constant 128 : index
    %68 = vector.load %arg3[%c0_74, %c128_75] : memref<128x256xf32, #tpu.memory_space<vmem>>, vector<128x128xf32>
    %69 = arith.truncf %68 : vector<128x128xf32> to vector<128x128xbf16>
    %c0_76 = arith.constant 0 : index
    %c0_77 = arith.constant 0 : index
    %70 = vector.load %arg1[%c0_76, %c0_77] : memref<128x128xbf16, #tpu.memory_space<vmem>>, vector<128x128xbf16>
    %cst_78 = arith.constant dense<0.000000e+00> : vector<128x128xf32>
    %71 = tpu.matmul %70, %69, %cst_78 {dimension_numbers = #tpu.dot_dimension_numbers<[1], [0], [0], [1], [0, 0, 1, 1], [], []>} : vector<128x128xbf16>, vector<128x128xbf16>, vector<128x128xf32> -> vector<128x128xf32>
    %cst_79 = arith.constant 0.899999976 : f32
    %72 = vector.broadcast %cst_79 : f32 to vector<128x128xf32>
    %73 = arith.mulf %72, %71 : vector<128x128xf32>
    %c0_80 = arith.constant 0 : index
    %c128_81 = arith.constant 128 : index
    %74 = vector.load %arg4[%c0_80, %c128_81] : memref<128x256xf32, #tpu.memory_space<vmem>>, vector<128x128xf32>
    %75 = arith.addf %73, %74 : vector<128x128xf32>
    %c0_82 = arith.constant 0 : index
    %c128_83 = arith.constant 128 : index
    %76 = vector.load %arg3[%c0_82, %c128_83] : memref<128x256xf32, #tpu.memory_space<vmem>>, vector<128x128xf32>
    tpu.vector_store %arg3[%c0_82, %c128_83], %75 {strides = array<i32>} : memref<128x256xf32, #tpu.memory_space<vmem>>, vector<128x128xf32>,
    return
  }
  func.func @transform_0(%arg0: i32) -> (i32, i32) {
    %c0_i32 = arith.constant 0 : i32
    %c0_i32_0 = arith.constant 0 : i32
    %c0_i32_1 = arith.constant 0 : i32
    return %c0_i32, %c0_i32_0 : i32, i32
  }
  func.func @transform_1(%arg0: i32) -> (i32, i32) {
    %c0_i32 = arith.constant 0 : i32
    %c0_i32_0 = arith.constant 0 : i32
    return %c0_i32, %arg0 : i32, i32
  }
  func.func @transform_2(%arg0: i32) -> (i32, i32) {
    %c0_i32 = arith.constant 0 : i32
    %c0_i32_0 = arith.constant 0 : i32
    return %c0_i32, %arg0 : i32, i32
  }
}

</mosaic_0001>

<llo_original>
// kernel: tpu_custom_call.1
$region0: #{tpu_custom_call.1}
  #allocation0 [shape = 'u32[]', space=smem, size = 0x4, offset = 0x4, fixed_abs, tag = 'smem constant byte address 0x4 - core index']
  #allocation1 [shape = 'u32[144,128]{1,0:T(1,128)}', space=vmem, size = 0x12000, scoped, tag = 'internal scratch']
  #allocation2 [shape = 'f32[128,256]{1,0:T(8,128)}', space=vmem, size = 0x20000, scoped, tag = 'scratch operand']
  %s0 = inlined_call_operand.hbm [shape: bf16[128,128], index: 0, kind: input, shape index: {}]
  %s1 = inlined_call_operand.hbm [shape: f32[128,512], index: 1, kind: input, shape index: {}]
  %s2 = inlined_call_operand.hbm [shape: f32[128,512], index: 2, kind: output, shape index: {}]
  %s3 = sld [smem:[#allocation0]]
  $region49: #{tpu_custom_call.1} parent=0
    _
  %s5 = ssub.s32 1, %s3
  %s6 = scalar_select 0, %s5, %s3
  $region1: #{tpu_custom_call.1} parent=0
    #allocation3 [shape = 'u8[32768]{0}', space=vmem, size = 0x8000, scoped, tag = 'input window, operand 0, single buffered']
    #allocation4 [shape = 's32[2]{0}', space=sflag, size = 0x8, scoped, tag = 'scoped memory for tpu_custom_call.1']
    #allocation5 [shape = 's32[2]{0}', space=sflag, size = 0x8, scoped, tag = 'scoped memory for tpu_custom_call.1']
    #allocation6 [shape = 'u8[262144]{0}', space=vmem, size = 0x40000, scoped, tag = 'input window, operand 1']
    #allocation7 [shape = 's32[2]{0}', space=sflag, size = 0x8, scoped, tag = 'scoped memory for tpu_custom_call.1']
    #allocation8 [shape = 'u8[262144]{0}', space=vmem, size = 0x40000, scoped, tag = 'output window, operand 0']
    %7 = vsyncpa [#allocation4], 0
    %8 = vsyncpa [#allocation7], 0
    %s9 = scalar_lea.sflag [#allocation7], 1
    %10 = vsyncpa %s9, 0
    %11 = vsyncpa [#allocation5], 0
    %s12 = scalar_lea.sflag [#allocation5], 1
    %13 = vsyncpa %s12, 0
    loop: start=0, step=1, limit=4
    $region2: #{tpu_custom_call.1} parent=1 // loop_pre_header
      _
    $region3: #{tpu_custom_call.1} parent=1 // loop_header
      %s15 = sphi 0, %s19
      %p16 = scmp.ge.s32.totalorder %s15, 4
      %s23 = sphi 0, %s23
      %s25 = sphi 0, %s23
      %s26 = sphi 0, %s25
      %s40 = sphi 0, %s26
      %s46 = sphi 0, %s48
      %s49 = sphi 0, %s46
      %s50 = sphi 0, %s49
      %s66 = sphi 0, %s50
      %s72 = sphi 0, %s74
      %s75 = sphi 0, %s72
      %s76 = sphi 0, %s75
      %s92 = sphi 0, %s76
    $region4: #{tpu_custom_call.1} parent=1 // loop_header_branch
      %18 = sbr.rel (%p16) target = $region8
    $region5: #{tpu_custom_call.1} parent=1 // loop_body
      %s20 = ssub.s32 %s15, 1
      %s21 = ssub.s32 %s15, 2
      %s22 = sadd.s32 %s15, 1
      %s24 = sadd.s32 %s23, 1
      %p27 = scmp.eq.s32.totalorder %s15, 1
      %p28 = scmp.ne.s32.totalorder %s23, %s25
      %p29 = scmp.eq.s32.totalorder %s15, 0
      %p30 = por %p28, %p29
      %p31 = scmp.ne.s32.totalorder %s23, %s25
      %p32 = scmp.eq.s32.totalorder %s20, 1
      %p33 = por %p31, %p32
      %p34 = scmp.ne.s32.totalorder %s25, %s26
      %p35 = scmp.eq.s32.totalorder %s20, 0
      %p36 = por %p34, %p35
      %p37 = scmp.ne.s32.totalorder %s25, %s26
      %p38 = scmp.eq.s32.totalorder %s21, 1
      %p39 = por %p37, %p38
      %p41 = scmp.ne.s32.totalorder %s26, %s40
      %p42 = scmp.eq.s32.totalorder %s21, 0
      %p43 = por %p41, %p42
      %s44 = ssub.s32 %s15, %s22
      %p45 = scmp.eq.s32.totalorder %s44, 0
      %s47 = sadd.s32 %s46, 1
      %s48 = scalar_select %p45, %s46, %s47
      %p51 = pneg %p45
      %p52 = scmp.eq.s32.totalorder %s15, 1
      %p53 = por %p51, %p52
      %p54 = scmp.ne.s32.totalorder %s46, %s49
      %p55 = scmp.eq.s32.totalorder %s15, 0
      %p56 = por %p54, %p55
      %p57 = scmp.ne.s32.totalorder %s46, %s49
      %p58 = scmp.eq.s32.totalorder %s20, 1
      %p59 = por %p57, %p58
      %p60 = scmp.ne.s32.totalorder %s49, %s50
      %p61 = scmp.eq.s32.totalorder %s20, 0
      %p62 = por %p60, %p61
      %p63 = scmp.ne.s32.totalorder %s49, %s50
      %p64 = scmp.eq.s32.totalorder %s21, 1
      %p65 = por %p63, %p64
      %p67 = scmp.ne.s32.totalorder %s50, %s66
      %p68 = scmp.eq.s32.totalorder %s21, 0
      %p69 = por %p67, %p68
      %s70 = ssub.s32 %s15, %s22
      %p71 = scmp.eq.s32.totalorder %s70, 0
      %s73 = sadd.s32 %s72, 1
      %s74 = scalar_select %p71, %s72, %s73
      %p77 = pneg %p71
      %p78 = scmp.eq.s32.totalorder %s15, 1
      %p79 = por %p77, %p78
      %p80 = scmp.ne.s32.totalorder %s72, %s75
      %p81 = scmp.eq.s32.totalorder %s15, 0
      %p82 = por %p80, %p81
      %p83 = scmp.ne.s32.totalorder %s72, %s75
      %p84 = scmp.eq.s32.totalorder %s20, 1
      %p85 = por %p83, %p84
      %p86 = scmp.ne.s32.totalorder %s75, %s76
      %p87 = scmp.eq.s32.totalorder %s20, 0
      %p88 = por %p86, %p87
      %p89 = scmp.ne.s32.totalorder %s75, %s76
      %p90 = scmp.eq.s32.totalorder %s21, 1
      %p91 = por %p89, %p90
      %p93 = scmp.ne.s32.totalorder %s76, %s92
      %p94 = scmp.eq.s32.totalorder %s21, 0
      %p95 = por %p93, %p94
      %p96 = scmp.le.s32.totalorder 1, %s15
      %p97 = scmp.lt.s32.totalorder %s15, 3
      %p98 = pnand %p96, %p97
      %p99 = pneg %p98
      // Predicated region
      $region9: #{tpu_custom_call.1} parent=5 // pred_check
        _
      $region10: #{tpu_custom_call.1} parent=5 // pred_check_branch
        %101 = sbr.rel (%p98) target = $region12
      $region11: #{tpu_custom_call.1} parent=5 // pred_region
        %s102 = ssub.s32 %s15, 1
        // Predicated region
        $region13: #{tpu_custom_call.1} parent=11 // pred_check
          %p103 = pneg %p36
        $region14: #{tpu_custom_call.1} parent=11 // pred_check_branch
          %105 = sbr.rel (%p103) target = $region16
        $region15: #{tpu_custom_call.1} parent=11 // pred_region
          %s107 = ssub.s32 1024, 1024
          %108 = vsyncadd [#allocation4], %s107
          %s109 = sshll.u32 [#allocation3], 4
          %s110 = int_to_ptr.vmem [resolvable:$true] %s109
          %115 = dma.hbm_to_vmem [thread:$0]  %s0, 1024, %s110, [#allocation4], 64, 64, 4
        $region16: #{tpu_custom_call.1} parent=11 // pred_fallthru
          _
      $region12: #{tpu_custom_call.1} parent=5 // pred_fallthru
        _
      %p116 = scmp.lt.s32.totalorder %s15, 2
      // Predicated region
      $region17: #{tpu_custom_call.1} parent=5 // pred_check
        %p117 = pneg %p116
      $region18: #{tpu_custom_call.1} parent=5 // pred_check_branch
        %119 = sbr.rel (%p117) target = $region20
      $region19: #{tpu_custom_call.1} parent=5 // pred_region
        // Predicated region
        $region21: #{tpu_custom_call.1} parent=19 // pred_check
          %p120 = pneg %p56
        $region22: #{tpu_custom_call.1} parent=19 // pred_check_branch
          %122 = sbr.rel (%p120) target = $region24
        $region23: #{tpu_custom_call.1} parent=19 // pred_region
          %s123 = sand.u32 %s46, 1
          %s124 = scalar_lea.sflag [#allocation7], %s123
          %s125 = sand.u32 %s46, 1
          %s126 = smul.addr %s125, 256
          %s127 = scalar_lea.vmem [#allocation6], %s126
          %s128 = smul.u32 2, %s15
          %s130 = ssub.s32 4096, 4096
          %131 = vsyncadd %s124, %s130
          %s132 = smul.addr %s128, 128
          %s133 = scalar_lea.hbm %s1, %s132
          %s134 = sshll.u32 %s127, 4
          %s135 = int_to_ptr.vmem [resolvable:$true] %s134
          %140 = dma.hbm_to_vmem [thread:$0]  %s133, 4096, %s135, %s124, 512, 256, 16
        $region24: #{tpu_custom_call.1} parent=19 // pred_fallthru
          _
      $region20: #{tpu_custom_call.1} parent=5 // pred_fallthru
        _
      %p141 = scmp.le.s32.totalorder 1, %s15
      %p142 = scmp.lt.s32.totalorder %s15, 3
      %p143 = pnand %p141, %p142
      %p144 = pneg %p143
      // Predicated region
      $region25: #{tpu_custom_call.1} parent=5 // pred_check
        _
      $region26: #{tpu_custom_call.1} parent=5 // pred_check_branch
        %146 = sbr.rel (%p143) target = $region28
      $region27: #{tpu_custom_call.1} parent=5 // pred_region
        %s147 = ssub.s32 %s15, 1
        // Predicated region
        $region29: #{tpu_custom_call.1} parent=27 // pred_check
          %p148 = pneg %p36
        $region30: #{tpu_custom_call.1} parent=27 // pred_check_branch
          %150 = sbr.rel (%p148) target = $region32
        $region31: #{tpu_custom_call.1} parent=27 // pred_region
          %151 = dma.done [#allocation4], 1024
        $region32: #{tpu_custom_call.1} parent=27 // pred_fallthru
          _
        %s152 = sand.u32 %s49, 1
        %s153 = scalar_lea.sflag [#allocation7], %s152
        %s154 = sand.u32 %s49, 1
        %s155 = smul.addr %s154, 256
        %s156 = scalar_lea.vmem [#allocation6], %s155
        // Predicated region
        $region33: #{tpu_custom_call.1} parent=27 // pred_check
          %p157 = pneg %p62
        $region34: #{tpu_custom_call.1} parent=27 // pred_check_branch
          %159 = sbr.rel (%p157) target = $region36
        $region35: #{tpu_custom_call.1} parent=27 // pred_region
          %160 = dma.done %s153, 4096
        $region36: #{tpu_custom_call.1} parent=27 // pred_fallthru
          _
        %p161 = pneg %p36
        %p162 = pneg %p33
        %s163 = sand.u32 %s49, 1
        %s164 = scalar_lea.sflag [#allocation7], %s163
        %s165 = sand.u32 %s49, 1
        %s166 = smul.addr %s165, 256
        %s167 = scalar_lea.vmem [#allocation6], %s166
        %p168 = pneg %p62
        %p169 = pneg %p59
        %p170 = pneg %p88
        %p171 = pneg %p85
        %s172 = sand.u32 %s75, 1
        %s173 = scalar_lea.sflag [#allocation5], %s172
        %s174 = sand.u32 %s75, 1
        %s175 = smul.addr %s174, 256
        %s176 = scalar_lea.vmem [#allocation8], %s175
        %s177 = smul.u32 2, %s20
        %s178 = smul.u32 2, %s20
        %v180 = vld [vmem:[%s156] sm:$0xff]
        %v181 = vld [vmem:[%s156 + $0x8] sm:$0xff]
        %v182 = vld [vmem:[%s156 + $0x10] sm:$0xff]
        %v183 = vld [vmem:[%s156 + $0x18] sm:$0xff]
        %v184 = vld [vmem:[%s156 + $0x20] sm:$0xff]
        %v185 = vld [vmem:[%s156 + $0x28] sm:$0xff]
        %v186 = vld [vmem:[%s156 + $0x30] sm:$0xff]
        %v187 = vld [vmem:[%s156 + $0x38] sm:$0xff]
        %v188 = vld [vmem:[%s156 + $0x40] sm:$0xff]
        %v189 = vld [vmem:[%s156 + $0x48] sm:$0xff]
        %v190 = vld [vmem:[%s156 + $0x50] sm:$0xff]
        %v191 = vld [vmem:[%s156 + $0x58] sm:$0xff]
        %v192 = vld [vmem:[%s156 + $0x60] sm:$0xff]
        %v193 = vld [vmem:[%s156 + $0x68] sm:$0xff]
        %v194 = vld [vmem:[%s156 + $0x70] sm:$0xff]
        %v195 = vld [vmem:[%s156 + $0x78] sm:$0xff]
        %v196 = vld [vmem:[%s156 + $0x80] sm:$0xff]
        %v197 = vld [vmem:[%s156 + $0x88] sm:$0xff]
        %v198 = vld [vmem:[%s156 + $0x90] sm:$0xff]
        %v199 = vld [vmem:[%s156 + $0x98] sm:$0xff]
        %v200 = vld [vmem:[%s156 + $0xa0] sm:$0xff]
        %v201 = vld [vmem:[%s156 + $0xa8] sm:$0xff]
        %v202 = vld [vmem:[%s156 + $0xb0] sm:$0xff]
        %v203 = vld [vmem:[%s156 + $0xb8] sm:$0xff]
        %v204 = vld [vmem:[%s156 + $0xc0] sm:$0xff]
        %v205 = vld [vmem:[%s156 + $0xc8] sm:$0xff]
        %v206 = vld [vmem:[%s156 + $0xd0] sm:$0xff]
        %v207 = vld [vmem:[%s156 + $0xd8] sm:$0xff]
        %v208 = vld [vmem:[%s156 + $0xe0] sm:$0xff]
        %v209 = vld [vmem:[%s156 + $0xe8] sm:$0xff]
        %v210 = vld [vmem:[%s156 + $0xf0] sm:$0xff]
        %v211 = vld [vmem:[%s156 + $0xf8] sm:$0xff]
        %v212 = vmul.f32 %v180, 0.1
        %v213 = vmul.f32 %v181, 0.1
        %v214 = vmul.f32 %v182, 0.1
        %v215 = vmul.f32 %v183, 0.1
        %v216 = vmul.f32 %v184, 0.1
        %v217 = vmul.f32 %v185, 0.1
        %v218 = vmul.f32 %v186, 0.1
        %v219 = vmul.f32 %v187, 0.1
        %v220 = vmul.f32 %v188, 0.1
        %v221 = vmul.f32 %v189, 0.1
        %v222 = vmul.f32 %v190, 0.1
        %v223 = vmul.f32 %v191, 0.1
        %v224 = vmul.f32 %v192, 0.1
        %v225 = vmul.f32 %v193, 0.1
        %v226 = vmul.f32 %v194, 0.1
        %v227 = vmul.f32 %v195, 0.1
        %v228 = vmul.f32 %v196, 0.1
        %v229 = vmul.f32 %v197, 0.1
        %v230 = vmul.f32 %v198, 0.1
        %v231 = vmul.f32 %v199, 0.1
        %v232 = vmul.f32 %v200, 0.1
        %v233 = vmul.f32 %v201, 0.1
        %v234 = vmul.f32 %v202, 0.1
        %v235 = vmul.f32 %v203, 0.1
        %v236 = vmul.f32 %v204, 0.1
        %v237 = vmul.f32 %v205, 0.1
        %v238 = vmul.f32 %v206, 0.1
        %v239 = vmul.f32 %v207, 0.1
        %v240 = vmul.f32 %v208, 0.1
        %v241 = vmul.f32 %v209, 0.1
        %v242 = vmul.f32 %v210, 0.1
        %v243 = vmul.f32 %v211, 0.1
        %244 = vst [vmem:[#allocation2] sm:$0xff] %v212
        %245 = vst [vmem:[#allocation2 + $0x8] sm:$0xff] %v213
        %246 = vst [vmem:[#allocation2 + $0x10] sm:$0xff] %v214
        %247 = vst [vmem:[#allocation2 + $0x18] sm:$0xff] %v215
        %248 = vst [vmem:[#allocation2 + $0x20] sm:$0xff] %v216
        %249 = vst [vmem:[#allocation2 + $0x28] sm:$0xff] %v217
        %250 = vst [vmem:[#allocation2 + $0x30] sm:$0xff] %v218
        %251 = vst [vmem:[#allocation2 + $0x38] sm:$0xff] %v219
        %252 = vst [vmem:[#allocation2 + $0x40] sm:$0xff] %v220
        %253 = vst [vmem:[#allocation2 + $0x48] sm:$0xff] %v221
        %254 = vst [vmem:[#allocation2 + $0x50] sm:$0xff] %v222
        %255 = vst [vmem:[#allocation2 + $0x58] sm:$0xff] %v223
        %256 = vst [vmem:[#allocation2 + $0x60] sm:$0xff] %v224
        %257 = vst [vmem:[#allocation2 + $0x68] sm:$0xff] %v225
        %258 = vst [vmem:[#allocation2 + $0x70] sm:$0xff] %v226
        %259 = vst [vmem:[#allocation2 + $0x78] sm:$0xff] %v227
        %260 = vst [vmem:[#allocation2 + $0x80] sm:$0xff] %v228
        %261 = vst [vmem:[#allocation2 + $0x88] sm:$0xff] %v229
        %262 = vst [vmem:[#allocation2 + $0x90] sm:$0xff] %v230
        %263 = vst [vmem:[#allocation2 + $0x98] sm:$0xff] %v231
        %264 = vst [vmem:[#allocation2 + $0xa0] sm:$0xff] %v232
        %265 = vst [vmem:[#allocation2 + $0xa8] sm:$0xff] %v233
        %266 = vst [vmem:[#allocation2 + $0xb0] sm:$0xff] %v234
        %267 = vst [vmem:[#allocation2 + $0xb8] sm:$0xff] %v235
        %268 = vst [vmem:[#allocation2 + $0xc0] sm:$0xff] %v236
        %269 = vst [vmem:[#allocation2 + $0xc8] sm:$0xff] %v237
        %270 = vst [vmem:[#allocation2 + $0xd0] sm:$0xff] %v238
        %271 = vst [vmem:[#allocation2 + $0xd8] sm:$0xff] %v239
        %272 = vst [vmem:[#allocation2 + $0xe0] sm:$0xff] %v240
        %273 = vst [vmem:[#allocation2 + $0xe8] sm:$0xff] %v241
        %274 = vst [vmem:[#allocation2 + $0xf0] sm:$0xff] %v242
        %275 = vst [vmem:[#allocation2 + $0xf8] sm:$0xff] %v243
        %276 = vst [vmem:[%s176] sm:$0xff] %v180
        %277 = vst [vmem:[%s176 + $0x8] sm:$0xff] %v181
        %278 = vst [vmem:[%s176 + $0x10] sm:$0xff] %v182
        %279 = vst [vmem:[%s176 + $0x18] sm:$0xff] %v183
        %280 = vst [vmem:[%s176 + $0x20] sm:$0xff] %v184
        %281 = vst [vmem:[%s176 + $0x28] sm:$0xff] %v185
        %282 = vst [vmem:[%s176 + $0x30] sm:$0xff] %v186
        %283 = vst [vmem:[%s176 + $0x38] sm:$0xff] %v187
        %284 = vst [vmem:[%s176 + $0x40] sm:$0xff] %v188
        %285 = vst [vmem:[%s176 + $0x48] sm:$0xff] %v189
        %286 = vst [vmem:[%s176 + $0x50] sm:$0xff] %v190
        %287 = vst [vmem:[%s176 + $0x58] sm:$0xff] %v191
        %288 = vst [vmem:[%s176 + $0x60] sm:$0xff] %v192
        %289 = vst [vmem:[%s176 + $0x68] sm:$0xff] %v193
        %290 = vst [vmem:[%s176 + $0x70] sm:$0xff] %v194
        %291 = vst [vmem:[%s176 + $0x78] sm:$0xff] %v195
        %292 = vst [vmem:[%s176 + $0x80] sm:$0xff] %v196
        %293 = vst [vmem:[%s176 + $0x88] sm:$0xff] %v197
        %294 = vst [vmem:[%s176 + $0x90] sm:$0xff] %v198
        %295 = vst [vmem:[%s176 + $0x98] sm:$0xff] %v199
        %296 = vst [vmem:[%s176 + $0xa0] sm:$0xff] %v200
        %297 = vst [vmem:[%s176 + $0xa8] sm:$0xff] %v201
        %298 = vst [vmem:[%s176 + $0xb0] sm:$0xff] %v202
        %299 = vst [vmem:[%s176 + $0xb8] sm:$0xff] %v203
        %300 = vst [vmem:[%s176 + $0xc0] sm:$0xff] %v204
        %301 = vst [vmem:[%s176 + $0xc8] sm:$0xff] %v205
        %302 = vst [vmem:[%s176 + $0xd0] sm:$0xff] %v206
        %303 = vst [vmem:[%s176 + $0xd8] sm:$0xff] %v207
        %304 = vst [vmem:[%s176 + $0xe0] sm:$0xff] %v208
        %305 = vst [vmem:[%s176 + $0xe8] sm:$0xff] %v209
        %306 = vst [vmem:[%s176 + $0xf0] sm:$0xff] %v210
        %307 = vst [vmem:[%s176 + $0xf8] sm:$0xff] %v211
        %v308 = vld [vmem:[%s176] sm:$0xff]
        %v309 = vld [vmem:[%s176 + $0x10] sm:$0xff]
        %v310 = vld [vmem:[%s176 + $0x20] sm:$0xff]
        %v311 = vld [vmem:[%s176 + $0x30] sm:$0xff]
        %v312 = vld [vmem:[%s176 + $0x40] sm:$0xff]
        %v313 = vld [vmem:[%s176 + $0x50] sm:$0xff]
        %v314 = vld [vmem:[%s176 + $0x60] sm:$0xff]
        %v315 = vld [vmem:[%s176 + $0x70] sm:$0xff]
        %v316 = vld [vmem:[%s176 + $0x80] sm:$0xff]
        %v317 = vld [vmem:[%s176 + $0x90] sm:$0xff]
        %v318 = vld [vmem:[%s176 + $0xa0] sm:$0xff]
        %v319 = vld [vmem:[%s176 + $0xb0] sm:$0xff]
        %v320 = vld [vmem:[%s176 + $0xc0] sm:$0xff]
        %v321 = vld [vmem:[%s176 + $0xd0] sm:$0xff]
        %v322 = vld [vmem:[%s176 + $0xe0] sm:$0xff]
        %v323 = vld [vmem:[%s176 + $0xf0] sm:$0xff]
        %v324 = vpack.c.bf16 %v309, %v308
        %v325 = vpack.c.bf16 %v311, %v310
        %v326 = vpack.c.bf16 %v313, %v312
        %v327 = vpack.c.bf16 %v315, %v314
        %v328 = vpack.c.bf16 %v317, %v316
        %v329 = vpack.c.bf16 %v319, %v318
        %v330 = vpack.c.bf16 %v321, %v320
        %v331 = vpack.c.bf16 %v323, %v322
        %v332 = vld [vmem:[#allocation3] sm:$0xf]
        %v333 = vld [vmem:[#allocation3 + $0x4] sm:$0xf]
        %v334 = vld [vmem:[#allocation3 + $0x8] sm:$0xf]
        %v335 = vld [vmem:[#allocation3 + $0xc] sm:$0xf]
        %v336 = vld [vmem:[#allocation3 + $0x10] sm:$0xf]
        %v337 = vld [vmem:[#allocation3 + $0x14] sm:$0xf]
        %v338 = vld [vmem:[#allocation3 + $0x18] sm:$0xf]
        %v339 = vld [vmem:[#allocation3 + $0x1c] sm:$0xf]
        %v340 = vld [vmem:[#allocation3 + $0x20] sm:$0xf]
        %v341 = vld [vmem:[#allocation3 + $0x24] sm:$0xf]
        %v342 = vld [vmem:[#allocation3 + $0x28] sm:$0xf]
        %v343 = vld [vmem:[#allocation3 + $0x2c] sm:$0xf]
        %v344 = vld [vmem:[#allocation3 + $0x30] sm:$0xf]
        %v345 = vld [vmem:[#allocation3 + $0x34] sm:$0xf]
        %v346 = vld [vmem:[#allocation3 + $0x38] sm:$0xf]
        %v347 = vld [vmem:[#allocation3 + $0x3c] sm:$0xf]
        %v364 = vunpack.c.l.b16 %v332
        %v365 = vunpack.c.l.b16 %v333
        %v366 = vunpack.c.l.b16 %v334
        %v367 = vunpack.c.l.b16 %v335
        %v368 = vunpack.c.l.b16 %v336
        %v369 = vunpack.c.l.b16 %v337
        %v370 = vunpack.c.l.b16 %v338
        %v371 = vunpack.c.l.b16 %v339
        %v372 = vunpack.c.l.b16 %v340
        %v373 = vunpack.c.l.b16 %v341
        %v374 = vunpack.c.l.b16 %v342
        %v375 = vunpack.c.l.b16 %v343
        %v376 = vunpack.c.l.b16 %v344
        %v377 = vunpack.c.l.b16 %v345
        %v378 = vunpack.c.l.b16 %v346
        %v379 = vunpack.c.l.b16 %v347
        %v380 = vpack.c.b16 %v365, %v364
        %v381 = vpack.c.b16 %v367, %v366
        %v382 = vpack.c.b16 %v369, %v368
        %v383 = vpack.c.b16 %v371, %v370
        %v384 = vpack.c.b16 %v373, %v372
        %v385 = vpack.c.b16 %v375, %v374
        %v386 = vpack.c.b16 %v377, %v376
        %v387 = vpack.c.b16 %v379, %v378
        %396 = vmatprep.subr.bf16.mxu0 0
        %397 = vmatpush1.bf16.msra.mxu0 %v331
        %398 = vmatprep.subr.bf16.mxu0 0
        %399 = vmatpush1.bf16.msra.mxu0 %v330
        %400 = vmatprep.subr.bf16.mxu0 0
        %401 = vmatpush1.bf16.msra.mxu0 %v329
        %402 = vmatprep.subr.bf16.mxu0 0
        %403 = vmatpush1.bf16.msra.mxu0 %v328
        %404 = vmatprep.subr.bf16.mxu0 0
        %405 = vmatpush1.bf16.msra.mxu0 %v327
        %406 = vmatprep.subr.bf16.mxu0 0
        %407 = vmatpush1.bf16.msra.mxu0 %v326
        %408 = vmatprep.subr.bf16.mxu0 0
        %409 = vmatpush1.bf16.msra.mxu0 %v325
        %410 = vmatprep.subr.bf16.mxu0 0
        %411 = vmatpush1.bf16.msra.mxu0 %v324
        %412 = vmatprep.subr.bf16.mxu0 0
        %413 = vmatpush2.bf16.msra.mxu0 0
        %414 = vmatprep.subr.bf16.mxu0 0
        %415 = vmatpush2.bf16.msra.mxu0 0
        %416 = vmatprep.subr.bf16.mxu0 0
        %417 = vmatpush2.bf16.msra.mxu0 0
        %418 = vmatprep.subr.bf16.mxu0 0
        %419 = vmatpush2.bf16.msra.mxu0 0
        %420 = vmatprep.subr.bf16.mxu0 0
        %421 = vmatpush2.bf16.msra.mxu0 0
        %422 = vmatprep.subr.bf16.mxu0 0
        %423 = vmatpush2.bf16.msra.mxu0 0
        %424 = vmatprep.subr.bf16.mxu0 0
        %425 = vmatpush2.bf16.msra.mxu0 0
        %426 = vmatprep.subr.bf16.mxu0 0
        %427 = vmatpush2.bf16.msra.mxu0 0
        %428 = vmatprep.mubr.bf16.mxu0 0
        %429 = vmatmul.mubr.bf16.gmra.mxu0 %v380
        %v430 = vpop.f32.mrf.mxu0
        %v431 = vadd.f32 0.0, %v430
        %v432 = vpop.f32.mrf.mxu0
        %v433 = vpop.f32.mrf.mxu0
        %v434 = vadd.f32 0.0, %v433
        %v435 = vpop.f32.mrf.mxu0
        %436 = vmatprep.mubr.bf16.mxu0 0
        %437 = vmatmul.mubr.bf16.gmra.mxu0 %v381
        %v438 = vpop.f32.mrf.mxu0
        %v439 = vadd.f32 0.0, %v438
        %v440 = vpop.f32.mrf.mxu0
        %v441 = vpop.f32.mrf.mxu0
        %v442 = vadd.f32 0.0, %v441
        %v443 = vpop.f32.mrf.mxu0
        %444 = vmatprep.mubr.bf16.mxu0 0
        %445 = vmatmul.mubr.bf16.gmra.mxu0 %v382
        %v446 = vpop.f32.mrf.mxu0
        %v447 = vadd.f32 0.0, %v446
        %v448 = vpop.f32.mrf.mxu0
        %v449 = vpop.f32.mrf.mxu0
        %v450 = vadd.f32 0.0, %v449
        %v451 = vpop.f32.mrf.mxu0
        %452 = vmatprep.mubr.bf16.mxu0 0
        %453 = vmatmul.mubr.bf16.gmra.mxu0 %v383
        %v454 = vpop.f32.mrf.mxu0
        %v455 = vadd.f32 0.0, %v454
        %v456 = vpop.f32.mrf.mxu0
        %v457 = vpop.f32.mrf.mxu0
        %v458 = vadd.f32 0.0, %v457
        %v459 = vpop.f32.mrf.mxu0
        %460 = vmatprep.mubr.bf16.mxu0 0
        %461 = vmatmul.mubr.bf16.gmra.mxu0 %v384
        %v462 = vpop.f32.mrf.mxu0
        %v463 = vadd.f32 0.0, %v462
        %v464 = vpop.f32.mrf.mxu0
        %v465 = vpop.f32.mrf.mxu0
        %v466 = vadd.f32 0.0, %v465
        %v467 = vpop.f32.mrf.mxu0
        %468 = vmatprep.mubr.bf16.mxu0 0
        %469 = vmatmul.mubr.bf16.gmra.mxu0 %v385
        %v470 = vpop.f32.mrf.mxu0
        %v471 = vadd.f32 0.0, %v470
        %v472 = vpop.f32.mrf.mxu0
        %v473 = vpop.f32.mrf.mxu0
        %v474 = vadd.f32 0.0, %v473
        %v475 = vpop.f32.mrf.mxu0
        %476 = vmatprep.mubr.bf16.mxu0 0
        %477 = vmatmul.mubr.bf16.gmra.mxu0 %v386
        %v478 = vpop.f32.mrf.mxu0
        %v479 = vadd.f32 0.0, %v478
        %v480 = vpop.f32.mrf.mxu0
        %v481 = vpop.f32.mrf.mxu0
        %v482 = vadd.f32 0.0, %v481
        %v483 = vpop.f32.mrf.mxu0
        %484 = vmatprep.mubr.bf16.mxu0 0
        %485 = vmatmul.mubr.bf16.gmra.mxu0 %v387
        %v486 = vpop.f32.mrf.mxu0
        %v487 = vadd.f32 0.0, %v486
        %v488 = vpop.f32.mrf.mxu0
        %v489 = vpop.f32.mrf.mxu0
        %v490 = vadd.f32 0.0, %v489
        %v491 = vpop.f32.mrf.mxu0
        %492 = vdwg.mxu0
        %v493 = vmul.f32 %v431, 0.9
        %v494 = vmul.f32 %v434, 0.9
        %v495 = vmul.f32 %v439, 0.9
        %v496 = vmul.f32 %v442, 0.9
        %v497 = vmul.f32 %v447, 0.9
        %v498 = vmul.f32 %v450, 0.9
        %v499 = vmul.f32 %v455, 0.9
        %v500 = vmul.f32 %v458, 0.9
        %v501 = vmul.f32 %v463, 0.9
        %v502 = vmul.f32 %v466, 0.9
        %v503 = vmul.f32 %v471, 0.9
        %v504 = vmul.f32 %v474, 0.9
        %v505 = vmul.f32 %v479, 0.9
        %v506 = vmul.f32 %v482, 0.9
        %v507 = vmul.f32 %v487, 0.9
        %v508 = vmul.f32 %v490, 0.9
        %v509 = vld [vmem:[#allocation2] sm:$0xff]
        %v510 = vld [vmem:[#allocation2 + $0x10] sm:$0xff]
        %v511 = vld [vmem:[#allocation2 + $0x20] sm:$0xff]
        %v512 = vld [vmem:[#allocation2 + $0x30] sm:$0xff]
        %v513 = vld [vmem:[#allocation2 + $0x40] sm:$0xff]
        %v514 = vld [vmem:[#allocation2 + $0x50] sm:$0xff]
        %v515 = vld [vmem:[#allocation2 + $0x60] sm:$0xff]
        %v516 = vld [vmem:[#allocation2 + $0x70] sm:$0xff]
        %v517 = vld [vmem:[#allocation2 + $0x80] sm:$0xff]
        %v518 = vld [vmem:[#allocation2 + $0x90] sm:$0xff]
        %v519 = vld [vmem:[#allocation2 + $0xa0] sm:$0xff]
        %v520 = vld [vmem:[#allocation2 + $0xb0] sm:$0xff]
        %v521 = vld [vmem:[#allocation2 + $0xc0] sm:$0xff]
        %v522 = vld [vmem:[#allocation2 + $0xd0] sm:$0xff]
        %v523 = vld [vmem:[#allocation2 + $0xe0] sm:$0xff]
        %v524 = vld [vmem:[#allocation2 + $0xf0] sm:$0xff]
        %v525 = vadd.f32 %v493, %v509
        %v526 = vadd.f32 %v494, %v510
        %v527 = vadd.f32 %v495, %v511
        %v528 = vadd.f32 %v496, %v512
        %v529 = vadd.f32 %v497, %v513
        %v530 = vadd.f32 %v498, %v514
        %v531 = vadd.f32 %v499, %v515
        %v532 = vadd.f32 %v500, %v516
        %v533 = vadd.f32 %v501, %v517
        %v534 = vadd.f32 %v502, %v518
        %v535 = vadd.f32 %v503, %v519
        %v536 = vadd.f32 %v504, %v520
        %v537 = vadd.f32 %v505, %v521
        %v538 = vadd.f32 %v506, %v522
        %v539 = vadd.f32 %v507, %v523
        %v540 = vadd.f32 %v508, %v524
        %541 = vst [vmem:[%s176] sm:$0xff] %v525
        %542 = vst [vmem:[%s176 + $0x10] sm:$0xff] %v526
        %543 = vst [vmem:[%s176 + $0x20] sm:$0xff] %v527
        %544 = vst [vmem:[%s176 + $0x30] sm:$0xff] %v528
        %545 = vst [vmem:[%s176 + $0x40] sm:$0xff] %v529
        %546 = vst [vmem:[%s176 + $0x50] sm:$0xff] %v530
        %547 = vst [vmem:[%s176 + $0x60] sm:$0xff] %v531
        %548 = vst [vmem:[%s176 + $0x70] sm:$0xff] %v532
        %549 = vst [vmem:[%s176 + $0x80] sm:$0xff] %v533
        %550 = vst [vmem:[%s176 + $0x90] sm:$0xff] %v534
        %551 = vst [vmem:[%s176 + $0xa0] sm:$0xff] %v535
        %552 = vst [vmem:[%s176 + $0xb0] sm:$0xff] %v536
        %553 = vst [vmem:[%s176 + $0xc0] sm:$0xff] %v537
        %554 = vst [vmem:[%s176 + $0xd0] sm:$0xff] %v538
        %555 = vst [vmem:[%s176 + $0xe0] sm:$0xff] %v539
        %556 = vst [vmem:[%s176 + $0xf0] sm:$0xff] %v540
        %v557 = vld [vmem:[%s176 + $0x8] sm:$0xff]
        %v558 = vld [vmem:[%s176 + $0x18] sm:$0xff]
        %v559 = vld [vmem:[%s176 + $0x28] sm:$0xff]
        %v560 = vld [vmem:[%s176 + $0x38] sm:$0xff]
        %v561 = vld [vmem:[%s176 + $0x48] sm:$0xff]
        %v562 = vld [vmem:[%s176 + $0x58] sm:$0xff]
        %v563 = vld [vmem:[%s176 + $0x68] sm:$0xff]
        %v564 = vld [vmem:[%s176 + $0x78] sm:$0xff]
        %v565 = vld [vmem:[%s176 + $0x88] sm:$0xff]
        %v566 = vld [vmem:[%s176 + $0x98] sm:$0xff]
        %v567 = vld [vmem:[%s176 + $0xa8] sm:$0xff]
        %v568 = vld [vmem:[%s176 + $0xb8] sm:$0xff]
        %v569 = vld [vmem:[%s176 + $0xc8] sm:$0xff]
        %v570 = vld [vmem:[%s176 + $0xd8] sm:$0xff]
        %v571 = vld [vmem:[%s176 + $0xe8] sm:$0xff]
        %v572 = vld [vmem:[%s176 + $0xf8] sm:$0xff]
        %v573 = vpack.c.bf16 %v558, %v557
        %v574 = vpack.c.bf16 %v560, %v559
        %v575 = vpack.c.bf16 %v562, %v561
        %v576 = vpack.c.bf16 %v564, %v563
        %v577 = vpack.c.bf16 %v566, %v565
        %v578 = vpack.c.bf16 %v568, %v567
        %v579 = vpack.c.bf16 %v570, %v569
        %v580 = vpack.c.bf16 %v572, %v571
        %v581 = vld [vmem:[#allocation3] sm:$0xf]
        %v582 = vld [vmem:[#allocation3 + $0x4] sm:$0xf]
        %v583 = vld [vmem:[#allocation3 + $0x8] sm:$0xf]
        %v584 = vld [vmem:[#allocation3 + $0xc] sm:$0xf]
        %v585 = vld [vmem:[#allocation3 + $0x10] sm:$0xf]
        %v586 = vld [vmem:[#allocation3 + $0x14] sm:$0xf]
        %v587 = vld [vmem:[#allocation3 + $0x18] sm:$0xf]
        %v588 = vld [vmem:[#allocation3 + $0x1c] sm:$0xf]
        %v589 = vld [vmem:[#allocation3 + $0x20] sm:$0xf]
        %v590 = vld [vmem:[#allocation3 + $0x24] sm:$0xf]
        %v591 = vld [vmem:[#allocation3 + $0x28] sm:$0xf]
        %v592 = vld [vmem:[#allocation3 + $0x2c] sm:$0xf]
        %v593 = vld [vmem:[#allocation3 + $0x30] sm:$0xf]
        %v594 = vld [vmem:[#allocation3 + $0x34] sm:$0xf]
        %v595 = vld [vmem:[#allocation3 + $0x38] sm:$0xf]
        %v596 = vld [vmem:[#allocation3 + $0x3c] sm:$0xf]
        %v613 = vunpack.c.l.b16 %v581
        %v614 = vunpack.c.l.b16 %v582
        %v615 = vunpack.c.l.b16 %v583
        %v616 = vunpack.c.l.b16 %v584
        %v617 = vunpack.c.l.b16 %v585
        %v618 = vunpack.c.l.b16 %v586
        %v619 = vunpack.c.l.b16 %v587
        %v620 = vunpack.c.l.b16 %v588
        %v621 = vunpack.c.l.b16 %v589
        %v622 = vunpack.c.l.b16 %v590
        %v623 = vunpack.c.l.b16 %v591
        %v624 = vunpack.c.l.b16 %v592
        %v625 = vunpack.c.l.b16 %v593
        %v626 = vunpack.c.l.b16 %v594
        %v627 = vunpack.c.l.b16 %v595
        %v628 = vunpack.c.l.b16 %v596
        %v629 = vpack.c.b16 %v614, %v613
        %v630 = vpack.c.b16 %v616, %v615
        %v631 = vpack.c.b16 %v618, %v617
        %v632 = vpack.c.b16 %v620, %v619
        %v633 = vpack.c.b16 %v622, %v621
        %v634 = vpack.c.b16 %v624, %v623
        %v635 = vpack.c.b16 %v626, %v625
        %v636 = vpack.c.b16 %v628, %v627
        %645 = vmatprep.subr.bf16.mxu0 0
        %646 = vmatpush1.bf16.msra.mxu0 %v580
        %647 = vmatprep.subr.bf16.mxu0 0
        %648 = vmatpush1.bf16.msra.mxu0 %v579
        %649 = vmatprep.subr.bf16.mxu0 0
        %650 = vmatpush1.bf16.msra.mxu0 %v578
        %651 = vmatprep.subr.bf16.mxu0 0
        %652 = vmatpush1.bf16.msra.mxu0 %v577
        %653 = vmatprep.subr.bf16.mxu0 0
        %654 = vmatpush1.bf16.msra.mxu0 %v576
        %655 = vmatprep.subr.bf16.mxu0 0
        %656 = vmatpush1.bf16.msra.mxu0 %v575
        %657 = vmatprep.subr.bf16.mxu0 0
        %658 = vmatpush1.bf16.msra.mxu0 %v574
        %659 = vmatprep.subr.bf16.mxu0 0
        %660 = vmatpush1.bf16.msra.mxu0 %v573
        %661 = vmatprep.subr.bf16.mxu0 0
        %662 = vmatpush2.bf16.msra.mxu0 0
        %663 = vmatprep.subr.bf16.mxu0 0
        %664 = vmatpush2.bf16.msra.mxu0 0
        %665 = vmatprep.subr.bf16.mxu0 0
        %666 = vmatpush2.bf16.msra.mxu0 0
        %667 = vmatprep.subr.bf16.mxu0 0
        %668 = vmatpush2.bf16.msra.mxu0 0
        %669 = vmatprep.subr.bf16.mxu0 0
        %670 = vmatpush2.bf16.msra.mxu0 0
        %671 = vmatprep.subr.bf16.mxu0 0
        %672 = vmatpush2.bf16.msra.mxu0 0
        %673 = vmatprep.subr.bf16.mxu0 0
        %674 = vmatpush2.bf16.msra.mxu0 0
        %675 = vmatprep.subr.bf16.mxu0 0
        %676 = vmatpush2.bf16.msra.mxu0 0
        %677 = vmatprep.mubr.bf16.mxu0 0
        %678 = vmatmul.mubr.bf16.gmra.mxu0 %v629
        %v679 = vpop.f32.mrf.mxu0
        %v680 = vadd.f32 0.0, %v679
        %v681 = vpop.f32.mrf.mxu0
        %v682 = vpop.f32.mrf.mxu0
        %v683 = vadd.f32 0.0, %v682
        %v684 = vpop.f32.mrf.mxu0
        %685 = vmatprep.mubr.bf16.mxu0 0
        %686 = vmatmul.mubr.bf16.gmra.mxu0 %v630
        %v687 = vpop.f32.mrf.mxu0
        %v688 = vadd.f32 0.0, %v687
        %v689 = vpop.f32.mrf.mxu0
        %v690 = vpop.f32.mrf.mxu0
        %v691 = vadd.f32 0.0, %v690
        %v692 = vpop.f32.mrf.mxu0
        %693 = vmatprep.mubr.bf16.mxu0 0
        %694 = vmatmul.mubr.bf16.gmra.mxu0 %v631
        %v695 = vpop.f32.mrf.mxu0
        %v696 = vadd.f32 0.0, %v695
        %v697 = vpop.f32.mrf.mxu0
        %v698 = vpop.f32.mrf.mxu0
        %v699 = vadd.f32 0.0, %v698
        %v700 = vpop.f32.mrf.mxu0
        %701 = vmatprep.mubr.bf16.mxu0 0
        %702 = vmatmul.mubr.bf16.gmra.mxu0 %v632
        %v703 = vpop.f32.mrf.mxu0
        %v704 = vadd.f32 0.0, %v703
        %v705 = vpop.f32.mrf.mxu0
        %v706 = vpop.f32.mrf.mxu0
        %v707 = vadd.f32 0.0, %v706
        %v708 = vpop.f32.mrf.mxu0
        %709 = vmatprep.mubr.bf16.mxu0 0
        %710 = vmatmul.mubr.bf16.gmra.mxu0 %v633
        %v711 = vpop.f32.mrf.mxu0
        %v712 = vadd.f32 0.0, %v711
        %v713 = vpop.f32.mrf.mxu0
        %v714 = vpop.f32.mrf.mxu0
        %v715 = vadd.f32 0.0, %v714
        %v716 = vpop.f32.mrf.mxu0
        %717 = vmatprep.mubr.bf16.mxu0 0
        %718 = vmatmul.mubr.bf16.gmra.mxu0 %v634
        %v719 = vpop.f32.mrf.mxu0
        %v720 = vadd.f32 0.0, %v719
        %v721 = vpop.f32.mrf.mxu0
        %v722 = vpop.f32.mrf.mxu0
        %v723 = vadd.f32 0.0, %v722
        %v724 = vpop.f32.mrf.mxu0
        %725 = vmatprep.mubr.bf16.mxu0 0
        %726 = vmatmul.mubr.bf16.gmra.mxu0 %v635
        %v727 = vpop.f32.mrf.mxu0
        %v728 = vadd.f32 0.0, %v727
        %v729 = vpop.f32.mrf.mxu0
        %v730 = vpop.f32.mrf.mxu0
        %v731 = vadd.f32 0.0, %v730
        %v732 = vpop.f32.mrf.mxu0
        %733 = vmatprep.mubr.bf16.mxu0 0
        %734 = vmatmul.mubr.bf16.gmra.mxu0 %v636
        %v735 = vpop.f32.mrf.mxu0
        %v736 = vadd.f32 0.0, %v735
        %v737 = vpop.f32.mrf.mxu0
        %v738 = vpop.f32.mrf.mxu0
        %v739 = vadd.f32 0.0, %v738
        %v740 = vpop.f32.mrf.mxu0
        %741 = vdwg.mxu0
        %v742 = vmul.f32 %v680, 0.9
        %v743 = vmul.f32 %v683, 0.9
        %v744 = vmul.f32 %v688, 0.9
        %v745 = vmul.f32 %v691, 0.9
        %v746 = vmul.f32 %v696, 0.9
        %v747 = vmul.f32 %v699, 0.9
        %v748 = vmul.f32 %v704, 0.9
        %v749 = vmul.f32 %v707, 0.9
        %v750 = vmul.f32 %v712, 0.9
        %v751 = vmul.f32 %v715, 0.9
        %v752 = vmul.f32 %v720, 0.9
        %v753 = vmul.f32 %v723, 0.9
        %v754 = vmul.f32 %v728, 0.9
        %v755 = vmul.f32 %v731, 0.9
        %v756 = vmul.f32 %v736, 0.9
        %v757 = vmul.f32 %v739, 0.9
        %v758 = vld [vmem:[#allocation2 + $0x8] sm:$0xff]
        %v759 = vld [vmem:[#allocation2 + $0x18] sm:$0xff]
        %v760 = vld [vmem:[#allocation2 + $0x28] sm:$0xff]
        %v761 = vld [vmem:[#allocation2 + $0x38] sm:$0xff]
        %v762 = vld [vmem:[#allocation2 + $0x48] sm:$0xff]
        %v763 = vld [vmem:[#allocation2 + $0x58] sm:$0xff]
        %v764 = vld [vmem:[#allocation2 + $0x68] sm:$0xff]
        %v765 = vld [vmem:[#allocation2 + $0x78] sm:$0xff]
        %v766 = vld [vmem:[#allocation2 + $0x88] sm:$0xff]
        %v767 = vld [vmem:[#allocation2 + $0x98] sm:$0xff]
        %v768 = vld [vmem:[#allocation2 + $0xa8] sm:$0xff]
        %v769 = vld [vmem:[#allocation2 + $0xb8] sm:$0xff]
        %v770 = vld [vmem:[#allocation2 + $0xc8] sm:$0xff]
        %v771 = vld [vmem:[#allocation2 + $0xd8] sm:$0xff]
        %v772 = vld [vmem:[#allocation2 + $0xe8] sm:$0xff]
        %v773 = vld [vmem:[#allocation2 + $0xf8] sm:$0xff]
        %v774 = vadd.f32 %v742, %v758
        %v775 = vadd.f32 %v743, %v759
        %v776 = vadd.f32 %v744, %v760
        %v777 = vadd.f32 %v745, %v761
        %v778 = vadd.f32 %v746, %v762
        %v779 = vadd.f32 %v747, %v763
        %v780 = vadd.f32 %v748, %v764
        %v781 = vadd.f32 %v749, %v765
        %v782 = vadd.f32 %v750, %v766
        %v783 = vadd.f32 %v751, %v767
        %v784 = vadd.f32 %v752, %v768
        %v785 = vadd.f32 %v753, %v769
        %v786 = vadd.f32 %v754, %v770
        %v787 = vadd.f32 %v755, %v771
        %v788 = vadd.f32 %v756, %v772
        %v789 = vadd.f32 %v757, %v773
        %790 = vst [vmem:[%s176 + $0x8] sm:$0xff] %v774
        %791 = vst [vmem:[%s176 + $0x18] sm:$0xff] %v775
        %792 = vst [vmem:[%s176 + $0x28] sm:$0xff] %v776
        %793 = vst [vmem:[%s176 + $0x38] sm:$0xff] %v777
        %794 = vst [vmem:[%s176 + $0x48] sm:$0xff] %v778
        %795 = vst [vmem:[%s176 + $0x58] sm:$0xff] %v779
        %796 = vst [vmem:[%s176 + $0x68] sm:$0xff] %v780
        %797 = vst [vmem:[%s176 + $0x78] sm:$0xff] %v781
        %798 = vst [vmem:[%s176 + $0x88] sm:$0xff] %v782
        %799 = vst [vmem:[%s176 + $0x98] sm:$0xff] %v783
        %800 = vst [vmem:[%s176 + $0xa8] sm:$0xff] %v784
        %801 = vst [vmem:[%s176 + $0xb8] sm:$0xff] %v785
        %802 = vst [vmem:[%s176 + $0xc8] sm:$0xff] %v786
        %803 = vst [vmem:[%s176 + $0xd8] sm:$0xff] %v787
        %804 = vst [vmem:[%s176 + $0xe8] sm:$0xff] %v788
        %805 = vst [vmem:[%s176 + $0xf8] sm:$0xff] %v789
        %v806 = vld [vmem:[%s176] sm:$0xff]
        %v807 = vld [vmem:[%s176 + $0x10] sm:$0xff]
        %v808 = vld [vmem:[%s176 + $0x20] sm:$0xff]
        %v809 = vld [vmem:[%s176 + $0x30] sm:$0xff]
        %v810 = vld [vmem:[%s176 + $0x40] sm:$0xff]
        %v811 = vld [vmem:[%s176 + $0x50] sm:$0xff]
        %v812 = vld [vmem:[%s176 + $0x60] sm:$0xff]
        %v813 = vld [vmem:[%s176 + $0x70] sm:$0xff]
        %v814 = vld [vmem:[%s176 + $0x80] sm:$0xff]
        %v815 = vld [vmem:[%s176 + $0x90] sm:$0xff]
        %v816 = vld [vmem:[%s176 + $0xa0] sm:$0xff]
        %v817 = vld [vmem:[%s176 + $0xb0] sm:$0xff]
        %v818 = vld [vmem:[%s176 + $0xc0] sm:$0xff]
        %v819 = vld [vmem:[%s176 + $0xd0] sm:$0xff]
        %v820 = vld [vmem:[%s176 + $0xe0] sm:$0xff]
        %v821 = vld [vmem:[%s176 + $0xf0] sm:$0xff]
        %v822 = vpack.c.bf16 %v807, %v806
        %v823 = vpack.c.bf16 %v809, %v808
        %v824 = vpack.c.bf16 %v811, %v810
        %v825 = vpack.c.bf16 %v813, %v812
        %v826 = vpack.c.bf16 %v815, %v814
        %v827 = vpack.c.bf16 %v817, %v816
        %v828 = vpack.c.bf16 %v819, %v818
        %v829 = vpack.c.bf16 %v821, %v820
        %v830 = vld [vmem:[#allocation3] sm:$0xf]
        %v831 = vld [vmem:[#allocation3 + $0x4] sm:$0xf]
        %v832 = vld [vmem:[#allocation3 + $0x8] sm:$0xf]
        %v833 = vld [vmem:[#allocation3 + $0xc] sm:$0xf]
        %v834 = vld [vmem:[#allocation3 + $0x10] sm:$0xf]
        %v835 = vld [vmem:[#allocation3 + $0x14] sm:$0xf]
        %v836 = vld [vmem:[#allocation3 + $0x18] sm:$0xf]
        %v837 = vld [vmem:[#allocation3 + $0x1c] sm:$0xf]
        %v838 = vld [vmem:[#allocation3 + $0x20] sm:$0xf]
        %v839 = vld [vmem:[#allocation3 + $0x24] sm:$0xf]
        %v840 = vld [vmem:[#allocation3 + $0x28] sm:$0xf]
        %v841 = vld [vmem:[#allocation3 + $0x2c] sm:$0xf]
        %v842 = vld [vmem:[#allocation3 + $0x30] sm:$0xf]
        %v843 = vld [vmem:[#allocation3 + $0x34] sm:$0xf]
        %v844 = vld [vmem:[#allocation3 + $0x38] sm:$0xf]
        %v845 = vld [vmem:[#allocation3 + $0x3c] sm:$0xf]
        %v862 = vunpack.c.l.b16 %v830
        %v863 = vunpack.c.l.b16 %v831
        %v864 = vunpack.c.l.b16 %v832
        %v865 = vunpack.c.l.b16 %v833
        %v866 = vunpack.c.l.b16 %v834
        %v867 = vunpack.c.l.b16 %v835
        %v868 = vunpack.c.l.b16 %v836
        %v869 = vunpack.c.l.b16 %v837
        %v870 = vunpack.c.l.b16 %v838
        %v871 = vunpack.c.l.b16 %v839
        %v872 = vunpack.c.l.b16 %v840
        %v873 = vunpack.c.l.b16 %v841
        %v874 = vunpack.c.l.b16 %v842
        %v875 = vunpack.c.l.b16 %v843
        %v876 = vunpack.c.l.b16 %v844
        %v877 = vunpack.c.l.b16 %v845
        %v878 = vpack.c.b16 %v863, %v862
        %v879 = vpack.c.b16 %v865, %v864
        %v880 = vpack.c.b16 %v867, %v866
        %v881 = vpack.c.b16 %v869, %v868
        %v882 = vpack.c.b16 %v871, %v870
        %v883 = vpack.c.b16 %v873, %v872
        %v884 = vpack.c.b16 %v875, %v874
        %v885 = vpack.c.b16 %v877, %v876
        %894 = vmatprep.subr.bf16.mxu0 0
        %895 = vmatpush1.bf16.msra.mxu0 %v829
        %896 = vmatprep.subr.bf16.mxu0 0
        %897 = vmatpush1.bf16.msra.mxu0 %v828
        %898 = vmatprep.subr.bf16.mxu0 0
        %899 = vmatpush1.bf16.msra.mxu0 %v827
        %900 = vmatprep.subr.bf16.mxu0 0
        %901 = vmatpush1.bf16.msra.mxu0 %v826
        %902 = vmatprep.subr.bf16.mxu0 0
        %903 = vmatpush1.bf16.msra.mxu0 %v825
        %904 = vmatprep.subr.bf16.mxu0 0
        %905 = vmatpush1.bf16.msra.mxu0 %v824
        %906 = vmatprep.subr.bf16.mxu0 0
        %907 = vmatpush1.bf16.msra.mxu0 %v823
        %908 = vmatprep.subr.bf16.mxu0 0
        %909 = vmatpush1.bf16.msra.mxu0 %v822
        %910 = vmatprep.subr.bf16.mxu0 0
        %911 = vmatpush2.bf16.msra.mxu0 0
        %912 = vmatprep.subr.bf16.mxu0 0
        %913 = vmatpush2.bf16.msra.mxu0 0
        %914 = vmatprep.subr.bf16.mxu0 0
        %915 = vmatpush2.bf16.msra.mxu0 0
        %916 = vmatprep.subr.bf16.mxu0 0
        %917 = vmatpush2.bf16.msra.mxu0 0
        %918 = vmatprep.subr.bf16.mxu0 0
        %919 = vmatpush2.bf16.msra.mxu0 0
        %920 = vmatprep.subr.bf16.mxu0 0
        %921 = vmatpush2.bf16.msra.mxu0 0
        %922 = vmatprep.subr.bf16.mxu0 0
        %923 = vmatpush2.bf16.msra.mxu0 0
        %924 = vmatprep.subr.bf16.mxu0 0
        %925 = vmatpush2.bf16.msra.mxu0 0
        %926 = vmatprep.mubr.bf16.mxu0 0
        %927 = vmatmul.mubr.bf16.gmra.mxu0 %v878
        %v928 = vpop.f32.mrf.mxu0
        %v929 = vadd.f32 0.0, %v928
        %v930 = vpop.f32.mrf.mxu0
        %v931 = vpop.f32.mrf.mxu0
        %v932 = vadd.f32 0.0, %v931
        %v933 = vpop.f32.mrf.mxu0
        %934 = vmatprep.mubr.bf16.mxu0 0
        %935 = vmatmul.mubr.bf16.gmra.mxu0 %v879
        %v936 = vpop.f32.mrf.mxu0
        %v937 = vadd.f32 0.0, %v936
        %v938 = vpop.f32.mrf.mxu0
        %v939 = vpop.f32.mrf.mxu0
        %v940 = vadd.f32 0.0, %v939
        %v941 = vpop.f32.mrf.mxu0
        %942 = vmatprep.mubr.bf16.mxu0 0
        %943 = vmatmul.mubr.bf16.gmra.mxu0 %v880
        %v944 = vpop.f32.mrf.mxu0
        %v945 = vadd.f32 0.0, %v944
        %v946 = vpop.f32.mrf.mxu0
        %v947 = vpop.f32.mrf.mxu0
        %v948 = vadd.f32 0.0, %v947
        %v949 = vpop.f32.mrf.mxu0
        %950 = vmatprep.mubr.bf16.mxu0 0
        %951 = vmatmul.mubr.bf16.gmra.mxu0 %v881
        %v952 = vpop.f32.mrf.mxu0
        %v953 = vadd.f32 0.0, %v952
        %v954 = vpop.f32.mrf.mxu0
        %v955 = vpop.f32.mrf.mxu0
        %v956 = vadd.f32 0.0, %v955
        %v957 = vpop.f32.mrf.mxu0
        %958 = vmatprep.mubr.bf16.mxu0 0
        %959 = vmatmul.mubr.bf16.gmra.mxu0 %v882
        %v960 = vpop.f32.mrf.mxu0
        %v961 = vadd.f32 0.0, %v960
        %v962 = vpop.f32.mrf.mxu0
        %v963 = vpop.f32.mrf.mxu0
        %v964 = vadd.f32 0.0, %v963
        %v965 = vpop.f32.mrf.mxu0
        %966 = vmatprep.mubr.bf16.mxu0 0
        %967 = vmatmul.mubr.bf16.gmra.mxu0 %v883
        %v968 = vpop.f32.mrf.mxu0
        %v969 = vadd.f32 0.0, %v968
        %v970 = vpop.f32.mrf.mxu0
        %v971 = vpop.f32.mrf.mxu0
        %v972 = vadd.f32 0.0, %v971
        %v973 = vpop.f32.mrf.mxu0
        %974 = vmatprep.mubr.bf16.mxu0 0
        %975 = vmatmul.mubr.bf16.gmra.mxu0 %v884
        %v976 = vpop.f32.mrf.mxu0
        %v977 = vadd.f32 0.0, %v976
        %v978 = vpop.f32.mrf.mxu0
        %v979 = vpop.f32.mrf.mxu0
        %v980 = vadd.f32 0.0, %v979
        %v981 = vpop.f32.mrf.mxu0
        %982 = vmatprep.mubr.bf16.mxu0 0
        %983 = vmatmul.mubr.bf16.gmra.mxu0 %v885
        %v984 = vpop.f32.mrf.mxu0
        %v985 = vadd.f32 0.0, %v984
        %v986 = vpop.f32.mrf.mxu0
        %v987 = vpop.f32.mrf.mxu0
        %v988 = vadd.f32 0.0, %v987
        %v989 = vpop.f32.mrf.mxu0
        %990 = vdwg.mxu0
        %v991 = vmul.f32 %v929, 0.9
        %v992 = vmul.f32 %v932, 0.9
        %v993 = vmul.f32 %v937, 0.9
        %v994 = vmul.f32 %v940, 0.9
        %v995 = vmul.f32 %v945, 0.9
        %v996 = vmul.f32 %v948, 0.9
        %v997 = vmul.f32 %v953, 0.9
        %v998 = vmul.f32 %v956, 0.9
        %v999 = vmul.f32 %v961, 0.9
        %v1000 = vmul.f32 %v964, 0.9
        %v1001 = vmul.f32 %v969, 0.9
        %v1002 = vmul.f32 %v972, 0.9
        %v1003 = vmul.f32 %v977, 0.9
        %v1004 = vmul.f32 %v980, 0.9
        %v1005 = vmul.f32 %v985, 0.9
        %v1006 = vmul.f32 %v988, 0.9
        %v1007 = vld [vmem:[#allocation2] sm:$0xff]
        %v1008 = vld [vmem:[#allocation2 + $0x10] sm:$0xff]
        %v1009 = vld [vmem:[#allocation2 + $0x20] sm:$0xff]
        %v1010 = vld [vmem:[#allocation2 + $0x30] sm:$0xff]
        %v1011 = vld [vmem:[#allocation2 + $0x40] sm:$0xff]
        %v1012 = vld [vmem:[#allocation2 + $0x50] sm:$0xff]
        %v1013 = vld [vmem:[#allocation2 + $0x60] sm:$0xff]
        %v1014 = vld [vmem:[#allocation2 + $0x70] sm:$0xff]
        %v1015 = vld [vmem:[#allocation2 + $0x80] sm:$0xff]
        %v1016 = vld [vmem:[#allocation2 + $0x90] sm:$0xff]
        %v1017 = vld [vmem:[#allocation2 + $0xa0] sm:$0xff]
        %v1018 = vld [vmem:[#allocation2 + $0xb0] sm:$0xff]
        %v1019 = vld [vmem:[#allocation2 + $0xc0] sm:$0xff]
        %v1020 = vld [vmem:[#allocation2 + $0xd0] sm:$0xff]
        %v1021 = vld [vmem:[#allocation2 + $0xe0] sm:$0xff]
        %v1022 = vld [vmem:[#allocation2 + $0xf0] sm:$0xff]
        %v1023 = vadd.f32 %v991, %v1007
        %v1024 = vadd.f32 %v992, %v1008
        %v1025 = vadd.f32 %v993, %v1009
        %v1026 = vadd.f32 %v994, %v1010
        %v1027 = vadd.f32 %v995, %v1011
        %v1028 = vadd.f32 %v996, %v1012
        %v1029 = vadd.f32 %v997, %v1013
        %v1030 = vadd.f32 %v998, %v1014
        %v1031 = vadd.f32 %v999, %v1015
        %v1032 = vadd.f32 %v1000, %v1016
        %v1033 = vadd.f32 %v1001, %v1017
        %v1034 = vadd.f32 %v1002, %v1018
        %v1035 = vadd.f32 %v1003, %v1019
        %v1036 = vadd.f32 %v1004, %v1020
        %v1037 = vadd.f32 %v1005, %v1021
        %v1038 = vadd.f32 %v1006, %v1022
        %1039 = vst [vmem:[%s176] sm:$0xff] %v1023
        %1040 = vst [vmem:[%s176 + $0x10] sm:$0xff] %v1024
        %1041 = vst [vmem:[%s176 + $0x20] sm:$0xff] %v1025
        %1042 = vst [vmem:[%s176 + $0x30] sm:$0xff] %v1026
        %1043 = vst [vmem:[%s176 + $0x40] sm:$0xff] %v1027
        %1044 = vst [vmem:[%s176 + $0x50] sm:$0xff] %v1028
        %1045 = vst [vmem:[%s176 + $0x60] sm:$0xff] %v1029
        %1046 = vst [vmem:[%s176 + $0x70] sm:$0xff] %v1030
        %1047 = vst [vmem:[%s176 + $0x80] sm:$0xff] %v1031
        %1048 = vst [vmem:[%s176 + $0x90] sm:$0xff] %v1032
        %1049 = vst [vmem:[%s176 + $0xa0] sm:$0xff] %v1033
        %1050 = vst [vmem:[%s176 + $0xb0] sm:$0xff] %v1034
        %1051 = vst [vmem:[%s176 + $0xc0] sm:$0xff] %v1035
        %1052 = vst [vmem:[%s176 + $0xd0] sm:$0xff] %v1036
        %1053 = vst [vmem:[%s176 + $0xe0] sm:$0xff] %v1037
        %1054 = vst [vmem:[%s176 + $0xf0] sm:$0xff] %v1038
        %v1055 = vld [vmem:[%s176 + $0x8] sm:$0xff]
        %v1056 = vld [vmem:[%s176 + $0x18] sm:$0xff]
        %v1057 = vld [vmem:[%s176 + $0x28] sm:$0xff]
        %v1058 = vld [vmem:[%s176 + $0x38] sm:$0xff]
        %v1059 = vld [vmem:[%s176 + $0x48] sm:$0xff]
        %v1060 = vld [vmem:[%s176 + $0x58] sm:$0xff]
        %v1061 = vld [vmem:[%s176 + $0x68] sm:$0xff]
        %v1062 = vld [vmem:[%s176 + $0x78] sm:$0xff]
        %v1063 = vld [vmem:[%s176 + $0x88] sm:$0xff]
        %v1064 = vld [vmem:[%s176 + $0x98] sm:$0xff]
        %v1065 = vld [vmem:[%s176 + $0xa8] sm:$0xff]
        %v1066 = vld [vmem:[%s176 + $0xb8] sm:$0xff]
        %v1067 = vld [vmem:[%s176 + $0xc8] sm:$0xff]
        %v1068 = vld [vmem:[%s176 + $0xd8] sm:$0xff]
        %v1069 = vld [vmem:[%s176 + $0xe8] sm:$0xff]
        %v1070 = vld [vmem:[%s176 + $0xf8] sm:$0xff]
        %v1071 = vpack.c.bf16 %v1056, %v1055
        %v1072 = vpack.c.bf16 %v1058, %v1057
        %v1073 = vpack.c.bf16 %v1060, %v1059
        %v1074 = vpack.c.bf16 %v1062, %v1061
        %v1075 = vpack.c.bf16 %v1064, %v1063
        %v1076 = vpack.c.bf16 %v1066, %v1065
        %v1077 = vpack.c.bf16 %v1068, %v1067
        %v1078 = vpack.c.bf16 %v1070, %v1069
        %v1079 = vld [vmem:[#allocation3] sm:$0xf]
        %v1080 = vld [vmem:[#allocation3 + $0x4] sm:$0xf]
        %v1081 = vld [vmem:[#allocation3 + $0x8] sm:$0xf]
        %v1082 = vld [vmem:[#allocation3 + $0xc] sm:$0xf]
        %v1083 = vld [vmem:[#allocation3 + $0x10] sm:$0xf]
        %v1084 = vld [vmem:[#allocation3 + $0x14] sm:$0xf]
        %v1085 = vld [vmem:[#allocation3 + $0x18] sm:$0xf]
        %v1086 = vld [vmem:[#allocation3 + $0x1c] sm:$0xf]
        %v1087 = vld [vmem:[#allocation3 + $0x20] sm:$0xf]
        %v1088 = vld [vmem:[#allocation3 + $0x24] sm:$0xf]
        %v1089 = vld [vmem:[#allocation3 + $0x28] sm:$0xf]
        %v1090 = vld [vmem:[#allocation3 + $0x2c] sm:$0xf]
        %v1091 = vld [vmem:[#allocation3 + $0x30] sm:$0xf]
        %v1092 = vld [vmem:[#allocation3 + $0x34] sm:$0xf]
        %v1093 = vld [vmem:[#allocation3 + $0x38] sm:$0xf]
        %v1094 = vld [vmem:[#allocation3 + $0x3c] sm:$0xf]
        %v1111 = vunpack.c.l.b16 %v1079
        %v1112 = vunpack.c.l.b16 %v1080
        %v1113 = vunpack.c.l.b16 %v1081
        %v1114 = vunpack.c.l.b16 %v1082
        %v1115 = vunpack.c.l.b16 %v1083
        %v1116 = vunpack.c.l.b16 %v1084
        %v1117 = vunpack.c.l.b16 %v1085
        %v1118 = vunpack.c.l.b16 %v1086
        %v1119 = vunpack.c.l.b16 %v1087
        %v1120 = vunpack.c.l.b16 %v1088
        %v1121 = vunpack.c.l.b16 %v1089
        %v1122 = vunpack.c.l.b16 %v1090
        %v1123 = vunpack.c.l.b16 %v1091
        %v1124 = vunpack.c.l.b16 %v1092
        %v1125 = vunpack.c.l.b16 %v1093
        %v1126 = vunpack.c.l.b16 %v1094
        %v1127 = vpack.c.b16 %v1112, %v1111
        %v1128 = vpack.c.b16 %v1114, %v1113
        %v1129 = vpack.c.b16 %v1116, %v1115
        %v1130 = vpack.c.b16 %v1118, %v1117
        %v1131 = vpack.c.b16 %v1120, %v1119
        %v1132 = vpack.c.b16 %v1122, %v1121
        %v1133 = vpack.c.b16 %v1124, %v1123
        %v1134 = vpack.c.b16 %v1126, %v1125
        %1143 = vmatprep.subr.bf16.mxu0 0
        %1144 = vmatpush1.bf16.msra.mxu0 %v1078
        %1145 = vmatprep.subr.bf16.mxu0 0
        %1146 = vmatpush1.bf16.msra.mxu0 %v1077
        %1147 = vmatprep.subr.bf16.mxu0 0
        %1148 = vmatpush1.bf16.msra.mxu0 %v1076
        %1149 = vmatprep.subr.bf16.mxu0 0
        %1150 = vmatpush1.bf16.msra.mxu0 %v1075
        %1151 = vmatprep.subr.bf16.mxu0 0
        %1152 = vmatpush1.bf16.msra.mxu0 %v1074
        %1153 = vmatprep.subr.bf16.mxu0 0
        %1154 = vmatpush1.bf16.msra.mxu0 %v1073
        %1155 = vmatprep.subr.bf16.mxu0 0
        %1156 = vmatpush1.bf16.msra.mxu0 %v1072
        %1157 = vmatprep.subr.bf16.mxu0 0
        %1158 = vmatpush1.bf16.msra.mxu0 %v1071
        %1159 = vmatprep.subr.bf16.mxu0 0
        %1160 = vmatpush2.bf16.msra.mxu0 0
        %1161 = vmatprep.subr.bf16.mxu0 0
        %1162 = vmatpush2.bf16.msra.mxu0 0
        %1163 = vmatprep.subr.bf16.mxu0 0
        %1164 = vmatpush2.bf16.msra.mxu0 0
        %1165 = vmatprep.subr.bf16.mxu0 0
        %1166 = vmatpush2.bf16.msra.mxu0 0
        %1167 = vmatprep.subr.bf16.mxu0 0
        %1168 = vmatpush2.bf16.msra.mxu0 0
        %1169 = vmatprep.subr.bf16.mxu0 0
        %1170 = vmatpush2.bf16.msra.mxu0 0
        %1171 = vmatprep.subr.bf16.mxu0 0
        %1172 = vmatpush2.bf16.msra.mxu0 0
        %1173 = vmatprep.subr.bf16.mxu0 0
        %1174 = vmatpush2.bf16.msra.mxu0 0
        %1175 = vmatprep.mubr.bf16.mxu0 0
        %1176 = vmatmul.mubr.bf16.gmra.mxu0 %v1127
        %v1177 = vpop.f32.mrf.mxu0
        %v1178 = vadd.f32 0.0, %v1177
        %v1179 = vpop.f32.mrf.mxu0
        %v1180 = vpop.f32.mrf.mxu0
        %v1181 = vadd.f32 0.0, %v1180
        %v1182 = vpop.f32.mrf.mxu0
        %1183 = vmatprep.mubr.bf16.mxu0 0
        %1184 = vmatmul.mubr.bf16.gmra.mxu0 %v1128
        %v1185 = vpop.f32.mrf.mxu0
        %v1186 = vadd.f32 0.0, %v1185
        %v1187 = vpop.f32.mrf.mxu0
        %v1188 = vpop.f32.mrf.mxu0
        %v1189 = vadd.f32 0.0, %v1188
        %v1190 = vpop.f32.mrf.mxu0
        %1191 = vmatprep.mubr.bf16.mxu0 0
        %1192 = vmatmul.mubr.bf16.gmra.mxu0 %v1129
        %v1193 = vpop.f32.mrf.mxu0
        %v1194 = vadd.f32 0.0, %v1193
        %v1195 = vpop.f32.mrf.mxu0
        %v1196 = vpop.f32.mrf.mxu0
        %v1197 = vadd.f32 0.0, %v1196
        %v1198 = vpop.f32.mrf.mxu0
        %1199 = vmatprep.mubr.bf16.mxu0 0
        %1200 = vmatmul.mubr.bf16.gmra.mxu0 %v1130
        %v1201 = vpop.f32.mrf.mxu0
        %v1202 = vadd.f32 0.0, %v1201
        %v1203 = vpop.f32.mrf.mxu0
        %v1204 = vpop.f32.mrf.mxu0
        %v1205 = vadd.f32 0.0, %v1204
        %v1206 = vpop.f32.mrf.mxu0
        %1207 = vmatprep.mubr.bf16.mxu0 0
        %1208 = vmatmul.mubr.bf16.gmra.mxu0 %v1131
        %v1209 = vpop.f32.mrf.mxu0
        %v1210 = vadd.f32 0.0, %v1209
        %v1211 = vpop.f32.mrf.mxu0
        %v1212 = vpop.f32.mrf.mxu0
        %v1213 = vadd.f32 0.0, %v1212
        %v1214 = vpop.f32.mrf.mxu0
        %1215 = vmatprep.mubr.bf16.mxu0 0
        %1216 = vmatmul.mubr.bf16.gmra.mxu0 %v1132
        %v1217 = vpop.f32.mrf.mxu0
        %v1218 = vadd.f32 0.0, %v1217
        %v1219 = vpop.f32.mrf.mxu0
        %v1220 = vpop.f32.mrf.mxu0
        %v1221 = vadd.f32 0.0, %v1220
        %v1222 = vpop.f32.mrf.mxu0
        %1223 = vmatprep.mubr.bf16.mxu0 0
        %1224 = vmatmul.mubr.bf16.gmra.mxu0 %v1133
        %v1225 = vpop.f32.mrf.mxu0
        %v1226 = vadd.f32 0.0, %v1225
        %v1227 = vpop.f32.mrf.mxu0
        %v1228 = vpop.f32.mrf.mxu0
        %v1229 = vadd.f32 0.0, %v1228
        %v1230 = vpop.f32.mrf.mxu0
        %1231 = vmatprep.mubr.bf16.mxu0 0
        %1232 = vmatmul.mubr.bf16.gmra.mxu0 %v1134
        %v1233 = vpop.f32.mrf.mxu0
        %v1234 = vadd.f32 0.0, %v1233
        %v1235 = vpop.f32.mrf.mxu0
        %v1236 = vpop.f32.mrf.mxu0
        %v1237 = vadd.f32 0.0, %v1236
        %v1238 = vpop.f32.mrf.mxu0
        %1239 = vdwg.mxu0
        %v1240 = vmul.f32 %v1178, 0.9
        %v1241 = vmul.f32 %v1181, 0.9
        %v1242 = vmul.f32 %v1186, 0.9
        %v1243 = vmul.f32 %v1189, 0.9
        %v1244 = vmul.f32 %v1194, 0.9
        %v1245 = vmul.f32 %v1197, 0.9
        %v1246 = vmul.f32 %v1202, 0.9
        %v1247 = vmul.f32 %v1205, 0.9
        %v1248 = vmul.f32 %v1210, 0.9
        %v1249 = vmul.f32 %v1213, 0.9
        %v1250 = vmul.f32 %v1218, 0.9
        %v1251 = vmul.f32 %v1221, 0.9
        %v1252 = vmul.f32 %v1226, 0.9
        %v1253 = vmul.f32 %v1229, 0.9
        %v1254 = vmul.f32 %v1234, 0.9
        %v1255 = vmul.f32 %v1237, 0.9
        %v1256 = vld [vmem:[#allocation2 + $0x8] sm:$0xff]
        %v1257 = vld [vmem:[#allocation2 + $0x18] sm:$0xff]
        %v1258 = vld [vmem:[#allocation2 + $0x28] sm:$0xff]
        %v1259 = vld [vmem:[#allocation2 + $0x38] sm:$0xff]
        %v1260 = vld [vmem:[#allocation2 + $0x48] sm:$0xff]
        %v1261 = vld [vmem:[#allocation2 + $0x58] sm:$0xff]
        %v1262 = vld [vmem:[#allocation2 + $0x68] sm:$0xff]
        %v1263 = vld [vmem:[#allocation2 + $0x78] sm:$0xff]
        %v1264 = vld [vmem:[#allocation2 + $0x88] sm:$0xff]
        %v1265 = vld [vmem:[#allocation2 + $0x98] sm:$0xff]
        %v1266 = vld [vmem:[#allocation2 + $0xa8] sm:$0xff]
        %v1267 = vld [vmem:[#allocation2 + $0xb8] sm:$0xff]
        %v1268 = vld [vmem:[#allocation2 + $0xc8] sm:$0xff]
        %v1269 = vld [vmem:[#allocation2 + $0xd8] sm:$0xff]
        %v1270 = vld [vmem:[#allocation2 + $0xe8] sm:$0xff]
        %v1271 = vld [vmem:[#allocation2 + $0xf8] sm:$0xff]
        %v1272 = vadd.f32 %v1240, %v1256
        %v1273 = vadd.f32 %v1241, %v1257
        %v1274 = vadd.f32 %v1242, %v1258
        %v1275 = vadd.f32 %v1243, %v1259
        %v1276 = vadd.f32 %v1244, %v1260
        %v1277 = vadd.f32 %v1245, %v1261
        %v1278 = vadd.f32 %v1246, %v1262
        %v1279 = vadd.f32 %v1247, %v1263
        %v1280 = vadd.f32 %v1248, %v1264
        %v1281 = vadd.f32 %v1249, %v1265
        %v1282 = vadd.f32 %v1250, %v1266
        %v1283 = vadd.f32 %v1251, %v1267
        %v1284 = vadd.f32 %v1252, %v1268
        %v1285 = vadd.f32 %v1253, %v1269
        %v1286 = vadd.f32 %v1254, %v1270
        %v1287 = vadd.f32 %v1255, %v1271
        %1288 = vst [vmem:[%s176 + $0x8] sm:$0xff] %v1272
        %1289 = vst [vmem:[%s176 + $0x18] sm:$0xff] %v1273
        %1290 = vst [vmem:[%s176 + $0x28] sm:$0xff] %v1274
        %1291 = vst [vmem:[%s176 + $0x38] sm:$0xff] %v1275
        %1292 = vst [vmem:[%s176 + $0x48] sm:$0xff] %v1276
        %1293 = vst [vmem:[%s176 + $0x58] sm:$0xff] %v1277
        %1294 = vst [vmem:[%s176 + $0x68] sm:$0xff] %v1278
        %1295 = vst [vmem:[%s176 + $0x78] sm:$0xff] %v1279
        %1296 = vst [vmem:[%s176 + $0x88] sm:$0xff] %v1280
        %1297 = vst [vmem:[%s176 + $0x98] sm:$0xff] %v1281
        %1298 = vst [vmem:[%s176 + $0xa8] sm:$0xff] %v1282
        %1299 = vst [vmem:[%s176 + $0xb8] sm:$0xff] %v1283
        %1300 = vst [vmem:[%s176 + $0xc8] sm:$0xff] %v1284
        %1301 = vst [vmem:[%s176 + $0xd8] sm:$0xff] %v1285
        %1302 = vst [vmem:[%s176 + $0xe8] sm:$0xff] %v1286
        %1303 = vst [vmem:[%s176 + $0xf8] sm:$0xff] %v1287
        %v1304 = vld [vmem:[%s176] sm:$0xff]
        %v1305 = vld [vmem:[%s176 + $0x10] sm:$0xff]
        %v1306 = vld [vmem:[%s176 + $0x20] sm:$0xff]
        %v1307 = vld [vmem:[%s176 + $0x30] sm:$0xff]
        %v1308 = vld [vmem:[%s176 + $0x40] sm:$0xff]
        %v1309 = vld [vmem:[%s176 + $0x50] sm:$0xff]
        %v1310 = vld [vmem:[%s176 + $0x60] sm:$0xff]
        %v1311 = vld [vmem:[%s176 + $0x70] sm:$0xff]
        %v1312 = vld [vmem:[%s176 + $0x80] sm:$0xff]
        %v1313 = vld [vmem:[%s176 + $0x90] sm:$0xff]
        %v1314 = vld [vmem:[%s176 + $0xa0] sm:$0xff]
        %v1315 = vld [vmem:[%s176 + $0xb0] sm:$0xff]
        %v1316 = vld [vmem:[%s176 + $0xc0] sm:$0xff]
        %v1317 = vld [vmem:[%s176 + $0xd0] sm:$0xff]
        %v1318 = vld [vmem:[%s176 + $0xe0] sm:$0xff]
        %v1319 = vld [vmem:[%s176 + $0xf0] sm:$0xff]
        %v1320 = vpack.c.bf16 %v1305, %v1304
        %v1321 = vpack.c.bf16 %v1307, %v1306
        %v1322 = vpack.c.bf16 %v1309, %v1308
        %v1323 = vpack.c.bf16 %v1311, %v1310
        %v1324 = vpack.c.bf16 %v1313, %v1312
        %v1325 = vpack.c.bf16 %v1315, %v1314
        %v1326 = vpack.c.bf16 %v1317, %v1316
        %v1327 = vpack.c.bf16 %v1319, %v1318
        %v1328 = vld [vmem:[#allocation3] sm:$0xf]
        %v1329 = vld [vmem:[#allocation3 + $0x4] sm:$0xf]
        %v1330 = vld [vmem:[#allocation3 + $0x8] sm:$0xf]
        %v1331 = vld [vmem:[#allocation3 + $0xc] sm:$0xf]
        %v1332 = vld [vmem:[#allocation3 + $0x10] sm:$0xf]
        %v1333 = vld [vmem:[#allocation3 + $0x14] sm:$0xf]
        %v1334 = vld [vmem:[#allocation3 + $0x18] sm:$0xf]
        %v1335 = vld [vmem:[#allocation3 + $0x1c] sm:$0xf]
        %v1336 = vld [vmem:[#allocation3 + $0x20] sm:$0xf]
        %v1337 = vld [vmem:[#allocation3 + $0x24] sm:$0xf]
        %v1338 = vld [vmem:[#allocation3 + $0x28] sm:$0xf]
        %v1339 = vld [vmem:[#allocation3 + $0x2c] sm:$0xf]
        %v1340 = vld [vmem:[#allocation3 + $0x30] sm:$0xf]
        %v1341 = vld [vmem:[#allocation3 + $0x34] sm:$0xf]
        %v1342 = vld [vmem:[#allocation3 + $0x38] sm:$0xf]
        %v1343 = vld [vmem:[#allocation3 + $0x3c] sm:$0xf]
        %v1360 = vunpack.c.l.b16 %v1328
        %v1361 = vunpack.c.l.b16 %v1329
        %v1362 = vunpack.c.l.b16 %v1330
        %v1363 = vunpack.c.l.b16 %v1331
        %v1364 = vunpack.c.l.b16 %v1332
        %v1365 = vunpack.c.l.b16 %v1333
        %v1366 = vunpack.c.l.b16 %v1334
        %v1367 = vunpack.c.l.b16 %v1335
        %v1368 = vunpack.c.l.b16 %v1336
        %v1369 = vunpack.c.l.b16 %v1337
        %v1370 = vunpack.c.l.b16 %v1338
        %v1371 = vunpack.c.l.b16 %v1339
        %v1372 = vunpack.c.l.b16 %v1340
        %v1373 = vunpack.c.l.b16 %v1341
        %v1374 = vunpack.c.l.b16 %v1342
        %v1375 = vunpack.c.l.b16 %v1343
        %v1376 = vpack.c.b16 %v1361, %v1360
        %v1377 = vpack.c.b16 %v1363, %v1362
        %v1378 = vpack.c.b16 %v1365, %v1364
        %v1379 = vpack.c.b16 %v1367, %v1366
        %v1380 = vpack.c.b16 %v1369, %v1368
        %v1381 = vpack.c.b16 %v1371, %v1370
        %v1382 = vpack.c.b16 %v1373, %v1372
        %v1383 = vpack.c.b16 %v1375, %v1374
        %1392 = vmatprep.subr.bf16.mxu0 0
        %1393 = vmatpush1.bf16.msra.mxu0 %v1327
        %1394 = vmatprep.subr.bf16.mxu0 0
        %1395 = vmatpush1.bf16.msra.mxu0 %v1326
        %1396 = vmatprep.subr.bf16.mxu0 0
        %1397 = vmatpush1.bf16.msra.mxu0 %v1325
        %1398 = vmatprep.subr.bf16.mxu0 0
        %1399 = vmatpush1.bf16.msra.mxu0 %v1324
        %1400 = vmatprep.subr.bf16.mxu0 0
        %1401 = vmatpush1.bf16.msra.mxu0 %v1323
        %1402 = vmatprep.subr.bf16.mxu0 0
        %1403 = vmatpush1.bf16.msra.mxu0 %v1322
        %1404 = vmatprep.subr.bf16.mxu0 0
        %1405 = vmatpush1.bf16.msra.mxu0 %v1321
        %1406 = vmatprep.subr.bf16.mxu0 0
        %1407 = vmatpush1.bf16.msra.mxu0 %v1320
        %1408 = vmatprep.subr.bf16.mxu0 0
        %1409 = vmatpush2.bf16.msra.mxu0 0
        %1410 = vmatprep.subr.bf16.mxu0 0
        %1411 = vmatpush2.bf16.msra.mxu0 0
        %1412 = vmatprep.subr.bf16.mxu0 0
        %1413 = vmatpush2.bf16.msra.mxu0 0
        %1414 = vmatprep.subr.bf16.mxu0 0
        %1415 = vmatpush2.bf16.msra.mxu0 0
        %1416 = vmatprep.subr.bf16.mxu0 0
        %1417 = vmatpush2.bf16.msra.mxu0 0
        %1418 = vmatprep.subr.bf16.mxu0 0
        %1419 = vmatpush2.bf16.msra.mxu0 0
        %1420 = vmatprep.subr.bf16.mxu0 0
        %1421 = vmatpush2.bf16.msra.mxu0 0
        %1422 = vmatprep.subr.bf16.mxu0 0
        %1423 = vmatpush2.bf16.msra.mxu0 0
        %1424 = vmatprep.mubr.bf16.mxu0 0
        %1425 = vmatmul.mubr.bf16.gmra.mxu0 %v1376
        %v1426 = vpop.f32.mrf.mxu0
        %v1427 = vadd.f32 0.0, %v1426
        %v1428 = vpop.f32.mrf.mxu0
        %v1429 = vpop.f32.mrf.mxu0
        %v1430 = vadd.f32 0.0, %v1429
        %v1431 = vpop.f32.mrf.mxu0
        %1432 = vmatprep.mubr.bf16.mxu0 0
        %1433 = vmatmul.mubr.bf16.gmra.mxu0 %v1377
        %v1434 = vpop.f32.mrf.mxu0
        %v1435 = vadd.f32 0.0, %v1434
        %v1436 = vpop.f32.mrf.mxu0
        %v1437 = vpop.f32.mrf.mxu0
        %v1438 = vadd.f32 0.0, %v1437
        %v1439 = vpop.f32.mrf.mxu0
        %1440 = vmatprep.mubr.bf16.mxu0 0
        %1441 = vmatmul.mubr.bf16.gmra.mxu0 %v1378
        %v1442 = vpop.f32.mrf.mxu0
        %v1443 = vadd.f32 0.0, %v1442
        %v1444 = vpop.f32.mrf.mxu0
        %v1445 = vpop.f32.mrf.mxu0
        %v1446 = vadd.f32 0.0, %v1445
        %v1447 = vpop.f32.mrf.mxu0
        %1448 = vmatprep.mubr.bf16.mxu0 0
        %1449 = vmatmul.mubr.bf16.gmra.mxu0 %v1379
        %v1450 = vpop.f32.mrf.mxu0
        %v1451 = vadd.f32 0.0, %v1450
        %v1452 = vpop.f32.mrf.mxu0
        %v1453 = vpop.f32.mrf.mxu0
        %v1454 = vadd.f32 0.0, %v1453
        %v1455 = vpop.f32.mrf.mxu0
        %1456 = vmatprep.mubr.bf16.mxu0 0
        %1457 = vmatmul.mubr.bf16.gmra.mxu0 %v1380
        %v1458 = vpop.f32.mrf.mxu0
        %v1459 = vadd.f32 0.0, %v1458
        %v1460 = vpop.f32.mrf.mxu0
        %v1461 = vpop.f32.mrf.mxu0
        %v1462 = vadd.f32 0.0, %v1461
        %v1463 = vpop.f32.mrf.mxu0
        %1464 = vmatprep.mubr.bf16.mxu0 0
        %1465 = vmatmul.mubr.bf16.gmra.mxu0 %v1381
        %v1466 = vpop.f32.mrf.mxu0
        %v1467 = vadd.f32 0.0, %v1466
        %v1468 = vpop.f32.mrf.mxu0
        %v1469 = vpop.f32.mrf.mxu0
        %v1470 = vadd.f32 0.0, %v1469
        %v1471 = vpop.f32.mrf.mxu0
        %1472 = vmatprep.mubr.bf16.mxu0 0
        %1473 = vmatmul.mubr.bf16.gmra.mxu0 %v1382
        %v1474 = vpop.f32.mrf.mxu0
        %v1475 = vadd.f32 0.0, %v1474
        %v1476 = vpop.f32.mrf.mxu0
        %v1477 = vpop.f32.mrf.mxu0
        %v1478 = vadd.f32 0.0, %v1477
        %v1479 = vpop.f32.mrf.mxu0
        %1480 = vmatprep.mubr.bf16.mxu0 0
        %1481 = vmatmul.mubr.bf16.gmra.mxu0 %v1383
        %v1482 = vpop.f32.mrf.mxu0
        %v1483 = vadd.f32 0.0, %v1482
        %v1484 = vpop.f32.mrf.mxu0
        %v1485 = vpop.f32.mrf.mxu0
        %v1486 = vadd.f32 0.0, %v1485
        %v1487 = vpop.f32.mrf.mxu0
        %1488 = vdwg.mxu0
        %v1489 = vmul.f32 %v1427, 0.9
        %v1490 = vmul.f32 %v1430, 0.9
        %v1491 = vmul.f32 %v1435, 0.9
        %v1492 = vmul.f32 %v1438, 0.9
        %v1493 = vmul.f32 %v1443, 0.9
        %v1494 = vmul.f32 %v1446, 0.9
        %v1495 = vmul.f32 %v1451, 0.9
        %v1496 = vmul.f32 %v1454, 0.9
        %v1497 = vmul.f32 %v1459, 0.9
        %v1498 = vmul.f32 %v1462, 0.9
        %v1499 = vmul.f32 %v1467, 0.9
        %v1500 = vmul.f32 %v1470, 0.9
        %v1501 = vmul.f32 %v1475, 0.9
        %v1502 = vmul.f32 %v1478, 0.9
        %v1503 = vmul.f32 %v1483, 0.9
        %v1504 = vmul.f32 %v1486, 0.9
        %v1505 = vld [vmem:[#allocation2] sm:$0xff]
        %v1506 = vld [vmem:[#allocation2 + $0x10] sm:$0xff]
        %v1507 = vld [vmem:[#allocation2 + $0x20] sm:$0xff]
        %v1508 = vld [vmem:[#allocation2 + $0x30] sm:$0xff]
        %v1509 = vld [vmem:[#allocation2 + $0x40] sm:$0xff]
        %v1510 = vld [vmem:[#allocation2 + $0x50] sm:$0xff]
        %v1511 = vld [vmem:[#allocation2 + $0x60] sm:$0xff]
        %v1512 = vld [vmem:[#allocation2 + $0x70] sm:$0xff]
        %v1513 = vld [vmem:[#allocation2 + $0x80] sm:$0xff]
        %v1514 = vld [vmem:[#allocation2 + $0x90] sm:$0xff]
        %v1515 = vld [vmem:[#allocation2 + $0xa0] sm:$0xff]
        %v1516 = vld [vmem:[#allocation2 + $0xb0] sm:$0xff]
        %v1517 = vld [vmem:[#allocation2 + $0xc0] sm:$0xff]
        %v1518 = vld [vmem:[#allocation2 + $0xd0] sm:$0xff]
        %v1519 = vld [vmem:[#allocation2 + $0xe0] sm:$0xff]
        %v1520 = vld [vmem:[#allocation2 + $0xf0] sm:$0xff]
        %v1521 = vadd.f32 %v1489, %v1505
        %v1522 = vadd.f32 %v1490, %v1506
        %v1523 = vadd.f32 %v1491, %v1507
        %v1524 = vadd.f32 %v1492, %v1508
        %v1525 = vadd.f32 %v1493, %v1509
        %v1526 = vadd.f32 %v1494, %v1510
        %v1527 = vadd.f32 %v1495, %v1511
        %v1528 = vadd.f32 %v1496, %v1512
        %v1529 = vadd.f32 %v1497, %v1513
        %v1530 = vadd.f32 %v1498, %v1514
        %v1531 = vadd.f32 %v1499, %v1515
        %v1532 = vadd.f32 %v1500, %v1516
        %v1533 = vadd.f32 %v1501, %v1517
        %v1534 = vadd.f32 %v1502, %v1518
        %v1535 = vadd.f32 %v1503, %v1519
        %v1536 = vadd.f32 %v1504, %v1520
        %1537 = vst [vmem:[%s176] sm:$0xff] %v1521
        %1538 = vst [vmem:[%s176 + $0x10] sm:$0xff] %v1522
        %1539 = vst [vmem:[%s176 + $0x20] sm:$0xff] %v1523
        %1540 = vst [vmem:[%s176 + $0x30] sm:$0xff] %v1524
        %1541 = vst [vmem:[%s176 + $0x40] sm:$0xff] %v1525
        %1542 = vst [vmem:[%s176 + $0x50] sm:$0xff] %v1526
        %1543 = vst [vmem:[%s176 + $0x60] sm:$0xff] %v1527
        %1544 = vst [vmem:[%s176 + $0x70] sm:$0xff] %v1528
        %1545 = vst [vmem:[%s176 + $0x80] sm:$0xff] %v1529
        %1546 = vst [vmem:[%s176 + $0x90] sm:$0xff] %v1530
        %1547 = vst [vmem:[%s176 + $0xa0] sm:$0xff] %v1531
        %1548 = vst [vmem:[%s176 + $0xb0] sm:$0xff] %v1532
        %1549 = vst [vmem:[%s176 + $0xc0] sm:$0xff] %v1533
        %1550 = vst [vmem:[%s176 + $0xd0] sm:$0xff] %v1534
        %1551 = vst [vmem:[%s176 + $0xe0] sm:$0xff] %v1535
        %1552 = vst [vmem:[%s176 + $0xf0] sm:$0xff] %v1536
        %v1553 = vld [vmem:[%s176 + $0x8] sm:$0xff]
        %v1554 = vld [vmem:[%s176 + $0x18] sm:$0xff]
        %v1555 = vld [vmem:[%s176 + $0x28] sm:$0xff]
        %v1556 = vld [vmem:[%s176 + $0x38] sm:$0xff]
        %v1557 = vld [vmem:[%s176 + $0x48] sm:$0xff]
        %v1558 = vld [vmem:[%s176 + $0x58] sm:$0xff]
        %v1559 = vld [vmem:[%s176 + $0x68] sm:$0xff]
        %v1560 = vld [vmem:[%s176 + $0x78] sm:$0xff]
        %v1561 = vld [vmem:[%s176 + $0x88] sm:$0xff]
        %v1562 = vld [vmem:[%s176 + $0x98] sm:$0xff]
        %v1563 = vld [vmem:[%s176 + $0xa8] sm:$0xff]
        %v1564 = vld [vmem:[%s176 + $0xb8] sm:$0xff]
        %v1565 = vld [vmem:[%s176 + $0xc8] sm:$0xff]
        %v1566 = vld [vmem:[%s176 + $0xd8] sm:$0xff]
        %v1567 = vld [vmem:[%s176 + $0xe8] sm:$0xff]
        %v1568 = vld [vmem:[%s176 + $0xf8] sm:$0xff]
        %v1569 = vpack.c.bf16 %v1554, %v1553
        %v1570 = vpack.c.bf16 %v1556, %v1555
        %v1571 = vpack.c.bf16 %v1558, %v1557
        %v1572 = vpack.c.bf16 %v1560, %v1559
        %v1573 = vpack.c.bf16 %v1562, %v1561
        %v1574 = vpack.c.bf16 %v1564, %v1563
        %v1575 = vpack.c.bf16 %v1566, %v1565
        %v1576 = vpack.c.bf16 %v1568, %v1567
        %v1577 = vld [vmem:[#allocation3] sm:$0xf]
        %v1578 = vld [vmem:[#allocation3 + $0x4] sm:$0xf]
        %v1579 = vld [vmem:[#allocation3 + $0x8] sm:$0xf]
        %v1580 = vld [vmem:[#allocation3 + $0xc] sm:$0xf]
        %v1581 = vld [vmem:[#allocation3 + $0x10] sm:$0xf]
        %v1582 = vld [vmem:[#allocation3 + $0x14] sm:$0xf]
        %v1583 = vld [vmem:[#allocation3 + $0x18] sm:$0xf]
        %v1584 = vld [vmem:[#allocation3 + $0x1c] sm:$0xf]
        %v1585 = vld [vmem:[#allocation3 + $0x20] sm:$0xf]
        %v1586 = vld [vmem:[#allocation3 + $0x24] sm:$0xf]
        %v1587 = vld [vmem:[#allocation3 + $0x28] sm:$0xf]
        %v1588 = vld [vmem:[#allocation3 + $0x2c] sm:$0xf]
        %v1589 = vld [vmem:[#allocation3 + $0x30] sm:$0xf]
        %v1590 = vld [vmem:[#allocation3 + $0x34] sm:$0xf]
        %v1591 = vld [vmem:[#allocation3 + $0x38] sm:$0xf]
        %v1592 = vld [vmem:[#allocation3 + $0x3c] sm:$0xf]
        %v1609 = vunpack.c.l.b16 %v1577
        %v1610 = vunpack.c.l.b16 %v1578
        %v1611 = vunpack.c.l.b16 %v1579
        %v1612 = vunpack.c.l.b16 %v1580
        %v1613 = vunpack.c.l.b16 %v1581
        %v1614 = vunpack.c.l.b16 %v1582
        %v1615 = vunpack.c.l.b16 %v1583
        %v1616 = vunpack.c.l.b16 %v1584
        %v1617 = vunpack.c.l.b16 %v1585
        %v1618 = vunpack.c.l.b16 %v1586
        %v1619 = vunpack.c.l.b16 %v1587
        %v1620 = vunpack.c.l.b16 %v1588
        %v1621 = vunpack.c.l.b16 %v1589
        %v1622 = vunpack.c.l.b16 %v1590
        %v1623 = vunpack.c.l.b16 %v1591
        %v1624 = vunpack.c.l.b16 %v1592
        %v1625 = vpack.c.b16 %v1610, %v1609
        %v1626 = vpack.c.b16 %v1612, %v1611
        %v1627 = vpack.c.b16 %v1614, %v1613
        %v1628 = vpack.c.b16 %v1616, %v1615
        %v1629 = vpack.c.b16 %v1618, %v1617
        %v1630 = vpack.c.b16 %v1620, %v1619
        %v1631 = vpack.c.b16 %v1622, %v1621
        %v1632 = vpack.c.b16 %v1624, %v1623
        %1641 = vmatprep.subr.bf16.mxu0 0
        %1642 = vmatpush1.bf16.msra.mxu0 %v1576
        %1643 = vmatprep.subr.bf16.mxu0 0
        %1644 = vmatpush1.bf16.msra.mxu0 %v1575
        %1645 = vmatprep.subr.bf16.mxu0 0
        %1646 = vmatpush1.bf16.msra.mxu0 %v1574
        %1647 = vmatprep.subr.bf16.mxu0 0
        %1648 = vmatpush1.bf16.msra.mxu0 %v1573
        %1649 = vmatprep.subr.bf16.mxu0 0
        %1650 = vmatpush1.bf16.msra.mxu0 %v1572
        %1651 = vmatprep.subr.bf16.mxu0 0
        %1652 = vmatpush1.bf16.msra.mxu0 %v1571
        %1653 = vmatprep.subr.bf16.mxu0 0
        %1654 = vmatpush1.bf16.msra.mxu0 %v1570
        %1655 = vmatprep.subr.bf16.mxu0 0
        %1656 = vmatpush1.bf16.msra.mxu0 %v1569
        %1657 = vmatprep.subr.bf16.mxu0 0
        %1658 = vmatpush2.bf16.msra.mxu0 0
        %1659 = vmatprep.subr.bf16.mxu0 0
        %1660 = vmatpush2.bf16.msra.mxu0 0
        %1661 = vmatprep.subr.bf16.mxu0 0
        %1662 = vmatpush2.bf16.msra.mxu0 0
        %1663 = vmatprep.subr.bf16.mxu0 0
        %1664 = vmatpush2.bf16.msra.mxu0 0
        %1665 = vmatprep.subr.bf16.mxu0 0
        %1666 = vmatpush2.bf16.msra.mxu0 0
        %1667 = vmatprep.subr.bf16.mxu0 0
        %1668 = vmatpush2.bf16.msra.mxu0 0
        %1669 = vmatprep.subr.bf16.mxu0 0
        %1670 = vmatpush2.bf16.msra.mxu0 0
        %1671 = vmatprep.subr.bf16.mxu0 0
        %1672 = vmatpush2.bf16.msra.mxu0 0
        %1673 = vmatprep.mubr.bf16.mxu0 0
        %1674 = vmatmul.mubr.bf16.gmra.mxu0 %v1625
        %v1675 = vpop.f32.mrf.mxu0
        %v1676 = vadd.f32 0.0, %v1675
        %v1677 = vpop.f32.mrf.mxu0
        %v1678 = vpop.f32.mrf.mxu0
        %v1679 = vadd.f32 0.0, %v1678
        %v1680 = vpop.f32.mrf.mxu0
        %1681 = vmatprep.mubr.bf16.mxu0 0
        %1682 = vmatmul.mubr.bf16.gmra.mxu0 %v1626
        %v1683 = vpop.f32.mrf.mxu0
        %v1684 = vadd.f32 0.0, %v1683
        %v1685 = vpop.f32.mrf.mxu0
        %v1686 = vpop.f32.mrf.mxu0
        %v1687 = vadd.f32 0.0, %v1686
        %v1688 = vpop.f32.mrf.mxu0
        %1689 = vmatprep.mubr.bf16.mxu0 0
        %1690 = vmatmul.mubr.bf16.gmra.mxu0 %v1627
        %v1691 = vpop.f32.mrf.mxu0
        %v1692 = vadd.f32 0.0, %v1691
        %v1693 = vpop.f32.mrf.mxu0
        %v1694 = vpop.f32.mrf.mxu0
        %v1695 = vadd.f32 0.0, %v1694
        %v1696 = vpop.f32.mrf.mxu0
        %1697 = vmatprep.mubr.bf16.mxu0 0
        %1698 = vmatmul.mubr.bf16.gmra.mxu0 %v1628
        %v1699 = vpop.f32.mrf.mxu0
        %v1700 = vadd.f32 0.0, %v1699
        %v1701 = vpop.f32.mrf.mxu0
        %v1702 = vpop.f32.mrf.mxu0
        %v1703 = vadd.f32 0.0, %v1702
        %v1704 = vpop.f32.mrf.mxu0
        %1705 = vmatprep.mubr.bf16.mxu0 0
        %1706 = vmatmul.mubr.bf16.gmra.mxu0 %v1629
        %v1707 = vpop.f32.mrf.mxu0
        %v1708 = vadd.f32 0.0, %v1707
        %v1709 = vpop.f32.mrf.mxu0
        %v1710 = vpop.f32.mrf.mxu0
        %v1711 = vadd.f32 0.0, %v1710
        %v1712 = vpop.f32.mrf.mxu0
        %1713 = vmatprep.mubr.bf16.mxu0 0
        %1714 = vmatmul.mubr.bf16.gmra.mxu0 %v1630
        %v1715 = vpop.f32.mrf.mxu0
        %v1716 = vadd.f32 0.0, %v1715
        %v1717 = vpop.f32.mrf.mxu0
        %v1718 = vpop.f32.mrf.mxu0
        %v1719 = vadd.f32 0.0, %v1718
        %v1720 = vpop.f32.mrf.mxu0
        %1721 = vmatprep.mubr.bf16.mxu0 0
        %1722 = vmatmul.mubr.bf16.gmra.mxu0 %v1631
        %v1723 = vpop.f32.mrf.mxu0
        %v1724 = vadd.f32 0.0, %v1723
        %v1725 = vpop.f32.mrf.mxu0
        %v1726 = vpop.f32.mrf.mxu0
        %v1727 = vadd.f32 0.0, %v1726
        %v1728 = vpop.f32.mrf.mxu0
        %1729 = vmatprep.mubr.bf16.mxu0 0
        %1730 = vmatmul.mubr.bf16.gmra.mxu0 %v1632
        %v1731 = vpop.f32.mrf.mxu0
        %v1732 = vadd.f32 0.0, %v1731
        %v1733 = vpop.f32.mrf.mxu0
        %v1734 = vpop.f32.mrf.mxu0
        %v1735 = vadd.f32 0.0, %v1734
        %v1736 = vpop.f32.mrf.mxu0
        %1737 = vdwg.mxu0
        %v1738 = vmul.f32 %v1676, 0.9
        %v1739 = vmul.f32 %v1679, 0.9
        %v1740 = vmul.f32 %v1684, 0.9
        %v1741 = vmul.f32 %v1687, 0.9
        %v1742 = vmul.f32 %v1692, 0.9
        %v1743 = vmul.f32 %v1695, 0.9
        %v1744 = vmul.f32 %v1700, 0.9
        %v1745 = vmul.f32 %v1703, 0.9
        %v1746 = vmul.f32 %v1708, 0.9
        %v1747 = vmul.f32 %v1711, 0.9
        %v1748 = vmul.f32 %v1716, 0.9
        %v1749 = vmul.f32 %v1719, 0.9
        %v1750 = vmul.f32 %v1724, 0.9
        %v1751 = vmul.f32 %v1727, 0.9
        %v1752 = vmul.f32 %v1732, 0.9
        %v1753 = vmul.f32 %v1735, 0.9
        %v1754 = vld [vmem:[#allocation2 + $0x8] sm:$0xff]
        %v1755 = vld [vmem:[#allocation2 + $0x18] sm:$0xff]
        %v1756 = vld [vmem:[#allocation2 + $0x28] sm:$0xff]
        %v1757 = vld [vmem:[#allocation2 + $0x38] sm:$0xff]
        %v1758 = vld [vmem:[#allocation2 + $0x48] sm:$0xff]
        %v1759 = vld [vmem:[#allocation2 + $0x58] sm:$0xff]
        %v1760 = vld [vmem:[#allocation2 + $0x68] sm:$0xff]
        %v1761 = vld [vmem:[#allocation2 + $0x78] sm:$0xff]
        %v1762 = vld [vmem:[#allocation2 + $0x88] sm:$0xff]
        %v1763 = vld [vmem:[#allocation2 + $0x98] sm:$0xff]
        %v1764 = vld [vmem:[#allocation2 + $0xa8] sm:$0xff]
        %v1765 = vld [vmem:[#allocation2 + $0xb8] sm:$0xff]
        %v1766 = vld [vmem:[#allocation2 + $0xc8] sm:$0xff]
        %v1767 = vld [vmem:[#allocation2 + $0xd8] sm:$0xff]
        %v1768 = vld [vmem:[#allocation2 + $0xe8] sm:$0xff]
        %v1769 = vld [vmem:[#allocation2 + $0xf8] sm:$0xff]
        %v1770 = vadd.f32 %v1738, %v1754
        %v1771 = vadd.f32 %v1739, %v1755
        %v1772 = vadd.f32 %v1740, %v1756
        %v1773 = vadd.f32 %v1741, %v1757
        %v1774 = vadd.f32 %v1742, %v1758
        %v1775 = vadd.f32 %v1743, %v1759
        %v1776 = vadd.f32 %v1744, %v1760
        %v1777 = vadd.f32 %v1745, %v1761
        %v1778 = vadd.f32 %v1746, %v1762
        %v1779 = vadd.f32 %v1747, %v1763
        %v1780 = vadd.f32 %v1748, %v1764
        %v1781 = vadd.f32 %v1749, %v1765
        %v1782 = vadd.f32 %v1750, %v1766
        %v1783 = vadd.f32 %v1751, %v1767
        %v1784 = vadd.f32 %v1752, %v1768
        %v1785 = vadd.f32 %v1753, %v1769
        %1786 = vst [vmem:[%s176 + $0x8] sm:$0xff] %v1770
        %1787 = vst [vmem:[%s176 + $0x18] sm:$0xff] %v1771
        %1788 = vst [vmem:[%s176 + $0x28] sm:$0xff] %v1772
        %1789 = vst [vmem:[%s176 + $0x38] sm:$0xff] %v1773
        %1790 = vst [vmem:[%s176 + $0x48] sm:$0xff] %v1774
        %1791 = vst [vmem:[%s176 + $0x58] sm:$0xff] %v1775
        %1792 = vst [vmem:[%s176 + $0x68] sm:$0xff] %v1776
        %1793 = vst [vmem:[%s176 + $0x78] sm:$0xff] %v1777
        %1794 = vst [vmem:[%s176 + $0x88] sm:$0xff] %v1778
        %1795 = vst [vmem:[%s176 + $0x98] sm:$0xff] %v1779
        %1796 = vst [vmem:[%s176 + $0xa8] sm:$0xff] %v1780
        %1797 = vst [vmem:[%s176 + $0xb8] sm:$0xff] %v1781
        %1798 = vst [vmem:[%s176 + $0xc8] sm:$0xff] %v1782
        %1799 = vst [vmem:[%s176 + $0xd8] sm:$0xff] %v1783
        %1800 = vst [vmem:[%s176 + $0xe8] sm:$0xff] %v1784
        %1801 = vst [vmem:[%s176 + $0xf8] sm:$0xff] %v1785
        %v1802 = vld [vmem:[%s176] sm:$0xff]
        %v1803 = vld [vmem:[%s176 + $0x10] sm:$0xff]
        %v1804 = vld [vmem:[%s176 + $0x20] sm:$0xff]
        %v1805 = vld [vmem:[%s176 + $0x30] sm:$0xff]
        %v1806 = vld [vmem:[%s176 + $0x40] sm:$0xff]
        %v1807 = vld [vmem:[%s176 + $0x50] sm:$0xff]
        %v1808 = vld [vmem:[%s176 + $0x60] sm:$0xff]
        %v1809 = vld [vmem:[%s176 + $0x70] sm:$0xff]
        %v1810 = vld [vmem:[%s176 + $0x80] sm:$0xff]
        %v1811 = vld [vmem:[%s176 + $0x90] sm:$0xff]
        %v1812 = vld [vmem:[%s176 + $0xa0] sm:$0xff]
        %v1813 = vld [vmem:[%s176 + $0xb0] sm:$0xff]
        %v1814 = vld [vmem:[%s176 + $0xc0] sm:$0xff]
        %v1815 = vld [vmem:[%s176 + $0xd0] sm:$0xff]
        %v1816 = vld [vmem:[%s176 + $0xe0] sm:$0xff]
        %v1817 = vld [vmem:[%s176 + $0xf0] sm:$0xff]
        %v1818 = vpack.c.bf16 %v1803, %v1802
        %v1819 = vpack.c.bf16 %v1805, %v1804
        %v1820 = vpack.c.bf16 %v1807, %v1806
        %v1821 = vpack.c.bf16 %v1809, %v1808
        %v1822 = vpack.c.bf16 %v1811, %v1810
        %v1823 = vpack.c.bf16 %v1813, %v1812
        %v1824 = vpack.c.bf16 %v1815, %v1814
        %v1825 = vpack.c.bf16 %v1817, %v1816
        %v1826 = vld [vmem:[#allocation3] sm:$0xf]
        %v1827 = vld [vmem:[#allocation3 + $0x4] sm:$0xf]
        %v1828 = vld [vmem:[#allocation3 + $0x8] sm:$0xf]
        %v1829 = vld [vmem:[#allocation3 + $0xc] sm:$0xf]
        %v1830 = vld [vmem:[#allocation3 + $0x10] sm:$0xf]
        %v1831 = vld [vmem:[#allocation3 + $0x14] sm:$0xf]
        %v1832 = vld [vmem:[#allocation3 + $0x18] sm:$0xf]
        %v1833 = vld [vmem:[#allocation3 + $0x1c] sm:$0xf]
        %v1834 = vld [vmem:[#allocation3 + $0x20] sm:$0xf]
        %v1835 = vld [vmem:[#allocation3 + $0x24] sm:$0xf]
        %v1836 = vld [vmem:[#allocation3 + $0x28] sm:$0xf]
        %v1837 = vld [vmem:[#allocation3 + $0x2c] sm:$0xf]
        %v1838 = vld [vmem:[#allocation3 + $0x30] sm:$0xf]
        %v1839 = vld [vmem:[#allocation3 + $0x34] sm:$0xf]
        %v1840 = vld [vmem:[#allocation3 + $0x38] sm:$0xf]
        %v1841 = vld [vmem:[#allocation3 + $0x3c] sm:$0xf]
        %v1858 = vunpack.c.l.b16 %v1826
        %v1859 = vunpack.c.l.b16 %v1827
        %v1860 = vunpack.c.l.b16 %v1828
        %v1861 = vunpack.c.l.b16 %v1829
        %v1862 = vunpack.c.l.b16 %v1830
        %v1863 = vunpack.c.l.b16 %v1831
        %v1864 = vunpack.c.l.b16 %v1832
        %v1865 = vunpack.c.l.b16 %v1833
        %v1866 = vunpack.c.l.b16 %v1834
        %v1867 = vunpack.c.l.b16 %v1835
        %v1868 = vunpack.c.l.b16 %v1836
        %v1869 = vunpack.c.l.b16 %v1837
        %v1870 = vunpack.c.l.b16 %v1838
        %v1871 = vunpack.c.l.b16 %v1839
        %v1872 = vunpack.c.l.b16 %v1840
        %v1873 = vunpack.c.l.b16 %v1841
        %v1874 = vpack.c.b16 %v1859, %v1858
        %v1875 = vpack.c.b16 %v1861, %v1860
        %v1876 = vpack.c.b16 %v1863, %v1862
        %v1877 = vpack.c.b16 %v1865, %v1864
        %v1878 = vpack.c.b16 %v1867, %v1866
        %v1879 = vpack.c.b16 %v1869, %v1868
        %v1880 = vpack.c.b16 %v1871, %v1870
        %v1881 = vpack.c.b16 %v1873, %v1872
        %1890 = vmatprep.subr.bf16.mxu0 0
        %1891 = vmatpush1.bf16.msra.mxu0 %v1825
        %1892 = vmatprep.subr.bf16.mxu0 0
        %1893 = vmatpush1.bf16.msra.mxu0 %v1824
        %1894 = vmatprep.subr.bf16.mxu0 0
        %1895 = vmatpush1.bf16.msra.mxu0 %v1823
        %1896 = vmatprep.subr.bf16.mxu0 0
        %1897 = vmatpush1.bf16.msra.mxu0 %v1822
        %1898 = vmatprep.subr.bf16.mxu0 0
        %1899 = vmatpush1.bf16.msra.mxu0 %v1821
        %1900 = vmatprep.subr.bf16.mxu0 0
        %1901 = vmatpush1.bf16.msra.mxu0 %v1820
        %1902 = vmatprep.subr.bf16.mxu0 0
        %1903 = vmatpush1.bf16.msra.mxu0 %v1819
        %1904 = vmatprep.subr.bf16.mxu0 0
        %1905 = vmatpush1.bf16.msra.mxu0 %v1818
        %1906 = vmatprep.subr.bf16.mxu0 0
        %1907 = vmatpush2.bf16.msra.mxu0 0
        %1908 = vmatprep.subr.bf16.mxu0 0
        %1909 = vmatpush2.bf16.msra.mxu0 0
        %1910 = vmatprep.subr.bf16.mxu0 0
        %1911 = vmatpush2.bf16.msra.mxu0 0
        %1912 = vmatprep.subr.bf16.mxu0 0
        %1913 = vmatpush2.bf16.msra.mxu0 0
        %1914 = vmatprep.subr.bf16.mxu0 0
        %1915 = vmatpush2.bf16.msra.mxu0 0
        %1916 = vmatprep.subr.bf16.mxu0 0
        %1917 = vmatpush2.bf16.msra.mxu0 0
        %1918 = vmatprep.subr.bf16.mxu0 0
        %1919 = vmatpush2.bf16.msra.mxu0 0
        %1920 = vmatprep.subr.bf16.mxu0 0
        %1921 = vmatpush2.bf16.msra.mxu0 0
        %1922 = vmatprep.mubr.bf16.mxu0 0
        %1923 = vmatmul.mubr.bf16.gmra.mxu0 %v1874
        %v1924 = vpop.f32.mrf.mxu0
        %v1925 = vadd.f32 0.0, %v1924
        %v1926 = vpop.f32.mrf.mxu0
        %v1927 = vpop.f32.mrf.mxu0
        %v1928 = vadd.f32 0.0, %v1927
        %v1929 = vpop.f32.mrf.mxu0
        %1930 = vmatprep.mubr.bf16.mxu0 0
        %1931 = vmatmul.mubr.bf16.gmra.mxu0 %v1875
        %v1932 = vpop.f32.mrf.mxu0
        %v1933 = vadd.f32 0.0, %v1932
        %v1934 = vpop.f32.mrf.mxu0
        %v1935 = vpop.f32.mrf.mxu0
        %v1936 = vadd.f32 0.0, %v1935
        %v1937 = vpop.f32.mrf.mxu0
        %1938 = vmatprep.mubr.bf16.mxu0 0
        %1939 = vmatmul.mubr.bf16.gmra.mxu0 %v1876
        %v1940 = vpop.f32.mrf.mxu0
        %v1941 = vadd.f32 0.0, %v1940
        %v1942 = vpop.f32.mrf.mxu0
        %v1943 = vpop.f32.mrf.mxu0
        %v1944 = vadd.f32 0.0, %v1943
        %v1945 = vpop.f32.mrf.mxu0
        %1946 = vmatprep.mubr.bf16.mxu0 0
        %1947 = vmatmul.mubr.bf16.gmra.mxu0 %v1877
        %v1948 = vpop.f32.mrf.mxu0
        %v1949 = vadd.f32 0.0, %v1948
        %v1950 = vpop.f32.mrf.mxu0
        %v1951 = vpop.f32.mrf.mxu0
        %v1952 = vadd.f32 0.0, %v1951
        %v1953 = vpop.f32.mrf.mxu0
        %1954 = vmatprep.mubr.bf16.mxu0 0
        %1955 = vmatmul.mubr.bf16.gmra.mxu0 %v1878
        %v1956 = vpop.f32.mrf.mxu0
        %v1957 = vadd.f32 0.0, %v1956
        %v1958 = vpop.f32.mrf.mxu0
        %v1959 = vpop.f32.mrf.mxu0
        %v1960 = vadd.f32 0.0, %v1959
        %v1961 = vpop.f32.mrf.mxu0
        %1962 = vmatprep.mubr.bf16.mxu0 0
        %1963 = vmatmul.mubr.bf16.gmra.mxu0 %v1879
        %v1964 = vpop.f32.mrf.mxu0
        %v1965 = vadd.f32 0.0, %v1964
        %v1966 = vpop.f32.mrf.mxu0
        %v1967 = vpop.f32.mrf.mxu0
        %v1968 = vadd.f32 0.0, %v1967
        %v1969 = vpop.f32.mrf.mxu0
        %1970 = vmatprep.mubr.bf16.mxu0 0
        %1971 = vmatmul.mubr.bf16.gmra.mxu0 %v1880
        %v1972 = vpop.f32.mrf.mxu0
        %v1973 = vadd.f32 0.0, %v1972
        %v1974 = vpop.f32.mrf.mxu0
        %v1975 = vpop.f32.mrf.mxu0
        %v1976 = vadd.f32 0.0, %v1975
        %v1977 = vpop.f32.mrf.mxu0
        %1978 = vmatprep.mubr.bf16.mxu0 0
        %1979 = vmatmul.mubr.bf16.gmra.mxu0 %v1881
        %v1980 = vpop.f32.mrf.mxu0
        %v1981 = vadd.f32 0.0, %v1980
        %v1982 = vpop.f32.mrf.mxu0
        %v1983 = vpop.f32.mrf.mxu0
        %v1984 = vadd.f32 0.0, %v1983
        %v1985 = vpop.f32.mrf.mxu0
        %1986 = vdwg.mxu0
        %v1987 = vmul.f32 %v1925, 0.9
        %v1988 = vmul.f32 %v1928, 0.9
        %v1989 = vmul.f32 %v1933, 0.9
        %v1990 = vmul.f32 %v1936, 0.9
        %v1991 = vmul.f32 %v1941, 0.9
        %v1992 = vmul.f32 %v1944, 0.9
        %v1993 = vmul.f32 %v1949, 0.9
        %v1994 = vmul.f32 %v1952, 0.9
        %v1995 = vmul.f32 %v1957, 0.9
        %v1996 = vmul.f32 %v1960, 0.9
        %v1997 = vmul.f32 %v1965, 0.9
        %v1998 = vmul.f32 %v1968, 0.9
        %v1999 = vmul.f32 %v1973, 0.9
        %v2000 = vmul.f32 %v1976, 0.9
        %v2001 = vmul.f32 %v1981, 0.9
        %v2002 = vmul.f32 %v1984, 0.9
        %v2003 = vld [vmem:[#allocation2] sm:$0xff]
        %v2004 = vld [vmem:[#allocation2 + $0x10] sm:$0xff]
        %v2005 = vld [vmem:[#allocation2 + $0x20] sm:$0xff]
        %v2006 = vld [vmem:[#allocation2 + $0x30] sm:$0xff]
        %v2007 = vld [vmem:[#allocation2 + $0x40] sm:$0xff]
        %v2008 = vld [vmem:[#allocation2 + $0x50] sm:$0xff]
        %v2009 = vld [vmem:[#allocation2 + $0x60] sm:$0xff]
        %v2010 = vld [vmem:[#allocation2 + $0x70] sm:$0xff]
        %v2011 = vld [vmem:[#allocation2 + $0x80] sm:$0xff]
        %v2012 = vld [vmem:[#allocation2 + $0x90] sm:$0xff]
        %v2013 = vld [vmem:[#allocation2 + $0xa0] sm:$0xff]
        %v2014 = vld [vmem:[#allocation2 + $0xb0] sm:$0xff]
        %v2015 = vld [vmem:[#allocation2 + $0xc0] sm:$0xff]
        %v2016 = vld [vmem:[#allocation2 + $0xd0] sm:$0xff]
        %v2017 = vld [vmem:[#allocation2 + $0xe0] sm:$0xff]
        %v2018 = vld [vmem:[#allocation2 + $0xf0] sm:$0xff]
        %v2019 = vadd.f32 %v1987, %v2003
        %v2020 = vadd.f32 %v1988, %v2004
        %v2021 = vadd.f32 %v1989, %v2005
        %v2022 = vadd.f32 %v1990, %v2006
        %v2023 = vadd.f32 %v1991, %v2007
        %v2024 = vadd.f32 %v1992, %v2008
        %v2025 = vadd.f32 %v1993, %v2009
        %v2026 = vadd.f32 %v1994, %v2010
        %v2027 = vadd.f32 %v1995, %v2011
        %v2028 = vadd.f32 %v1996, %v2012
        %v2029 = vadd.f32 %v1997, %v2013
        %v2030 = vadd.f32 %v1998, %v2014
        %v2031 = vadd.f32 %v1999, %v2015
        %v2032 = vadd.f32 %v2000, %v2016
        %v2033 = vadd.f32 %v2001, %v2017
        %v2034 = vadd.f32 %v2002, %v2018
        %2035 = vst [vmem:[%s176] sm:$0xff] %v2019
        %2036 = vst [vmem:[%s176 + $0x10] sm:$0xff] %v2020
        %2037 = vst [vmem:[%s176 + $0x20] sm:$0xff] %v2021
        %2038 = vst [vmem:[%s176 + $0x30] sm:$0xff] %v2022
        %2039 = vst [vmem:[%s176 + $0x40] sm:$0xff] %v2023
        %2040 = vst [vmem:[%s176 + $0x50] sm:$0xff] %v2024
        %2041 = vst [vmem:[%s176 + $0x60] sm:$0xff] %v2025
        %2042 = vst [vmem:[%s176 + $0x70] sm:$0xff] %v2026
        %2043 = vst [vmem:[%s176 + $0x80] sm:$0xff] %v2027
        %2044 = vst [vmem:[%s176 + $0x90] sm:$0xff] %v2028
        %2045 = vst [vmem:[%s176 + $0xa0] sm:$0xff] %v2029
        %2046 = vst [vmem:[%s176 + $0xb0] sm:$0xff] %v2030
        %2047 = vst [vmem:[%s176 + $0xc0] sm:$0xff] %v2031
        %2048 = vst [vmem:[%s176 + $0xd0] sm:$0xff] %v2032
        %2049 = vst [vmem:[%s176 + $0xe0] sm:$0xff] %v2033
        %2050 = vst [vmem:[%s176 + $0xf0] sm:$0xff] %v2034
        %v2051 = vld [vmem:[%s176 + $0x8] sm:$0xff]
        %v2052 = vld [vmem:[%s176 + $0x18] sm:$0xff]
        %v2053 = vld [vmem:[%s176 + $0x28] sm:$0xff]
        %v2054 = vld [vmem:[%s176 + $0x38] sm:$0xff]
        %v2055 = vld [vmem:[%s176 + $0x48] sm:$0xff]
        %v2056 = vld [vmem:[%s176 + $0x58] sm:$0xff]
        %v2057 = vld [vmem:[%s176 + $0x68] sm:$0xff]
        %v2058 = vld [vmem:[%s176 + $0x78] sm:$0xff]
        %v2059 = vld [vmem:[%s176 + $0x88] sm:$0xff]
        %v2060 = vld [vmem:[%s176 + $0x98] sm:$0xff]
        %v2061 = vld [vmem:[%s176 + $0xa8] sm:$0xff]
        %v2062 = vld [vmem:[%s176 + $0xb8] sm:$0xff]
        %v2063 = vld [vmem:[%s176 + $0xc8] sm:$0xff]
        %v2064 = vld [vmem:[%s176 + $0xd8] sm:$0xff]
        %v2065 = vld [vmem:[%s176 + $0xe8] sm:$0xff]
        %v2066 = vld [vmem:[%s176 + $0xf8] sm:$0xff]
        %v2067 = vpack.c.bf16 %v2052, %v2051
        %v2068 = vpack.c.bf16 %v2054, %v2053
        %v2069 = vpack.c.bf16 %v2056, %v2055
        %v2070 = vpack.c.bf16 %v2058, %v2057
        %v2071 = vpack.c.bf16 %v2060, %v2059
        %v2072 = vpack.c.bf16 %v2062, %v2061
        %v2073 = vpack.c.bf16 %v2064, %v2063
        %v2074 = vpack.c.bf16 %v2066, %v2065
        %v2075 = vld [vmem:[#allocation3] sm:$0xf]
        %v2076 = vld [vmem:[#allocation3 + $0x4] sm:$0xf]
        %v2077 = vld [vmem:[#allocation3 + $0x8] sm:$0xf]
        %v2078 = vld [vmem:[#allocation3 + $0xc] sm:$0xf]
        %v2079 = vld [vmem:[#allocation3 + $0x10] sm:$0xf]
        %v2080 = vld [vmem:[#allocation3 + $0x14] sm:$0xf]
        %v2081 = vld [vmem:[#allocation3 + $0x18] sm:$0xf]
        %v2082 = vld [vmem:[#allocation3 + $0x1c] sm:$0xf]
        %v2083 = vld [vmem:[#allocation3 + $0x20] sm:$0xf]
        %v2084 = vld [vmem:[#allocation3 + $0x24] sm:$0xf]
        %v2085 = vld [vmem:[#allocation3 + $0x28] sm:$0xf]
        %v2086 = vld [vmem:[#allocation3 + $0x2c] sm:$0xf]
        %v2087 = vld [vmem:[#allocation3 + $0x30] sm:$0xf]
        %v2088 = vld [vmem:[#allocation3 + $0x34] sm:$0xf]
        %v2089 = vld [vmem:[#allocation3 + $0x38] sm:$0xf]
        %v2090 = vld [vmem:[#allocation3 + $0x3c] sm:$0xf]
        %v2107 = vunpack.c.l.b16 %v2075
        %v2108 = vunpack.c.l.b16 %v2076
        %v2109 = vunpack.c.l.b16 %v2077
        %v2110 = vunpack.c.l.b16 %v2078
        %v2111 = vunpack.c.l.b16 %v2079
        %v2112 = vunpack.c.l.b16 %v2080
        %v2113 = vunpack.c.l.b16 %v2081
        %v2114 = vunpack.c.l.b16 %v2082
        %v2115 = vunpack.c.l.b16 %v2083
        %v2116 = vunpack.c.l.b16 %v2084
        %v2117 = vunpack.c.l.b16 %v2085
        %v2118 = vunpack.c.l.b16 %v2086
        %v2119 = vunpack.c.l.b16 %v2087
        %v2120 = vunpack.c.l.b16 %v2088
        %v2121 = vunpack.c.l.b16 %v2089
        %v2122 = vunpack.c.l.b16 %v2090
        %v2123 = vpack.c.b16 %v2108, %v2107
        %v2124 = vpack.c.b16 %v2110, %v2109
        %v2125 = vpack.c.b16 %v2112, %v2111
        %v2126 = vpack.c.b16 %v2114, %v2113
        %v2127 = vpack.c.b16 %v2116, %v2115
        %v2128 = vpack.c.b16 %v2118, %v2117
        %v2129 = vpack.c.b16 %v2120, %v2119
        %v2130 = vpack.c.b16 %v2122, %v2121
        %2139 = vmatprep.subr.bf16.mxu0 0
        %2140 = vmatpush1.bf16.msra.mxu0 %v2074
        %2141 = vmatprep.subr.bf16.mxu0 0
        %2142 = vmatpush1.bf16.msra.mxu0 %v2073
        %2143 = vmatprep.subr.bf16.mxu0 0
        %2144 = vmatpush1.bf16.msra.mxu0 %v2072
        %2145 = vmatprep.subr.bf16.mxu0 0
        %2146 = vmatpush1.bf16.msra.mxu0 %v2071
        %2147 = vmatprep.subr.bf16.mxu0 0
        %2148 = vmatpush1.bf16.msra.mxu0 %v2070
        %2149 = vmatprep.subr.bf16.mxu0 0
        %2150 = vmatpush1.bf16.msra.mxu0 %v2069
        %2151 = vmatprep.subr.bf16.mxu0 0
        %2152 = vmatpush1.bf16.msra.mxu0 %v2068
        %2153 = vmatprep.subr.bf16.mxu0 0
        %2154 = vmatpush1.bf16.msra.mxu0 %v2067
        %2155 = vmatprep.subr.bf16.mxu0 0
        %2156 = vmatpush2.bf16.msra.mxu0 0
        %2157 = vmatprep.subr.bf16.mxu0 0
        %2158 = vmatpush2.bf16.msra.mxu0 0
        %2159 = vmatprep.subr.bf16.mxu0 0
        %2160 = vmatpush2.bf16.msra.mxu0 0
        %2161 = vmatprep.subr.bf16.mxu0 0
        %2162 = vmatpush2.bf16.msra.mxu0 0
        %2163 = vmatprep.subr.bf16.mxu0 0
        %2164 = vmatpush2.bf16.msra.mxu0 0
        %2165 = vmatprep.subr.bf16.mxu0 0
        %2166 = vmatpush2.bf16.msra.mxu0 0
        %2167 = vmatprep.subr.bf16.mxu0 0
        %2168 = vmatpush2.bf16.msra.mxu0 0
        %2169 = vmatprep.subr.bf16.mxu0 0
        %2170 = vmatpush2.bf16.msra.mxu0 0
        %2171 = vmatprep.mubr.bf16.mxu0 0
        %2172 = vmatmul.mubr.bf16.gmra.mxu0 %v2123
        %v2173 = vpop.f32.mrf.mxu0
        %v2174 = vadd.f32 0.0, %v2173
        %v2175 = vpop.f32.mrf.mxu0
        %v2176 = vpop.f32.mrf.mxu0
        %v2177 = vadd.f32 0.0, %v2176
        %v2178 = vpop.f32.mrf.mxu0
        %2179 = vmatprep.mubr.bf16.mxu0 0
        %2180 = vmatmul.mubr.bf16.gmra.mxu0 %v2124
        %v2181 = vpop.f32.mrf.mxu0
        %v2182 = vadd.f32 0.0, %v2181
        %v2183 = vpop.f32.mrf.mxu0
        %v2184 = vpop.f32.mrf.mxu0
        %v2185 = vadd.f32 0.0, %v2184
        %v2186 = vpop.f32.mrf.mxu0
        %2187 = vmatprep.mubr.bf16.mxu0 0
        %2188 = vmatmul.mubr.bf16.gmra.mxu0 %v2125
        %v2189 = vpop.f32.mrf.mxu0
        %v2190 = vadd.f32 0.0, %v2189
        %v2191 = vpop.f32.mrf.mxu0
        %v2192 = vpop.f32.mrf.mxu0
        %v2193 = vadd.f32 0.0, %v2192
        %v2194 = vpop.f32.mrf.mxu0
        %2195 = vmatprep.mubr.bf16.mxu0 0
        %2196 = vmatmul.mubr.bf16.gmra.mxu0 %v2126
        %v2197 = vpop.f32.mrf.mxu0
        %v2198 = vadd.f32 0.0, %v2197
        %v2199 = vpop.f32.mrf.mxu0
        %v2200 = vpop.f32.mrf.mxu0
        %v2201 = vadd.f32 0.0, %v2200
        %v2202 = vpop.f32.mrf.mxu0
        %2203 = vmatprep.mubr.bf16.mxu0 0
        %2204 = vmatmul.mubr.bf16.gmra.mxu0 %v2127
        %v2205 = vpop.f32.mrf.mxu0
        %v2206 = vadd.f32 0.0, %v2205
        %v2207 = vpop.f32.mrf.mxu0
        %v2208 = vpop.f32.mrf.mxu0
        %v2209 = vadd.f32 0.0, %v2208
        %v2210 = vpop.f32.mrf.mxu0
        %2211 = vmatprep.mubr.bf16.mxu0 0
        %2212 = vmatmul.mubr.bf16.gmra.mxu0 %v2128
        %v2213 = vpop.f32.mrf.mxu0
        %v2214 = vadd.f32 0.0, %v2213
        %v2215 = vpop.f32.mrf.mxu0
        %v2216 = vpop.f32.mrf.mxu0
        %v2217 = vadd.f32 0.0, %v2216
        %v2218 = vpop.f32.mrf.mxu0
        %2219 = vmatprep.mubr.bf16.mxu0 0
        %2220 = vmatmul.mubr.bf16.gmra.mxu0 %v2129
        %v2221 = vpop.f32.mrf.mxu0
        %v2222 = vadd.f32 0.0, %v2221
        %v2223 = vpop.f32.mrf.mxu0
        %v2224 = vpop.f32.mrf.mxu0
        %v2225 = vadd.f32 0.0, %v2224
        %v2226 = vpop.f32.mrf.mxu0
        %2227 = vmatprep.mubr.bf16.mxu0 0
        %2228 = vmatmul.mubr.bf16.gmra.mxu0 %v2130
        %v2229 = vpop.f32.mrf.mxu0
        %v2230 = vadd.f32 0.0, %v2229
        %v2231 = vpop.f32.mrf.mxu0
        %v2232 = vpop.f32.mrf.mxu0
        %v2233 = vadd.f32 0.0, %v2232
        %v2234 = vpop.f32.mrf.mxu0
        %2235 = vdwg.mxu0
        %v2236 = vmul.f32 %v2174, 0.9
        %v2237 = vmul.f32 %v2177, 0.9
        %v2238 = vmul.f32 %v2182, 0.9
        %v2239 = vmul.f32 %v2185, 0.9
        %v2240 = vmul.f32 %v2190, 0.9
        %v2241 = vmul.f32 %v2193, 0.9
        %v2242 = vmul.f32 %v2198, 0.9
        %v2243 = vmul.f32 %v2201, 0.9
        %v2244 = vmul.f32 %v2206, 0.9
        %v2245 = vmul.f32 %v2209, 0.9
        %v2246 = vmul.f32 %v2214, 0.9
        %v2247 = vmul.f32 %v2217, 0.9
        %v2248 = vmul.f32 %v2222, 0.9
        %v2249 = vmul.f32 %v2225, 0.9
        %v2250 = vmul.f32 %v2230, 0.9
        %v2251 = vmul.f32 %v2233, 0.9
        %v2252 = vld [vmem:[#allocation2 + $0x8] sm:$0xff]
        %v2253 = vld [vmem:[#allocation2 + $0x18] sm:$0xff]
        %v2254 = vld [vmem:[#allocation2 + $0x28] sm:$0xff]
        %v2255 = vld [vmem:[#allocation2 + $0x38] sm:$0xff]
        %v2256 = vld [vmem:[#allocation2 + $0x48] sm:$0xff]
        %v2257 = vld [vmem:[#allocation2 + $0x58] sm:$0xff]
        %v2258 = vld [vmem:[#allocation2 + $0x68] sm:$0xff]
        %v2259 = vld [vmem:[#allocation2 + $0x78] sm:$0xff]
        %v2260 = vld [vmem:[#allocation2 + $0x88] sm:$0xff]
        %v2261 = vld [vmem:[#allocation2 + $0x98] sm:$0xff]
        %v2262 = vld [vmem:[#allocation2 + $0xa8] sm:$0xff]
        %v2263 = vld [vmem:[#allocation2 + $0xb8] sm:$0xff]
        %v2264 = vld [vmem:[#allocation2 + $0xc8] sm:$0xff]
        %v2265 = vld [vmem:[#allocation2 + $0xd8] sm:$0xff]
        %v2266 = vld [vmem:[#allocation2 + $0xe8] sm:$0xff]
        %v2267 = vld [vmem:[#allocation2 + $0xf8] sm:$0xff]
        %v2268 = vadd.f32 %v2236, %v2252
        %v2269 = vadd.f32 %v2237, %v2253
        %v2270 = vadd.f32 %v2238, %v2254
        %v2271 = vadd.f32 %v2239, %v2255
        %v2272 = vadd.f32 %v2240, %v2256
        %v2273 = vadd.f32 %v2241, %v2257
        %v2274 = vadd.f32 %v2242, %v2258
        %v2275 = vadd.f32 %v2243, %v2259
        %v2276 = vadd.f32 %v2244, %v2260
        %v2277 = vadd.f32 %v2245, %v2261
        %v2278 = vadd.f32 %v2246, %v2262
        %v2279 = vadd.f32 %v2247, %v2263
        %v2280 = vadd.f32 %v2248, %v2264
        %v2281 = vadd.f32 %v2249, %v2265
        %v2282 = vadd.f32 %v2250, %v2266
        %v2283 = vadd.f32 %v2251, %v2267
        %2284 = vst [vmem:[%s176 + $0x8] sm:$0xff] %v2268
        %2285 = vst [vmem:[%s176 + $0x18] sm:$0xff] %v2269
        %2286 = vst [vmem:[%s176 + $0x28] sm:$0xff] %v2270
        %2287 = vst [vmem:[%s176 + $0x38] sm:$0xff] %v2271
        %2288 = vst [vmem:[%s176 + $0x48] sm:$0xff] %v2272
        %2289 = vst [vmem:[%s176 + $0x58] sm:$0xff] %v2273
        %2290 = vst [vmem:[%s176 + $0x68] sm:$0xff] %v2274
        %2291 = vst [vmem:[%s176 + $0x78] sm:$0xff] %v2275
        %2292 = vst [vmem:[%s176 + $0x88] sm:$0xff] %v2276
        %2293 = vst [vmem:[%s176 + $0x98] sm:$0xff] %v2277
        %2294 = vst [vmem:[%s176 + $0xa8] sm:$0xff] %v2278
        %2295 = vst [vmem:[%s176 + $0xb8] sm:$0xff] %v2279
        %2296 = vst [vmem:[%s176 + $0xc8] sm:$0xff] %v2280
        %2297 = vst [vmem:[%s176 + $0xd8] sm:$0xff] %v2281
        %2298 = vst [vmem:[%s176 + $0xe8] sm:$0xff] %v2282
        %2299 = vst [vmem:[%s176 + $0xf8] sm:$0xff] %v2283
        %s2300 = sand.u32 %s75, 1
        %s2301 = scalar_lea.sflag [#allocation5], %s2300
        %s2302 = sand.u32 %s75, 1
        %s2303 = smul.addr %s2302, 256
        %s2304 = scalar_lea.vmem [#allocation8], %s2303
        // Predicated region
        $region37: #{tpu_custom_call.1} parent=27 // pred_check
          %p2305 = pneg %p85
        $region38: #{tpu_custom_call.1} parent=27 // pred_check_branch
          %2307 = sbr.rel (%p2305) target = $region40
        $region39: #{tpu_custom_call.1} parent=27 // pred_region
          %s2308 = smul.u32 2, %s20
          %s2310 = ssub.s32 4096, 4096
          %2311 = vsyncadd %s2301, %s2310
          %s2312 = smul.addr %s2308, 128
          %s2313 = scalar_lea.hbm %s2, %s2312
          %s2314 = sshll.u32 %s2304, 4
          %s2315 = int_to_ptr.vmem [resolvable:$true] %s2314
          %2320 = dma.vmem_to_hbm [thread:$0]  %s2315, 4096, %s2313, %s2301, 256, 512, 16
        $region40: #{tpu_custom_call.1} parent=27 // pred_fallthru
          _
      $region28: #{tpu_custom_call.1} parent=5 // pred_fallthru
        _
      %p2321 = scmp.le.s32.totalorder 2, %s15
      // Predicated region
      $region41: #{tpu_custom_call.1} parent=5 // pred_check
        %p2322 = pneg %p2321
      $region42: #{tpu_custom_call.1} parent=5 // pred_check_branch
        %2324 = sbr.rel (%p2322) target = $region44
      $region43: #{tpu_custom_call.1} parent=5 // pred_region
        %s2325 = ssub.s32 %s15, 2
        // Predicated region
        $region45: #{tpu_custom_call.1} parent=43 // pred_check
          %p2326 = pneg %p91
        $region46: #{tpu_custom_call.1} parent=43 // pred_check_branch
          %2328 = sbr.rel (%p2326) target = $region48
        $region47: #{tpu_custom_call.1} parent=43 // pred_region
          %s2329 = sand.u32 %s76, 1
          %s2330 = scalar_lea.sflag [#allocation5], %s2329
          %s2331 = sand.u32 %s76, 1
          %s2332 = smul.addr %s2331, 256
          %s2333 = scalar_lea.vmem [#allocation8], %s2332
          %2334 = dma.done %s2330, 4096
        $region48: #{tpu_custom_call.1} parent=43 // pred_fallthru
          _
      $region44: #{tpu_custom_call.1} parent=5 // pred_fallthru
        _
    $region6: #{tpu_custom_call.1} parent=1 // loop_footer
      %s19 = sadd.s32 1, %s15
    $region7: #{tpu_custom_call.1} parent=1 // loop_footer_branch
      %14 = sbr.rel target = $region3
    $region8: #{tpu_custom_call.1} parent=1 // loop_exit
      _
    %2335 = vsyncpa [#allocation4], 1
    %s2336 = scalar_lea.sflag [#allocation4], 1
    %2337 = vsyncpa %s2336, 1
    %2338 = vsyncpa [#allocation7], 1
    %s2339 = scalar_lea.sflag [#allocation7], 1
    %2340 = vsyncpa %s2339, 1
    %2341 = vsyncpa [#allocation5], 1
    %s2342 = scalar_lea.sflag [#allocation5], 1
    %2343 = vsyncpa %s2342, 1

// kernel: tpu_custom_call.1
$region0: #{tpu_custom_call.1}
  #allocation0 [shape = 'u32[]', space=smem, size = 0x4, offset = 0x4, fixed_abs, tag = 'smem constant byte address 0x4 - core index']
  #allocation1 [shape = 'u32[144,128]{1,0:T(1,128)}', space=vmem, size = 0x12000, scoped, tag = 'internal scratch']
  #allocation2 [shape = 'f32[128,256]{1,0:T(8,128)}', space=vmem, size = 0x20000, scoped, tag = 'scratch operand']
  %s0 = inlined_call_operand.hbm [shape: bf16[128,128], index: 0, kind: input, shape index: {}]
  %s1 = inlined_call_operand.hbm [shape: f32[128,512], index: 1, kind: input, shape index: {}]
  %s2 = inlined_call_operand.hbm [shape: f32[128,512], index: 2, kind: output, shape index: {}]
  %s3 = sld [smem:[#allocation0]]
  $region49: #{tpu_custom_call.1} parent=0
    _
  %s5 = ssub.s32 1, %s3
  %s6 = scalar_select 0, %s5, %s3
  $region1: #{tpu_custom_call.1} parent=0
    #allocation3 [shape = 'u8[32768]{0}', space=vmem, size = 0x8000, scoped, tag = 'input window, operand 0, single buffered']
    #allocation4 [shape = 's32[2]{0}', space=sflag, size = 0x8, scoped, tag = 'scoped memory for tpu_custom_call.1']
    #allocation5 [shape = 's32[2]{0}', space=sflag, size = 0x8, scoped, tag = 'scoped memory for tpu_custom_call.1']
    #allocation6 [shape = 'u8[262144]{0}', space=vmem, size = 0x40000, scoped, tag = 'input window, operand 1']
    #allocation7 [shape = 's32[2]{0}', space=sflag, size = 0x8, scoped, tag = 'scoped memory for tpu_custom_call.1']
    #allocation8 [shape = 'u8[262144]{0}', space=vmem, size = 0x40000, scoped, tag = 'output window, operand 0']
    %7 = vsyncpa [#allocation4], 0
    %8 = vsyncpa [#allocation7], 0
    %s9 = scalar_lea.sflag [#allocation7], 1
    %10 = vsyncpa %s9, 0
    %11 = vsyncpa [#allocation5], 0
    %s12 = scalar_lea.sflag [#allocation5], 1
    %13 = vsyncpa %s12, 0
    loop: start=0, step=1, limit=4
    $region2: #{tpu_custom_call.1} parent=1 // loop_pre_header
      _
    $region3: #{tpu_custom_call.1} parent=1 // loop_header
      %s15 = sphi 0, %s19
      %p16 = scmp.ge.s32.totalorder %s15, 4
      %s23 = sphi 0, %s23
      %s25 = sphi 0, %s23
      %s26 = sphi 0, %s25
      %s40 = sphi 0, %s26
      %s46 = sphi 0, %s48
      %s49 = sphi 0, %s46
      %s50 = sphi 0, %s49
      %s66 = sphi 0, %s50
      %s72 = sphi 0, %s74
      %s75 = sphi 0, %s72
      %s76 = sphi 0, %s75
      %s92 = sphi 0, %s76
    $region4: #{tpu_custom_call.1} parent=1 // loop_header_branch
      %18 = sbr.rel (%p16) target = $region8
    $region5: #{tpu_custom_call.1} parent=1 // loop_body
      %s20 = ssub.s32 %s15, 1
      %s21 = ssub.s32 %s15, 2
      %s22 = sadd.s32 %s15, 1
      %s24 = sadd.s32 %s23, 1
      %p27 = scmp.eq.s32.totalorder %s15, 1
      %p28 = scmp.ne.s32.totalorder %s23, %s25
      %p29 = scmp.eq.s32.totalorder %s15, 0
      %p30 = por %p28, %p29
      %p31 = scmp.ne.s32.totalorder %s23, %s25
      %p32 = scmp.eq.s32.totalorder %s20, 1
      %p33 = por %p31, %p32
      %p34 = scmp.ne.s32.totalorder %s25, %s26
      %p35 = scmp.eq.s32.totalorder %s20, 0
      %p36 = por %p34, %p35
      %p37 = scmp.ne.s32.totalorder %s25, %s26
      %p38 = scmp.eq.s32.totalorder %s21, 1
      %p39 = por %p37, %p38
      %p41 = scmp.ne.s32.totalorder %s26, %s40
      %p42 = scmp.eq.s32.totalorder %s21, 0
      %p43 = por %p41, %p42
      %s44 = ssub.s32 %s15, %s22
      %p45 = scmp.eq.s32.totalorder %s44, 0
      %s47 = sadd.s32 %s46, 1
      %s48 = scalar_select %p45, %s46, %s47
      %p51 = pneg %p45
      %p52 = scmp.eq.s32.totalorder %s15, 1
      %p53 = por %p51, %p52
      %p54 = scmp.ne.s32.totalorder %s46, %s49
      %p55 = scmp.eq.s32.totalorder %s15, 0
      %p56 = por %p54, %p55
      %p57 = scmp.ne.s32.totalorder %s46, %s49
      %p58 = scmp.eq.s32.totalorder %s20, 1
      %p59 = por %p57, %p58
      %p60 = scmp.ne.s32.totalorder %s49, %s50
      %p61 = scmp.eq.s32.totalorder %s20, 0
      %p62 = por %p60, %p61
      %p63 = scmp.ne.s32.totalorder %s49, %s50
      %p64 = scmp.eq.s32.totalorder %s21, 1
      %p65 = por %p63, %p64
      %p67 = scmp.ne.s32.totalorder %s50, %s66
      %p68 = scmp.eq.s32.totalorder %s21, 0
      %p69 = por %p67, %p68
      %s70 = ssub.s32 %s15, %s22
      %p71 = scmp.eq.s32.totalorder %s70, 0
      %s73 = sadd.s32 %s72, 1
      %s74 = scalar_select %p71, %s72, %s73
      %p77 = pneg %p71
      %p78 = scmp.eq.s32.totalorder %s15, 1
      %p79 = por %p77, %p78
      %p80 = scmp.ne.s32.totalorder %s72, %s75
      %p81 = scmp.eq.s32.totalorder %s15, 0
      %p82 = por %p80, %p81
      %p83 = scmp.ne.s32.totalorder %s72, %s75
      %p84 = scmp.eq.s32.totalorder %s20, 1
      %p85 = por %p83, %p84
      %p86 = scmp.ne.s32.totalorder %s75, %s76
      %p87 = scmp.eq.s32.totalorder %s20, 0
      %p88 = por %p86, %p87
      %p89 = scmp.ne.s32.totalorder %s75, %s76
      %p90 = scmp.eq.s32.totalorder %s21, 1
      %p91 = por %p89, %p90
      %p93 = scmp.ne.s32.totalorder %s76, %s92
      %p94 = scmp.eq.s32.totalorder %s21, 0
      %p95 = por %p93, %p94
      %p96 = scmp.le.s32.totalorder 1, %s15
      %p97 = scmp.lt.s32.totalorder %s15, 3
      %p98 = pnand %p96, %p97
      %p99 = pneg %p98
      // Predicated region
      $region9: #{tpu_custom_call.1} parent=5 // pred_check
        _
      $region10: #{tpu_custom_call.1} parent=5 // pred_check_branch
        %101 = sbr.rel (%p98) target = $region12
      $region11: #{tpu_custom_call.1} parent=5 // pred_region
        %s102 = ssub.s32 %s15, 1
        // Predicated region
        $region13: #{tpu_custom_call.1} parent=11 // pred_check
          %p103 = pneg %p36
        $region14: #{tpu_custom_call.1} parent=11 // pred_check_branch
          %105 = sbr.rel (%p103) target = $region16
        $region15: #{tpu_custom_call.1} parent=11 // pred_region
          %s107 = ssub.s32 1024, 1024
          %108 = vsyncadd [#allocation4], %s107
          %s109 = sshll.u32 [#allocation3], 4
          %s110 = int_to_ptr.vmem [resolvable:$true] %s109
          %115 = dma.hbm_to_vmem [thread:$0]  %s0, 1024, %s110, [#allocation4], 64, 64, 4
        $region16: #{tpu_custom_call.1} parent=11 // pred_fallthru
          _
      $region12: #{tpu_custom_call.1} parent=5 // pred_fallthru
        _
      %p116 = scmp.lt.s32.totalorder %s15, 2
      // Predicated region
      $region17: #{tpu_custom_call.1} parent=5 // pred_check
        %p117 = pneg %p116
      $region18: #{tpu_custom_call.1} parent=5 // pred_check_branch
        %119 = sbr.rel (%p117) target = $region20
      $region19: #{tpu_custom_call.1} parent=5 // pred_region
        // Predicated region
        $region21: #{tpu_custom_call.1} parent=19 // pred_check
          %p120 = pneg %p56
        $region22: #{tpu_custom_call.1} parent=19 // pred_check_branch
          %122 = sbr.rel (%p120) target = $region24
        $region23: #{tpu_custom_call.1} parent=19 // pred_region
          %s123 = sand.u32 %s46, 1
          %s124 = scalar_lea.sflag [#allocation7], %s123
          %s125 = sand.u32 %s46, 1
          %s126 = smul.addr %s125, 256
          %s127 = scalar_lea.vmem [#allocation6], %s126
          %s128 = smul.u32 2, %s15
          %s130 = ssub.s32 4096, 4096
          %131 = vsyncadd %s124, %s130
          %s132 = smul.addr %s128, 128
          %s133 = scalar_lea.hbm %s1, %s132
          %s134 = sshll.u32 %s127, 4
          %s135 = int_to_ptr.vmem [resolvable:$true] %s134
          %140 = dma.hbm_to_vmem [thread:$0]  %s133, 4096, %s135, %s124, 512, 256, 16
        $region24: #{tpu_custom_call.1} parent=19 // pred_fallthru
          _
      $region20: #{tpu_custom_call.1} parent=5 // pred_fallthru
        _
      %p141 = scmp.le.s32.totalorder 1, %s15
      %p142 = scmp.lt.s32.totalorder %s15, 3
      %p143 = pnand %p141, %p142
      %p144 = pneg %p143
      // Predicated region
      $region25: #{tpu_custom_call.1} parent=5 // pred_check
        _
      $region26: #{tpu_custom_call.1} parent=5 // pred_check_branch
        %146 = sbr.rel (%p143) target = $region28
      $region27: #{tpu_custom_call.1} parent=5 // pred_region
        %s147 = ssub.s32 %s15, 1
        // Predicated region
        $region29: #{tpu_custom_call.1} parent=27 // pred_check
          %p148 = pneg %p36
        $region30: #{tpu_custom_call.1} parent=27 // pred_check_branch
          %150 = sbr.rel (%p148) target = $region32
        $region31: #{tpu_custom_call.1} parent=27 // pred_region
          %151 = dma.done [#allocation4], 1024
        $region32: #{tpu_custom_call.1} parent=27 // pred_fallthru
          _
        %s152 = sand.u32 %s49, 1
        %s153 = scalar_lea.sflag [#allocation7], %s152
        %s154 = sand.u32 %s49, 1
        %s155 = smul.addr %s154, 256
        %s156 = scalar_lea.vmem [#allocation6], %s155
        // Predicated region
        $region33: #{tpu_custom_call.1} parent=27 // pred_check
          %p157 = pneg %p62
        $region34: #{tpu_custom_call.1} parent=27 // pred_check_branch
          %159 = sbr.rel (%p157) target = $region36
        $region35: #{tpu_custom_call.1} parent=27 // pred_region
          %160 = dma.done %s153, 4096
        $region36: #{tpu_custom_call.1} parent=27 // pred_fallthru
          _
        %p161 = pneg %p36
        %p162 = pneg %p33
        %s163 = sand.u32 %s49, 1
        %s164 = scalar_lea.sflag [#allocation7], %s163
        %s165 = sand.u32 %s49, 1
        %s166 = smul.addr %s165, 256
        %s167 = scalar_lea.vmem [#allocation6], %s166
        %p168 = pneg %p62
        %p169 = pneg %p59
        %p170 = pneg %p88
        %p171 = pneg %p85
        %s172 = sand.u32 %s75, 1
        %s173 = scalar_lea.sflag [#allocation5], %s172
        %s174 = sand.u32 %s75, 1
        %s175 = smul.addr %s174, 256
        %s176 = scalar_lea.vmem [#allocation8], %s175
        %s177 = smul.u32 2, %s20
        %s178 = smul.u32 2, %s20
        %v180 = vld [vmem:[%s156] sm:$0xff]
        %v181 = vld [vmem:[%s156 + $0x8] sm:$0xff]
        %v182 = vld [vmem:[%s156 + $0x10] sm:$0xff]
        %v183 = vld [vmem:[%s156 + $0x18] sm:$0xff]
        %v184 = vld [vmem:[%s156 + $0x20] sm:$0xff]
        %v185 = vld [vmem:[%s156 + $0x28] sm:$0xff]
        %v186 = vld [vmem:[%s156 + $0x30] sm:$0xff]
        %v187 = vld [vmem:[%s156 + $0x38] sm:$0xff]
        %v188 = vld [vmem:[%s156 + $0x40] sm:$0xff]
        %v189 = vld [vmem:[%s156 + $0x48] sm:$0xff]
        %v190 = vld [vmem:[%s156 + $0x50] sm:$0xff]
        %v191 = vld [vmem:[%s156 + $0x58] sm:$0xff]
        %v192 = vld [vmem:[%s156 + $0x60] sm:$0xff]
        %v193 = vld [vmem:[%s156 + $0x68] sm:$0xff]
        %v194 = vld [vmem:[%s156 + $0x70] sm:$0xff]
        %v195 = vld [vmem:[%s156 + $0x78] sm:$0xff]
        %v196 = vld [vmem:[%s156 + $0x80] sm:$0xff]
        %v197 = vld [vmem:[%s156 + $0x88] sm:$0xff]
        %v198 = vld [vmem:[%s156 + $0x90] sm:$0xff]
        %v199 = vld [vmem:[%s156 + $0x98] sm:$0xff]
        %v200 = vld [vmem:[%s156 + $0xa0] sm:$0xff]
        %v201 = vld [vmem:[%s156 + $0xa8] sm:$0xff]
        %v202 = vld [vmem:[%s156 + $0xb0] sm:$0xff]
        %v203 = vld [vmem:[%s156 + $0xb8] sm:$0xff]
        %v204 = vld [vmem:[%s156 + $0xc0] sm:$0xff]
        %v205 = vld [vmem:[%s156 + $0xc8] sm:$0xff]
        %v206 = vld [vmem:[%s156 + $0xd0] sm:$0xff]
        %v207 = vld [vmem:[%s156 + $0xd8] sm:$0xff]
        %v208 = vld [vmem:[%s156 + $0xe0] sm:$0xff]
        %v209 = vld [vmem:[%s156 + $0xe8] sm:$0xff]
        %v210 = vld [vmem:[%s156 + $0xf0] sm:$0xff]
        %v211 = vld [vmem:[%s156 + $0xf8] sm:$0xff]
        %v212 = vmul.f32 %v180, 0.1
        %v213 = vmul.f32 %v181, 0.1
        %v214 = vmul.f32 %v182, 0.1
        %v215 = vmul.f32 %v183, 0.1
        %v216 = vmul.f32 %v184, 0.1
        %v217 = vmul.f32 %v185, 0.1
        %v218 = vmul.f32 %v186, 0.1
        %v219 = vmul.f32 %v187, 0.1
        %v220 = vmul.f32 %v188, 0.1
        %v221 = vmul.f32 %v189, 0.1
        %v222 = vmul.f32 %v190, 0.1
        %v223 = vmul.f32 %v191, 0.1
        %v224 = vmul.f32 %v192, 0.1
        %v225 = vmul.f32 %v193, 0.1
        %v226 = vmul.f32 %v194, 0.1
        %v227 = vmul.f32 %v195, 0.1
        %v228 = vmul.f32 %v196, 0.1
        %v229 = vmul.f32 %v197, 0.1
        %v230 = vmul.f32 %v198, 0.1
        %v231 = vmul.f32 %v199, 0.1
        %v232 = vmul.f32 %v200, 0.1
        %v233 = vmul.f32 %v201, 0.1
        %v234 = vmul.f32 %v202, 0.1
        %v235 = vmul.f32 %v203, 0.1
        %v236 = vmul.f32 %v204, 0.1
        %v237 = vmul.f32 %v205, 0.1
        %v238 = vmul.f32 %v206, 0.1
        %v239 = vmul.f32 %v207, 0.1
        %v240 = vmul.f32 %v208, 0.1
        %v241 = vmul.f32 %v209, 0.1
        %v242 = vmul.f32 %v210, 0.1
        %v243 = vmul.f32 %v211, 0.1
        %244 = vst [vmem:[#allocation2] sm:$0xff] %v212
        %245 = vst [vmem:[#allocation2 + $0x8] sm:$0xff] %v213
        %246 = vst [vmem:[#allocation2 + $0x10] sm:$0xff] %v214
        %247 = vst [vmem:[#allocation2 + $0x18] sm:$0xff] %v215
        %248 = vst [vmem:[#allocation2 + $0x20] sm:$0xff] %v216
        %249 = vst [vmem:[#allocation2 + $0x28] sm:$0xff] %v217
        %250 = vst [vmem:[#allocation2 + $0x30] sm:$0xff] %v218
        %251 = vst [vmem:[#allocation2 + $0x38] sm:$0xff] %v219
        %252 = vst [vmem:[#allocation2 + $0x40] sm:$0xff] %v220
        %253 = vst [vmem:[#allocation2 + $0x48] sm:$0xff] %v221
        %254 = vst [vmem:[#allocation2 + $0x50] sm:$0xff] %v222
        %255 = vst [vmem:[#allocation2 + $0x58] sm:$0xff] %v223
        %256 = vst [vmem:[#allocation2 + $0x60] sm:$0xff] %v224
        %257 = vst [vmem:[#allocation2 + $0x68] sm:$0xff] %v225
        %258 = vst [vmem:[#allocation2 + $0x70] sm:$0xff] %v226
        %259 = vst [vmem:[#allocation2 + $0x78] sm:$0xff] %v227
        %260 = vst [vmem:[#allocation2 + $0x80] sm:$0xff] %v228
        %261 = vst [vmem:[#allocation2 + $0x88] sm:$0xff] %v229
        %262 = vst [vmem:[#allocation2 + $0x90] sm:$0xff] %v230
        %263 = vst [vmem:[#allocation2 + $0x98] sm:$0xff] %v231
        %264 = vst [vmem:[#allocation2 + $0xa0] sm:$0xff] %v232
        %265 = vst [vmem:[#allocation2 + $0xa8] sm:$0xff] %v233
        %266 = vst [vmem:[#allocation2 + $0xb0] sm:$0xff] %v234
        %267 = vst [vmem:[#allocation2 + $0xb8] sm:$0xff] %v235
        %268 = vst [vmem:[#allocation2 + $0xc0] sm:$0xff] %v236
        %269 = vst [vmem:[#allocation2 + $0xc8] sm:$0xff] %v237
        %270 = vst [vmem:[#allocation2 + $0xd0] sm:$0xff] %v238
        %271 = vst [vmem:[#allocation2 + $0xd8] sm:$0xff] %v239
        %272 = vst [vmem:[#allocation2 + $0xe0] sm:$0xff] %v240
        %273 = vst [vmem:[#allocation2 + $0xe8] sm:$0xff] %v241
        %274 = vst [vmem:[#allocation2 + $0xf0] sm:$0xff] %v242
        %275 = vst [vmem:[#allocation2 + $0xf8] sm:$0xff] %v243
        %276 = vst [vmem:[%s176] sm:$0xff] %v180
        %277 = vst [vmem:[%s176 + $0x8] sm:$0xff] %v181
        %278 = vst [vmem:[%s176 + $0x10] sm:$0xff] %v182
        %279 = vst [vmem:[%s176 + $0x18] sm:$0xff] %v183
        %280 = vst [vmem:[%s176 + $0x20] sm:$0xff] %v184
        %281 = vst [vmem:[%s176 + $0x28] sm:$0xff] %v185
        %282 = vst [vmem:[%s176 + $0x30] sm:$0xff] %v186
        %283 = vst [vmem:[%s176 + $0x38] sm:$0xff] %v187
        %284 = vst [vmem:[%s176 + $0x40] sm:$0xff] %v188
        %285 = vst [vmem:[%s176 + $0x48] sm:$0xff] %v189
        %286 = vst [vmem:[%s176 + $0x50] sm:$0xff] %v190
        %287 = vst [vmem:[%s176 + $0x58] sm:$0xff] %v191
        %288 = vst [vmem:[%s176 + $0x60] sm:$0xff] %v192
        %289 = vst [vmem:[%s176 + $0x68] sm:$0xff] %v193
        %290 = vst [vmem:[%s176 + $0x70] sm:$0xff] %v194
        %291 = vst [vmem:[%s176 + $0x78] sm:$0xff] %v195
        %292 = vst [vmem:[%s176 + $0x80] sm:$0xff] %v196
        %293 = vst [vmem:[%s176 + $0x88] sm:$0xff] %v197
        %294 = vst [vmem:[%s176 + $0x90] sm:$0xff] %v198
        %295 = vst [vmem:[%s176 + $0x98] sm:$0xff] %v199
        %296 = vst [vmem:[%s176 + $0xa0] sm:$0xff] %v200
        %297 = vst [vmem:[%s176 + $0xa8] sm:$0xff] %v201
        %298 = vst [vmem:[%s176 + $0xb0] sm:$0xff] %v202
        %299 = vst [vmem:[%s176 + $0xb8] sm:$0xff] %v203
        %300 = vst [vmem:[%s176 + $0xc0] sm:$0xff] %v204
        %301 = vst [vmem:[%s176 + $0xc8] sm:$0xff] %v205
        %302 = vst [vmem:[%s176 + $0xd0] sm:$0xff] %v206
        %303 = vst [vmem:[%s176 + $0xd8] sm:$0xff] %v207
        %304 = vst [vmem:[%s176 + $0xe0] sm:$0xff] %v208
        %305 = vst [vmem:[%s176 + $0xe8] sm:$0xff] %v209
        %306 = vst [vmem:[%s176 + $0xf0] sm:$0xff] %v210
        %307 = vst [vmem:[%s176 + $0xf8] sm:$0xff] %v211
        %v308 = vld [vmem:[%s176] sm:$0xff]
        %v309 = vld [vmem:[%s176 + $0x10] sm:$0xff]
        %v310 = vld [vmem:[%s176 + $0x20] sm:$0xff]
        %v311 = vld [vmem:[%s176 + $0x30] sm:$0xff]
        %v312 = vld [vmem:[%s176 + $0x40] sm:$0xff]
        %v313 = vld [vmem:[%s176 + $0x50] sm:$0xff]
        %v314 = vld [vmem:[%s176 + $0x60] sm:$0xff]
        %v315 = vld [vmem:[%s176 + $0x70] sm:$0xff]
        %v316 = vld [vmem:[%s176 + $0x80] sm:$0xff]
        %v317 = vld [vmem:[%s176 + $0x90] sm:$0xff]
        %v318 = vld [vmem:[%s176 + $0xa0] sm:$0xff]
        %v319 = vld [vmem:[%s176 + $0xb0] sm:$0xff]
        %v320 = vld [vmem:[%s176 + $0xc0] sm:$0xff]
        %v321 = vld [vmem:[%s176 + $0xd0] sm:$0xff]
        %v322 = vld [vmem:[%s176 + $0xe0] sm:$0xff]
        %v323 = vld [vmem:[%s176 + $0xf0] sm:$0xff]
        %v324 = vpack.c.bf16 %v309, %v308
        %v325 = vpack.c.bf16 %v311, %v310
        %v326 = vpack.c.bf16 %v313, %v312
        %v327 = vpack.c.bf16 %v315, %v314
        %v328 = vpack.c.bf16 %v317, %v316
        %v329 = vpack.c.bf16 %v319, %v318
        %v330 = vpack.c.bf16 %v321, %v320
        %v331 = vpack.c.bf16 %v323, %v322
        %v332 = vld [vmem:[#allocation3] sm:$0xf]
        %v333 = vld [vmem:[#allocation3 + $0x4] sm:$0xf]
        %v334 = vld [vmem:[#allocation3 + $0x8] sm:$0xf]
        %v335 = vld [vmem:[#allocation3 + $0xc] sm:$0xf]
        %v336 = vld [vmem:[#allocation3 + $0x10] sm:$0xf]
        %v337 = vld [vmem:[#allocation3 + $0x14] sm:$0xf]
        %v338 = vld [vmem:[#allocation3 + $0x18] sm:$0xf]
        %v339 = vld [vmem:[#allocation3 + $0x1c] sm:$0xf]
        %v340 = vld [vmem:[#allocation3 + $0x20] sm:$0xf]
        %v341 = vld [vmem:[#allocation3 + $0x24] sm:$0xf]
        %v342 = vld [vmem:[#allocation3 + $0x28] sm:$0xf]
        %v343 = vld [vmem:[#allocation3 + $0x2c] sm:$0xf]
        %v344 = vld [vmem:[#allocation3 + $0x30] sm:$0xf]
        %v345 = vld [vmem:[#allocation3 + $0x34] sm:$0xf]
        %v346 = vld [vmem:[#allocation3 + $0x38] sm:$0xf]
        %v347 = vld [vmem:[#allocation3 + $0x3c] sm:$0xf]
        %v364 = vunpack.c.l.b16 %v332
        %v365 = vunpack.c.l.b16 %v333
        %v366 = vunpack.c.l.b16 %v334
        %v367 = vunpack.c.l.b16 %v335
        %v368 = vunpack.c.l.b16 %v336
        %v369 = vunpack.c.l.b16 %v337
        %v370 = vunpack.c.l.b16 %v338
        %v371 = vunpack.c.l.b16 %v339
        %v372 = vunpack.c.l.b16 %v340
        %v373 = vunpack.c.l.b16 %v341
        %v374 = vunpack.c.l.b16 %v342
        %v375 = vunpack.c.l.b16 %v343
        %v376 = vunpack.c.l.b16 %v344
        %v377 = vunpack.c.l.b16 %v345
        %v378 = vunpack.c.l.b16 %v346
        %v379 = vunpack.c.l.b16 %v347
        %v380 = vpack.c.b16 %v365, %v364
        %v381 = vpack.c.b16 %v367, %v366
        %v382 = vpack.c.b16 %v369, %v368
        %v383 = vpack.c.b16 %v371, %v370
        %v384 = vpack.c.b16 %v373, %v372
        %v385 = vpack.c.b16 %v375, %v374
        %v386 = vpack.c.b16 %v377, %v376
        %v387 = vpack.c.b16 %v379, %v378
        %396 = vmatprep.subr.bf16.mxu0 0
        %397 = vmatpush1.bf16.msra.mxu0 %v331
        %398 = vmatprep.subr.bf16.mxu0 0
        %399 = vmatpush1.bf16.msra.mxu0 %v330
        %400 = vmatprep.subr.bf16.mxu0 0
        %401 = vmatpush1.bf16.msra.mxu0 %v329
        %402 = vmatprep.subr.bf16.mxu0 0
        %403 = vmatpush1.bf16.msra.mxu0 %v328
        %404 = vmatprep.subr.bf16.mxu0 0
        %405 = vmatpush1.bf16.msra.mxu0 %v327
        %406 = vmatprep.subr.bf16.mxu0 0
        %407 = vmatpush1.bf16.msra.mxu0 %v326
        %408 = vmatprep.subr.bf16.mxu0 0
        %409 = vmatpush1.bf16.msra.mxu0 %v325
        %410 = vmatprep.subr.bf16.mxu0 0
        %411 = vmatpush1.bf16.msra.mxu0 %v324
        %412 = vmatprep.subr.bf16.mxu0 0
        %413 = vmatpush2.bf16.msra.mxu0 0
        %414 = vmatprep.subr.bf16.mxu0 0
        %415 = vmatpush2.bf16.msra.mxu0 0
        %416 = vmatprep.subr.bf16.mxu0 0
        %417 = vmatpush2.bf16.msra.mxu0 0
        %418 = vmatprep.subr.bf16.mxu0 0
        %419 = vmatpush2.bf16.msra.mxu0 0
        %420 = vmatprep.subr.bf16.mxu0 0
        %421 = vmatpush2.bf16.msra.mxu0 0
        %422 = vmatprep.subr.bf16.mxu0 0
        %423 = vmatpush2.bf16.msra.mxu0 0
        %424 = vmatprep.subr.bf16.mxu0 0
        %425 = vmatpush2.bf16.msra.mxu0 0
        %426 = vmatprep.subr.bf16.mxu0 0
        %427 = vmatpush2.bf16.msra.mxu0 0
        %428 = vmatprep.mubr.bf16.mxu0 0
        %429 = vmatmul.mubr.bf16.gmra.mxu0 %v380
        %v430 = vpop.f32.mrf.mxu0
        %v431 = vadd.f32 0.0, %v430
        %v432 = vpop.f32.mrf.mxu0
        %v433 = vpop.f32.mrf.mxu0
        %v434 = vadd.f32 0.0, %v433
        %v435 = vpop.f32.mrf.mxu0
        %436 = vmatprep.mubr.bf16.mxu0 0
        %437 = vmatmul.mubr.bf16.gmra.mxu0 %v381
        %v438 = vpop.f32.mrf.mxu0
        %v439 = vadd.f32 0.0, %v438
        %v440 = vpop.f32.mrf.mxu0
        %v441 = vpop.f32.mrf.mxu0
        %v442 = vadd.f32 0.0, %v441
        %v443 = vpop.f32.mrf.mxu0
        %444 = vmatprep.mubr.bf16.mxu0 0
        %445 = vmatmul.mubr.bf16.gmra.mxu0 %v382
        %v446 = vpop.f32.mrf.mxu0
        %v447 = vadd.f32 0.0, %v446
        %v448 = vpop.f32.mrf.mxu0
        %v449 = vpop.f32.mrf.mxu0
        %v450 = vadd.f32 0.0, %v449
        %v451 = vpop.f32.mrf.mxu0
        %452 = vmatprep.mubr.bf16.mxu0 0
        %453 = vmatmul.mubr.bf16.gmra.mxu0 %v383
        %v454 = vpop.f32.mrf.mxu0
        %v455 = vadd.f32 0.0, %v454
        %v456 = vpop.f32.mrf.mxu0
        %v457 = vpop.f32.mrf.mxu0
        %v458 = vadd.f32 0.0, %v457
        %v459 = vpop.f32.mrf.mxu0
        %460 = vmatprep.mubr.bf16.mxu0 0
        %461 = vmatmul.mubr.bf16.gmra.mxu0 %v384
        %v462 = vpop.f32.mrf.mxu0
        %v463 = vadd.f32 0.0, %v462
        %v464 = vpop.f32.mrf.mxu0
        %v465 = vpop.f32.mrf.mxu0
        %v466 = vadd.f32 0.0, %v465
        %v467 = vpop.f32.mrf.mxu0
        %468 = vmatprep.mubr.bf16.mxu0 0
        %469 = vmatmul.mubr.bf16.gmra.mxu0 %v385
        %v470 = vpop.f32.mrf.mxu0
        %v471 = vadd.f32 0.0, %v470
        %v472 = vpop.f32.mrf.mxu0
        %v473 = vpop.f32.mrf.mxu0
        %v474 = vadd.f32 0.0, %v473
        %v475 = vpop.f32.mrf.mxu0
        %476 = vmatprep.mubr.bf16.mxu0 0
        %477 = vmatmul.mubr.bf16.gmra.mxu0 %v386
        %v478 = vpop.f32.mrf.mxu0
        %v479 = vadd.f32 0.0, %v478
        %v480 = vpop.f32.mrf.mxu0
        %v481 = vpop.f32.mrf.mxu0
        %v482 = vadd.f32 0.0, %v481
        %v483 = vpop.f32.mrf.mxu0
        %484 = vmatprep.mubr.bf16.mxu0 0
        %485 = vmatmul.mubr.bf16.gmra.mxu0 %v387
        %v486 = vpop.f32.mrf.mxu0
        %v487 = vadd.f32 0.0, %v486
        %v488 = vpop.f32.mrf.mxu0
        %v489 = vpop.f32.mrf.mxu0
        %v490 = vadd.f32 0.0, %v489
        %v491 = vpop.f32.mrf.mxu0
        %492 = vdwg.mxu0
        %v493 = vmul.f32 %v431, 0.9
        %v494 = vmul.f32 %v434, 0.9
        %v495 = vmul.f32 %v439, 0.9
        %v496 = vmul.f32 %v442, 0.9
        %v497 = vmul.f32 %v447, 0.9
        %v498 = vmul.f32 %v450, 0.9
        %v499 = vmul.f32 %v455, 0.9
        %v500 = vmul.f32 %v458, 0.9
        %v501 = vmul.f32 %v463, 0.9
        %v502 = vmul.f32 %v466, 0.9
        %v503 = vmul.f32 %v471, 0.9
        %v504 = vmul.f32 %v474, 0.9
        %v505 = vmul.f32 %v479, 0.9
        %v506 = vmul.f32 %v482, 0.9
        %v507 = vmul.f32 %v487, 0.9
        %v508 = vmul.f32 %v490, 0.9
        %v509 = vld [vmem:[#allocation2] sm:$0xff]
        %v510 = vld [vmem:[#allocation2 + $0x10] sm:$0xff]
        %v511 = vld [vmem:[#allocation2 + $0x20] sm:$0xff]
        %v512 = vld [vmem:[#allocation2 + $0x30] sm:$0xff]
        %v513 = vld [vmem:[#allocation2 + $0x40] sm:$0xff]
        %v514 = vld [vmem:[#allocation2 + $0x50] sm:$0xff]
        %v515 = vld [vmem:[#allocation2 + $0x60] sm:$0xff]
        %v516 = vld [vmem:[#allocation2 + $0x70] sm:$0xff]
        %v517 = vld [vmem:[#allocation2 + $0x80] sm:$0xff]
        %v518 = vld [vmem:[#allocation2 + $0x90] sm:$0xff]
        %v519 = vld [vmem:[#allocation2 + $0xa0] sm:$0xff]
        %v520 = vld [vmem:[#allocation2 + $0xb0] sm:$0xff]
        %v521 = vld [vmem:[#allocation2 + $0xc0] sm:$0xff]
        %v522 = vld [vmem:[#allocation2 + $0xd0] sm:$0xff]
        %v523 = vld [vmem:[#allocation2 + $0xe0] sm:$0xff]
        %v524 = vld [vmem:[#allocation2 + $0xf0] sm:$0xff]
        %v525 = vadd.f32 %v493, %v509
        %v526 = vadd.f32 %v494, %v510
        %v527 = vadd.f32 %v495, %v511
        %v528 = vadd.f32 %v496, %v512
        %v529 = vadd.f32 %v497, %v513
        %v530 = vadd.f32 %v498, %v514
        %v531 = vadd.f32 %v499, %v515
        %v532 = vadd.f32 %v500, %v516
        %v533 = vadd.f32 %v501, %v517
        %v534 = vadd.f32 %v502, %v518
        %v535 = vadd.f32 %v503, %v519
        %v536 = vadd.f32 %v504, %v520
        %v537 = vadd.f32 %v505, %v521
        %v538 = vadd.f32 %v506, %v522
        %v539 = vadd.f32 %v507, %v523
        %v540 = vadd.f32 %v508, %v524
        %541 = vst [vmem:[%s176] sm:$0xff] %v525
        %542 = vst [vmem:[%s176 + $0x10] sm:$0xff] %v526
        %543 = vst [vmem:[%s176 + $0x20] sm:$0xff] %v527
        %544 = vst [vmem:[%s176 + $0x30] sm:$0xff] %v528
        %545 = vst [vmem:[%s176 + $0x40] sm:$0xff] %v529
        %546 = vst [vmem:[%s176 + $0x50] sm:$0xff] %v530
        %547 = vst [vmem:[%s176 + $0x60] sm:$0xff] %v531
        %548 = vst [vmem:[%s176 + $0x70] sm:$0xff] %v532
        %549 = vst [vmem:[%s176 + $0x80] sm:$0xff] %v533
        %550 = vst [vmem:[%s176 + $0x90] sm:$0xff] %v534
        %551 = vst [vmem:[%s176 + $0xa0] sm:$0xff] %v535
        %552 = vst [vmem:[%s176 + $0xb0] sm:$0xff] %v536
        %553 = vst [vmem:[%s176 + $0xc0] sm:$0xff] %v537
        %554 = vst [vmem:[%s176 + $0xd0] sm:$0xff] %v538
        %555 = vst [vmem:[%s176 + $0xe0] sm:$0xff] %v539
        %556 = vst [vmem:[%s176 + $0xf0] sm:$0xff] %v540
        %v557 = vld [vmem:[%s176 + $0x8] sm:$0xff]
        %v558 = vld [vmem:[%s176 + $0x18] sm:$0xff]
        %v559 = vld [vmem:[%s176 + $0x28] sm:$0xff]
        %v560 = vld [vmem:[%s176 + $0x38] sm:$0xff]
        %v561 = vld [vmem:[%s176 + $0x48] sm:$0xff]
        %v562 = vld [vmem:[%s176 + $0x58] sm:$0xff]
        %v563 = vld [vmem:[%s176 + $0x68] sm:$0xff]
        %v564 = vld [vmem:[%s176 + $0x78] sm:$0xff]
        %v565 = vld [vmem:[%s176 + $0x88] sm:$0xff]
        %v566 = vld [vmem:[%s176 + $0x98] sm:$0xff]
        %v567 = vld [vmem:[%s176 + $0xa8] sm:$0xff]
        %v568 = vld [vmem:[%s176 + $0xb8] sm:$0xff]
        %v569 = vld [vmem:[%s176 + $0xc8] sm:$0xff]
        %v570 = vld [vmem:[%s176 + $0xd8] sm:$0xff]
        %v571 = vld [vmem:[%s176 + $0xe8] sm:$0xff]
        %v572 = vld [vmem:[%s176 + $0xf8] sm:$0xff]
        %v573 = vpack.c.bf16 %v558, %v557
        %v574 = vpack.c.bf16 %v560, %v559
        %v575 = vpack.c.bf16 %v562, %v561
        %v576 = vpack.c.bf16 %v564, %v563
        %v577 = vpack.c.bf16 %v566, %v565
        %v578 = vpack.c.bf16 %v568, %v567
        %v579 = vpack.c.bf16 %v570, %v569
        %v580 = vpack.c.bf16 %v572, %v571
        %v581 = vld [vmem:[#allocation3] sm:$0xf]
        %v582 = vld [vmem:[#allocation3 + $0x4] sm:$0xf]
        %v583 = vld [vmem:[#allocation3 + $0x8] sm:$0xf]
        %v584 = vld [vmem:[#allocation3 + $0xc] sm:$0xf]
        %v585 = vld [vmem:[#allocation3 + $0x10] sm:$0xf]
        %v586 = vld [vmem:[#allocation3 + $0x14] sm:$0xf]
        %v587 = vld [vmem:[#allocation3 + $0x18] sm:$0xf]
        %v588 = vld [vmem:[#allocation3 + $0x1c] sm:$0xf]
        %v589 = vld [vmem:[#allocation3 + $0x20] sm:$0xf]
        %v590 = vld [vmem:[#allocation3 + $0x24] sm:$0xf]
        %v591 = vld [vmem:[#allocation3 + $0x28] sm:$0xf]
        %v592 = vld [vmem:[#allocation3 + $0x2c] sm:$0xf]
        %v593 = vld [vmem:[#allocation3 + $0x30] sm:$0xf]
        %v594 = vld [vmem:[#allocation3 + $0x34] sm:$0xf]
        %v595 = vld [vmem:[#allocation3 + $0x38] sm:$0xf]
        %v596 = vld [vmem:[#allocation3 + $0x3c] sm:$0xf]
        %v613 = vunpack.c.l.b16 %v581
        %v614 = vunpack.c.l.b16 %v582
        %v615 = vunpack.c.l.b16 %v583
        %v616 = vunpack.c.l.b16 %v584
        %v617 = vunpack.c.l.b16 %v585
        %v618 = vunpack.c.l.b16 %v586
        %v619 = vunpack.c.l.b16 %v587
        %v620 = vunpack.c.l.b16 %v588
        %v621 = vunpack.c.l.b16 %v589
        %v622 = vunpack.c.l.b16 %v590
        %v623 = vunpack.c.l.b16 %v591
        %v624 = vunpack.c.l.b16 %v592
        %v625 = vunpack.c.l.b16 %v593
        %v626 = vunpack.c.l.b16 %v594
        %v627 = vunpack.c.l.b16 %v595
        %v628 = vunpack.c.l.b16 %v596
        %v629 = vpack.c.b16 %v614, %v613
        %v630 = vpack.c.b16 %v616, %v615
        %v631 = vpack.c.b16 %v618, %v617
        %v632 = vpack.c.b16 %v620, %v619
        %v633 = vpack.c.b16 %v622, %v621
        %v634 = vpack.c.b16 %v624, %v623
        %v635 = vpack.c.b16 %v626, %v625
        %v636 = vpack.c.b16 %v628, %v627
        %645 = vmatprep.subr.bf16.mxu0 0
        %646 = vmatpush1.bf16.msra.mxu0 %v580
        %647 = vmatprep.subr.bf16.mxu0 0
        %648 = vmatpush1.bf16.msra.mxu0 %v579
        %649 = vmatprep.subr.bf16.mxu0 0
        %650 = vmatpush1.bf16.msra.mxu0 %v578
        %651 = vmatprep.subr.bf16.mxu0 0
        %652 = vmatpush1.bf16.msra.mxu0 %v577
        %653 = vmatprep.subr.bf16.mxu0 0
        %654 = vmatpush1.bf16.msra.mxu0 %v576
        %655 = vmatprep.subr.bf16.mxu0 0
        %656 = vmatpush1.bf16.msra.mxu0 %v575
        %657 = vmatprep.subr.bf16.mxu0 0
        %658 = vmatpush1.bf16.msra.mxu0 %v574
        %659 = vmatprep.subr.bf16.mxu0 0
        %660 = vmatpush1.bf16.msra.mxu0 %v573
        %661 = vmatprep.subr.bf16.mxu0 0
        %662 = vmatpush2.bf16.msra.mxu0 0
        %663 = vmatprep.subr.bf16.mxu0 0
        %664 = vmatpush2.bf16.msra.mxu0 0
        %665 = vmatprep.subr.bf16.mxu0 0
        %666 = vmatpush2.bf16.msra.mxu0 0
        %667 = vmatprep.subr.bf16.mxu0 0
        %668 = vmatpush2.bf16.msra.mxu0 0
        %669 = vmatprep.subr.bf16.mxu0 0
        %670 = vmatpush2.bf16.msra.mxu0 0
        %671 = vmatprep.subr.bf16.mxu0 0
        %672 = vmatpush2.bf16.msra.mxu0 0
        %673 = vmatprep.subr.bf16.mxu0 0
        %674 = vmatpush2.bf16.msra.mxu0 0
        %675 = vmatprep.subr.bf16.mxu0 0
        %676 = vmatpush2.bf16.msra.mxu0 0
        %677 = vmatprep.mubr.bf16.mxu0 0
        %678 = vmatmul.mubr.bf16.gmra.mxu0 %v629
        %v679 = vpop.f32.mrf.mxu0
        %v680 = vadd.f32 0.0, %v679
        %v681 = vpop.f32.mrf.mxu0
        %v682 = vpop.f32.mrf.mxu0
        %v683 = vadd.f32 0.0, %v682
        %v684 = vpop.f32.mrf.mxu0
        %685 = vmatprep.mubr.bf16.mxu0 0
        %686 = vmatmul.mubr.bf16.gmra.mxu0 %v630
        %v687 = vpop.f32.mrf.mxu0
        %v688 = vadd.f32 0.0, %v687
        %v689 = vpop.f32.mrf.mxu0
        %v690 = vpop.f32.mrf.mxu0
        %v691 = vadd.f32 0.0, %v690
        %v692 = vpop.f32.mrf.mxu0
        %693 = vmatprep.mubr.bf16.mxu0 0
        %694 = vmatmul.mubr.bf16.gmra.mxu0 %v631
        %v695 = vpop.f32.mrf.mxu0
        %v696 = vadd.f32 0.0, %v695
        %v697 = vpop.f32.mrf.mxu0
        %v698 = vpop.f32.mrf.mxu0
        %v699 = vadd.f32 0.0, %v698
        %v700 = vpop.f32.mrf.mxu0
        %701 = vmatprep.mubr.bf16.mxu0 0
        %702 = vmatmul.mubr.bf16.gmra.mxu0 %v632
        %v703 = vpop.f32.mrf.mxu0
        %v704 = vadd.f32 0.0, %v703
        %v705 = vpop.f32.mrf.mxu0
        %v706 = vpop.f32.mrf.mxu0
        %v707 = vadd.f32 0.0, %v706
        %v708 = vpop.f32.mrf.mxu0
        %709 = vmatprep.mubr.bf16.mxu0 0
        %710 = vmatmul.mubr.bf16.gmra.mxu0 %v633
        %v711 = vpop.f32.mrf.mxu0
        %v712 = vadd.f32 0.0, %v711
        %v713 = vpop.f32.mrf.mxu0
        %v714 = vpop.f32.mrf.mxu0
        %v715 = vadd.f32 0.0, %v714
        %v716 = vpop.f32.mrf.mxu0
        %717 = vmatprep.mubr.bf16.mxu0 0
        %718 = vmatmul.mubr.bf16.gmra.mxu0 %v634
        %v719 = vpop.f32.mrf.mxu0
        %v720 = vadd.f32 0.0, %v719
        %v721 = vpop.f32.mrf.mxu0
        %v722 = vpop.f32.mrf.mxu0
        %v723 = vadd.f32 0.0, %v722
        %v724 = vpop.f32.mrf.mxu0
        %725 = vmatprep.mubr.bf16.mxu0 0
        %726 = vmatmul.mubr.bf16.gmra.mxu0 %v635
        %v727 = vpop.f32.mrf.mxu0
        %v728 = vadd.f32 0.0, %v727
        %v729 = vpop.f32.mrf.mxu0
        %v730 = vpop.f32.mrf.mxu0
        %v731 = vadd.f32 0.0, %v730
        %v732 = vpop.f32.mrf.mxu0
        %733 = vmatprep.mubr.bf16.mxu0 0
        %734 = vmatmul.mubr.bf16.gmra.mxu0 %v636
        %v735 = vpop.f32.mrf.mxu0
        %v736 = vadd.f32 0.0, %v735
        %v737 = vpop.f32.mrf.mxu0
        %v738 = vpop.f32.mrf.mxu0
        %v739 = vadd.f32 0.0, %v738
        %v740 = vpop.f32.mrf.mxu0
        %741 = vdwg.mxu0
        %v742 = vmul.f32 %v680, 0.9
        %v743 = vmul.f32 %v683, 0.9
        %v744 = vmul.f32 %v688, 0.9
        %v745 = vmul.f32 %v691, 0.9
        %v746 = vmul.f32 %v696, 0.9
        %v747 = vmul.f32 %v699, 0.9
        %v748 = vmul.f32 %v704, 0.9
        %v749 = vmul.f32 %v707, 0.9
        %v750 = vmul.f32 %v712, 0.9
        %v751 = vmul.f32 %v715, 0.9
        %v752 = vmul.f32 %v720, 0.9
        %v753 = vmul.f32 %v723, 0.9
        %v754 = vmul.f32 %v728, 0.9
        %v755 = vmul.f32 %v731, 0.9
        %v756 = vmul.f32 %v736, 0.9
        %v757 = vmul.f32 %v739, 0.9
        %v758 = vld [vmem:[#allocation2 + $0x8] sm:$0xff]
        %v759 = vld [vmem:[#allocation2 + $0x18] sm:$0xff]
        %v760 = vld [vmem:[#allocation2 + $0x28] sm:$0xff]
        %v761 = vld [vmem:[#allocation2 + $0x38] sm:$0xff]
        %v762 = vld [vmem:[#allocation2 + $0x48] sm:$0xff]
        %v763 = vld [vmem:[#allocation2 + $0x58] sm:$0xff]
        %v764 = vld [vmem:[#allocation2 + $0x68] sm:$0xff]
        %v765 = vld [vmem:[#allocation2 + $0x78] sm:$0xff]
        %v766 = vld [vmem:[#allocation2 + $0x88] sm:$0xff]
        %v767 = vld [vmem:[#allocation2 + $0x98] sm:$0xff]
        %v768 = vld [vmem:[#allocation2 + $0xa8] sm:$0xff]
        %v769 = vld [vmem:[#allocation2 + $0xb8] sm:$0xff]
        %v770 = vld [vmem:[#allocation2 + $0xc8] sm:$0xff]
        %v771 = vld [vmem:[#allocation2 + $0xd8] sm:$0xff]
        %v772 = vld [vmem:[#allocation2 + $0xe8] sm:$0xff]
        %v773 = vld [vmem:[#allocation2 + $0xf8] sm:$0xff]
        %v774 = vadd.f32 %v742, %v758
        %v775 = vadd.f32 %v743, %v759
        %v776 = vadd.f32 %v744, %v760
        %v777 = vadd.f32 %v745, %v761
        %v778 = vadd.f32 %v746, %v762
        %v779 = vadd.f32 %v747, %v763
        %v780 = vadd.f32 %v748, %v764
        %v781 = vadd.f32 %v749, %v765
        %v782 = vadd.f32 %v750, %v766
        %v783 = vadd.f32 %v751, %v767
        %v784 = vadd.f32 %v752, %v768
        %v785 = vadd.f32 %v753, %v769
        %v786 = vadd.f32 %v754, %v770
        %v787 = vadd.f32 %v755, %v771
        %v788 = vadd.f32 %v756, %v772
        %v789 = vadd.f32 %v757, %v773
        %790 = vst [vmem:[%s176 + $0x8] sm:$0xff] %v774
        %791 = vst [vmem:[%s176 + $0x18] sm:$0xff] %v775
        %792 = vst [vmem:[%s176 + $0x28] sm:$0xff] %v776
        %793 = vst [vmem:[%s176 + $0x38] sm:$0xff] %v777
        %794 = vst [vmem:[%s176 + $0x48] sm:$0xff] %v778
        %795 = vst [vmem:[%s176 + $0x58] sm:$0xff] %v779
        %796 = vst [vmem:[%s176 + $0x68] sm:$0xff] %v780
        %797 = vst [vmem:[%s176 + $0x78] sm:$0xff] %v781
        %798 = vst [vmem:[%s176 + $0x88] sm:$0xff] %v782
        %799 = vst [vmem:[%s176 + $0x98] sm:$0xff] %v783
        %800 = vst [vmem:[%s176 + $0xa8] sm:$0xff] %v784
        %801 = vst [vmem:[%s176 + $0xb8] sm:$0xff] %v785
        %802 = vst [vmem:[%s176 + $0xc8] sm:$0xff] %v786
        %803 = vst [vmem:[%s176 + $0xd8] sm:$0xff] %v787
        %804 = vst [vmem:[%s176 + $0xe8] sm:$0xff] %v788
        %805 = vst [vmem:[%s176 + $0xf8] sm:$0xff] %v789
        %v806 = vld [vmem:[%s176] sm:$0xff]
        %v807 = vld [vmem:[%s176 + $0x10] sm:$0xff]
        %v808 = vld [vmem:[%s176 + $0x20] sm:$0xff]
        %v809 = vld [vmem:[%s176 + $0x30] sm:$0xff]
        %v810 = vld [vmem:[%s176 + $0x40] sm:$0xff]
        %v811 = vld [vmem:[%s176 + $0x50] sm:$0xff]
        %v812 = vld [vmem:[%s176 + $0x60] sm:$0xff]
        %v813 = vld [vmem:[%s176 + $0x70] sm:$0xff]
        %v814 = vld [vmem:[%s176 + $0x80] sm:$0xff]
        %v815 = vld [vmem:[%s176 + $0x90] sm:$0xff]
        %v816 = vld [vmem:[%s176 + $0xa0] sm:$0xff]
        %v817 = vld [vmem:[%s176 + $0xb0] sm:$0xff]
        %v818 = vld [vmem:[%s176 + $0xc0] sm:$0xff]
        %v819 = vld [vmem:[%s176 + $0xd0] sm:$0xff]
        %v820 = vld [vmem:[%s176 + $0xe0] sm:$0xff]
        %v821 = vld [vmem:[%s176 + $0xf0] sm:$0xff]
        %v822 = vpack.c.bf16 %v807, %v806
        %v823 = vpack.c.bf16 %v809, %v808
        %v824 = vpack.c.bf16 %v811, %v810
        %v825 = vpack.c.bf16 %v813, %v812
        %v826 = vpack.c.bf16 %v815, %v814
        %v827 = vpack.c.bf16 %v817, %v816
        %v828 = vpack.c.bf16 %v819, %v818
        %v829 = vpack.c.bf16 %v821, %v820
        %v830 = vld [vmem:[#allocation3] sm:$0xf]
        %v831 = vld [vmem:[#allocation3 + $0x4] sm:$0xf]
        %v832 = vld [vmem:[#allocation3 + $0x8] sm:$0xf]
        %v833 = vld [vmem:[#allocation3 + $0xc] sm:$0xf]
        %v834 = vld [vmem:[#allocation3 + $0x10] sm:$0xf]
        %v835 = vld [vmem:[#allocation3 + $0x14] sm:$0xf]
        %v836 = vld [vmem:[#allocation3 + $0x18] sm:$0xf]
        %v837 = vld [vmem:[#allocation3 + $0x1c] sm:$0xf]
        %v838 = vld [vmem:[#allocation3 + $0x20] sm:$0xf]
        %v839 = vld [vmem:[#allocation3 + $0x24] sm:$0xf]
        %v840 = vld [vmem:[#allocation3 + $0x28] sm:$0xf]
        %v841 = vld [vmem:[#allocation3 + $0x2c] sm:$0xf]
        %v842 = vld [vmem:[#allocation3 + $0x30] sm:$0xf]
        %v843 = vld [vmem:[#allocation3 + $0x34] sm:$0xf]
        %v844 = vld [vmem:[#allocation3 + $0x38] sm:$0xf]
        %v845 = vld [vmem:[#allocation3 + $0x3c] sm:$0xf]
        %v862 = vunpack.c.l.b16 %v830
        %v863 = vunpack.c.l.b16 %v831
        %v864 = vunpack.c.l.b16 %v832
        %v865 = vunpack.c.l.b16 %v833
        %v866 = vunpack.c.l.b16 %v834
        %v867 = vunpack.c.l.b16 %v835
        %v868 = vunpack.c.l.b16 %v836
        %v869 = vunpack.c.l.b16 %v837
        %v870 = vunpack.c.l.b16 %v838
        %v871 = vunpack.c.l.b16 %v839
        %v872 = vunpack.c.l.b16 %v840
        %v873 = vunpack.c.l.b16 %v841
        %v874 = vunpack.c.l.b16 %v842
        %v875 = vunpack.c.l.b16 %v843
        %v876 = vunpack.c.l.b16 %v844
        %v877 = vunpack.c.l.b16 %v845
        %v878 = vpack.c.b16 %v863, %v862
        %v879 = vpack.c.b16 %v865, %v864
        %v880 = vpack.c.b16 %v867, %v866
        %v881 = vpack.c.b16 %v869, %v868
        %v882 = vpack.c.b16 %v871, %v870
        %v883 = vpack.c.b16 %v873, %v872
        %v884 = vpack.c.b16 %v875, %v874
        %v885 = vpack.c.b16 %v877, %v876
        %894 = vmatprep.subr.bf16.mxu0 0
        %895 = vmatpush1.bf16.msra.mxu0 %v829
        %896 = vmatprep.subr.bf16.mxu0 0
        %897 = vmatpush1.bf16.msra.mxu0 %v828
        %898 = vmatprep.subr.bf16.mxu0 0
        %899 = vmatpush1.bf16.msra.mxu0 %v827
        %900 = vmatprep.subr.bf16.mxu0 0
        %901 = vmatpush1.bf16.msra.mxu0 %v826
        %902 = vmatprep.subr.bf16.mxu0 0
        %903 = vmatpush1.bf16.msra.mxu0 %v825
        %904 = vmatprep.subr.bf16.mxu0 0
        %905 = vmatpush1.bf16.msra.mxu0 %v824
        %906 = vmatprep.subr.bf16.mxu0 0
        %907 = vmatpush1.bf16.msra.mxu0 %v823
        %908 = vmatprep.subr.bf16.mxu0 0
        %909 = vmatpush1.bf16.msra.mxu0 %v822
        %910 = vmatprep.subr.bf16.mxu0 0
        %911 = vmatpush2.bf16.msra.mxu0 0
        %912 = vmatprep.subr.bf16.mxu0 0
        %913 = vmatpush2.bf16.msra.mxu0 0
        %914 = vmatprep.subr.bf16.mxu0 0
        %915 = vmatpush2.bf16.msra.mxu0 0
        %916 = vmatprep.subr.bf16.mxu0 0
        %917 = vmatpush2.bf16.msra.mxu0 0
        %918 = vmatprep.subr.bf16.mxu0 0
        %919 = vmatpush2.bf16.msra.mxu0 0
        %920 = vmatprep.subr.bf16.mxu0 0
        %921 = vmatpush2.bf16.msra.mxu0 0
        %922 = vmatprep.subr.bf16.mxu0 0
        %923 = vmatpush2.bf16.msra.mxu0 0
        %924 = vmatprep.subr.bf16.mxu0 0
        %925 = vmatpush2.bf16.msra.mxu0 0
        %926 = vmatprep.mubr.bf16.mxu0 0
        %927 = vmatmul.mubr.bf16.gmra.mxu0 %v878
        %v928 = vpop.f32.mrf.mxu0
        %v929 = vadd.f32 0.0, %v928
        %v930 = vpop.f32.mrf.mxu0
        %v931 = vpop.f32.mrf.mxu0
        %v932 = vadd.f32 0.0, %v931
        %v933 = vpop.f32.mrf.mxu0
        %934 = vmatprep.mubr.bf16.mxu0 0
        %935 = vmatmul.mubr.bf16.gmra.mxu0 %v879
        %v936 = vpop.f32.mrf.mxu0
        %v937 = vadd.f32 0.0, %v936
        %v938 = vpop.f32.mrf.mxu0
        %v939 = vpop.f32.mrf.mxu0
        %v940 = vadd.f32 0.0, %v939
        %v941 = vpop.f32.mrf.mxu0
        %942 = vmatprep.mubr.bf16.mxu0 0
        %943 = vmatmul.mubr.bf16.gmra.mxu0 %v880
        %v944 = vpop.f32.mrf.mxu0
        %v945 = vadd.f32 0.0, %v944
        %v946 = vpop.f32.mrf.mxu0
        %v947 = vpop.f32.mrf.mxu0
        %v948 = vadd.f32 0.0, %v947
        %v949 = vpop.f32.mrf.mxu0
        %950 = vmatprep.mubr.bf16.mxu0 0
        %951 = vmatmul.mubr.bf16.gmra.mxu0 %v881
        %v952 = vpop.f32.mrf.mxu0
        %v953 = vadd.f32 0.0, %v952
        %v954 = vpop.f32.mrf.mxu0
        %v955 = vpop.f32.mrf.mxu0
        %v956 = vadd.f32 0.0, %v955
        %v957 = vpop.f32.mrf.mxu0
        %958 = vmatprep.mubr.bf16.mxu0 0
        %959 = vmatmul.mubr.bf16.gmra.mxu0 %v882
        %v960 = vpop.f32.mrf.mxu0
        %v961 = vadd.f32 0.0, %v960
        %v962 = vpop.f32.mrf.mxu0
        %v963 = vpop.f32.mrf.mxu0
        %v964 = vadd.f32 0.0, %v963
        %v965 = vpop.f32.mrf.mxu0
        %966 = vmatprep.mubr.bf16.mxu0 0
        %967 = vmatmul.mubr.bf16.gmra.mxu0 %v883
        %v968 = vpop.f32.mrf.mxu0
        %v969 = vadd.f32 0.0, %v968
        %v970 = vpop.f32.mrf.mxu0
        %v971 = vpop.f32.mrf.mxu0
        %v972 = vadd.f32 0.0, %v971
        %v973 = vpop.f32.mrf.mxu0
        %974 = vmatprep.mubr.bf16.mxu0 0
        %975 = vmatmul.mubr.bf16.gmra.mxu0 %v884
        %v976 = vpop.f32.mrf.mxu0
        %v977 = vadd.f32 0.0, %v976
        %v978 = vpop.f32.mrf.mxu0
        %v979 = vpop.f32.mrf.mxu0
        %v980 = vadd.f32 0.0, %v979
        %v981 = vpop.f32.mrf.mxu0
        %982 = vmatprep.mubr.bf16.mxu0 0
        %983 = vmatmul.mubr.bf16.gmra.mxu0 %v885
        %v984 = vpop.f32.mrf.mxu0
        %v985 = vadd.f32 0.0, %v984
        %v986 = vpop.f32.mrf.mxu0
        %v987 = vpop.f32.mrf.mxu0
        %v988 = vadd.f32 0.0, %v987
        %v989 = vpop.f32.mrf.mxu0
        %990 = vdwg.mxu0
        %v991 = vmul.f32 %v929, 0.9
        %v992 = vmul.f32 %v932, 0.9
        %v993 = vmul.f32 %v937, 0.9
        %v994 = vmul.f32 %v940, 0.9
        %v995 = vmul.f32 %v945, 0.9
        %v996 = vmul.f32 %v948, 0.9
        %v997 = vmul.f32 %v953, 0.9
        %v998 = vmul.f32 %v956, 0.9
        %v999 = vmul.f32 %v961, 0.9
        %v1000 = vmul.f32 %v964, 0.9
        %v1001 = vmul.f32 %v969, 0.9
        %v1002 = vmul.f32 %v972, 0.9
        %v1003 = vmul.f32 %v977, 0.9
        %v1004 = vmul.f32 %v980, 0.9
        %v1005 = vmul.f32 %v985, 0.9
        %v1006 = vmul.f32 %v988, 0.9
        %v1007 = vld [vmem:[#allocation2] sm:$0xff]
        %v1008 = vld [vmem:[#allocation2 + $0x10] sm:$0xff]
        %v1009 = vld [vmem:[#allocation2 + $0x20] sm:$0xff]
        %v1010 = vld [vmem:[#allocation2 + $0x30] sm:$0xff]
        %v1011 = vld [vmem:[#allocation2 + $0x40] sm:$0xff]
        %v1012 = vld [vmem:[#allocation2 + $0x50] sm:$0xff]
        %v1013 = vld [vmem:[#allocation2 + $0x60] sm:$0xff]
        %v1014 = vld [vmem:[#allocation2 + $0x70] sm:$0xff]
        %v1015 = vld [vmem:[#allocation2 + $0x80] sm:$0xff]
        %v1016 = vld [vmem:[#allocation2 + $0x90] sm:$0xff]
        %v1017 = vld [vmem:[#allocation2 + $0xa0] sm:$0xff]
        %v1018 = vld [vmem:[#allocation2 + $0xb0] sm:$0xff]
        %v1019 = vld [vmem:[#allocation2 + $0xc0] sm:$0xff]
        %v1020 = vld [vmem:[#allocation2 + $0xd0] sm:$0xff]
        %v1021 = vld [vmem:[#allocation2 + $0xe0] sm:$0xff]
        %v1022 = vld [vmem:[#allocation2 + $0xf0] sm:$0xff]
        %v1023 = vadd.f32 %v991, %v1007
        %v1024 = vadd.f32 %v992, %v1008
        %v1025 = vadd.f32 %v993, %v1009
        %v1026 = vadd.f32 %v994, %v1010
        %v1027 = vadd.f32 %v995, %v1011
        %v1028 = vadd.f32 %v996, %v1012
        %v1029 = vadd.f32 %v997, %v1013
        %v1030 = vadd.f32 %v998, %v1014
        %v1031 = vadd.f32 %v999, %v1015
        %v1032 = vadd.f32 %v1000, %v1016
        %v1033 = vadd.f32 %v1001, %v1017
        %v1034 = vadd.f32 %v1002, %v1018
        %v1035 = vadd.f32 %v1003, %v1019
        %v1036 = vadd.f32 %v1004, %v1020
        %v1037 = vadd.f32 %v1005, %v1021
        %v1038 = vadd.f32 %v1006, %v1022
        %1039 = vst [vmem:[%s176] sm:$0xff] %v1023
        %1040 = vst [vmem:[%s176 + $0x10] sm:$0xff] %v1024
        %1041 = vst [vmem:[%s176 + $0x20] sm:$0xff] %v1025
        %1042 = vst [vmem:[%s176 + $0x30] sm:$0xff] %v1026
        %1043 = vst [vmem:[%s176 + $0x40] sm:$0xff] %v1027
        %1044 = vst [vmem:[%s176 + $0x50] sm:$0xff] %v1028
        %1045 = vst [vmem:[%s176 + $0x60] sm:$0xff] %v1029
        %1046 = vst [vmem:[%s176 + $0x70] sm:$0xff] %v1030
        %1047 = vst [vmem:[%s176 + $0x80] sm:$0xff] %v1031
        %1048 = vst [vmem:[%s176 + $0x90] sm:$0xff] %v1032
        %1049 = vst [vmem:[%s176 + $0xa0] sm:$0xff] %v1033
        %1050 = vst [vmem:[%s176 + $0xb0] sm:$0xff] %v1034
        %1051 = vst [vmem:[%s176 + $0xc0] sm:$0xff] %v1035
        %1052 = vst [vmem:[%s176 + $0xd0] sm:$0xff] %v1036
        %1053 = vst [vmem:[%s176 + $0xe0] sm:$0xff] %v1037
        %1054 = vst [vmem:[%s176 + $0xf0] sm:$0xff] %v1038
        %v1055 = vld [vmem:[%s176 + $0x8] sm:$0xff]
        %v1056 = vld [vmem:[%s176 + $0x18] sm:$0xff]
        %v1057 = vld [vmem:[%s176 + $0x28] sm:$0xff]
        %v1058 = vld [vmem:[%s176 + $0x38] sm:$0xff]
        %v1059 = vld [vmem:[%s176 + $0x48] sm:$0xff]
        %v1060 = vld [vmem:[%s176 + $0x58] sm:$0xff]
        %v1061 = vld [vmem:[%s176 + $0x68] sm:$0xff]
        %v1062 = vld [vmem:[%s176 + $0x78] sm:$0xff]
        %v1063 = vld [vmem:[%s176 + $0x88] sm:$0xff]
        %v1064 = vld [vmem:[%s176 + $0x98] sm:$0xff]
        %v1065 = vld [vmem:[%s176 + $0xa8] sm:$0xff]
        %v1066 = vld [vmem:[%s176 + $0xb8] sm:$0xff]
        %v1067 = vld [vmem:[%s176 + $0xc8] sm:$0xff]
        %v1068 = vld [vmem:[%s176 + $0xd8] sm:$0xff]
        %v1069 = vld [vmem:[%s176 + $0xe8] sm:$0xff]
        %v1070 = vld [vmem:[%s176 + $0xf8] sm:$0xff]
        %v1071 = vpack.c.bf16 %v1056, %v1055
        %v1072 = vpack.c.bf16 %v1058, %v1057
        %v1073 = vpack.c.bf16 %v1060, %v1059
        %v1074 = vpack.c.bf16 %v1062, %v1061
        %v1075 = vpack.c.bf16 %v1064, %v1063
        %v1076 = vpack.c.bf16 %v1066, %v1065
        %v1077 = vpack.c.bf16 %v1068, %v1067
        %v1078 = vpack.c.bf16 %v1070, %v1069
        %v1079 = vld [vmem:[#allocation3] sm:$0xf]
        %v1080 = vld [vmem:[#allocation3 + $0x4] sm:$0xf]
        %v1081 = vld [vmem:[#allocation3 + $0x8] sm:$0xf]
        %v1082 = vld [vmem:[#allocation3 + $0xc] sm:$0xf]
        %v1083 = vld [vmem:[#allocation3 + $0x10] sm:$0xf]
        %v1084 = vld [vmem:[#allocation3 + $0x14] sm:$0xf]
        %v1085 = vld [vmem:[#allocation3 + $0x18] sm:$0xf]
        %v1086 = vld [vmem:[#allocation3 + $0x1c] sm:$0xf]
        %v1087 = vld [vmem:[#allocation3 + $0x20] sm:$0xf]
        %v1088 = vld [vmem:[#allocation3 + $0x24] sm:$0xf]
        %v1089 = vld [vmem:[#allocation3 + $0x28] sm:$0xf]
        %v1090 = vld [vmem:[#allocation3 + $0x2c] sm:$0xf]
        %v1091 = vld [vmem:[#allocation3 + $0x30] sm:$0xf]
        %v1092 = vld [vmem:[#allocation3 + $0x34] sm:$0xf]
        %v1093 = vld [vmem:[#allocation3 + $0x38] sm:$0xf]
        %v1094 = vld [vmem:[#allocation3 + $0x3c] sm:$0xf]
        %v1111 = vunpack.c.l.b16 %v1079
        %v1112 = vunpack.c.l.b16 %v1080
        %v1113 = vunpack.c.l.b16 %v1081
        %v1114 = vunpack.c.l.b16 %v1082
        %v1115 = vunpack.c.l.b16 %v1083
        %v1116 = vunpack.c.l.b16 %v1084
        %v1117 = vunpack.c.l.b16 %v1085
        %v1118 = vunpack.c.l.b16 %v1086
        %v1119 = vunpack.c.l.b16 %v1087
        %v1120 = vunpack.c.l.b16 %v1088
        %v1121 = vunpack.c.l.b16 %v1089
        %v1122 = vunpack.c.l.b16 %v1090
        %v1123 = vunpack.c.l.b16 %v1091
        %v1124 = vunpack.c.l.b16 %v1092
        %v1125 = vunpack.c.l.b16 %v1093
        %v1126 = vunpack.c.l.b16 %v1094
        %v1127 = vpack.c.b16 %v1112, %v1111
        %v1128 = vpack.c.b16 %v1114, %v1113
        %v1129 = vpack.c.b16 %v1116, %v1115
        %v1130 = vpack.c.b16 %v1118, %v1117
        %v1131 = vpack.c.b16 %v1120, %v1119
        %v1132 = vpack.c.b16 %v1122, %v1121
        %v1133 = vpack.c.b16 %v1124, %v1123
        %v1134 = vpack.c.b16 %v1126, %v1125
        %1143 = vmatprep.subr.bf16.mxu0 0
        %1144 = vmatpush1.bf16.msra.mxu0 %v1078
        %1145 = vmatprep.subr.bf16.mxu0 0
        %1146 = vmatpush1.bf16.msra.mxu0 %v1077
        %1147 = vmatprep.subr.bf16.mxu0 0
        %1148 = vmatpush1.bf16.msra.mxu0 %v1076
        %1149 = vmatprep.subr.bf16.mxu0 0
        %1150 = vmatpush1.bf16.msra.mxu0 %v1075
        %1151 = vmatprep.subr.bf16.mxu0 0
        %1152 = vmatpush1.bf16.msra.mxu0 %v1074
        %1153 = vmatprep.subr.bf16.mxu0 0
        %1154 = vmatpush1.bf16.msra.mxu0 %v1073
        %1155 = vmatprep.subr.bf16.mxu0 0
        %1156 = vmatpush1.bf16.msra.mxu0 %v1072
        %1157 = vmatprep.subr.bf16.mxu0 0
        %1158 = vmatpush1.bf16.msra.mxu0 %v1071
        %1159 = vmatprep.subr.bf16.mxu0 0
        %1160 = vmatpush2.bf16.msra.mxu0 0
        %1161 = vmatprep.subr.bf16.mxu0 0
        %1162 = vmatpush2.bf16.msra.mxu0 0
        %1163 = vmatprep.subr.bf16.mxu0 0
        %1164 = vmatpush2.bf16.msra.mxu0 0
        %1165 = vmatprep.subr.bf16.mxu0 0
        %1166 = vmatpush2.bf16.msra.mxu0 0
        %1167 = vmatprep.subr.bf16.mxu0 0
        %1168 = vmatpush2.bf16.msra.mxu0 0
        %1169 = vmatprep.subr.bf16.mxu0 0
        %1170 = vmatpush2.bf16.msra.mxu0 0
        %1171 = vmatprep.subr.bf16.mxu0 0
        %1172 = vmatpush2.bf16.msra.mxu0 0
        %1173 = vmatprep.subr.bf16.mxu0 0
        %1174 = vmatpush2.bf16.msra.mxu0 0
        %1175 = vmatprep.mubr.bf16.mxu0 0
        %1176 = vmatmul.mubr.bf16.gmra.mxu0 %v1127
        %v1177 = vpop.f32.mrf.mxu0
        %v1178 = vadd.f32 0.0, %v1177
        %v1179 = vpop.f32.mrf.mxu0
        %v1180 = vpop.f32.mrf.mxu0
        %v1181 = vadd.f32 0.0, %v1180
        %v1182 = vpop.f32.mrf.mxu0
        %1183 = vmatprep.mubr.bf16.mxu0 0
        %1184 = vmatmul.mubr.bf16.gmra.mxu0 %v1128
        %v1185 = vpop.f32.mrf.mxu0
        %v1186 = vadd.f32 0.0, %v1185
        %v1187 = vpop.f32.mrf.mxu0
        %v1188 = vpop.f32.mrf.mxu0
        %v1189 = vadd.f32 0.0, %v1188
        %v1190 = vpop.f32.mrf.mxu0
        %1191 = vmatprep.mubr.bf16.mxu0 0
        %1192 = vmatmul.mubr.bf16.gmra.mxu0 %v1129
        %v1193 = vpop.f32.mrf.mxu0
        %v1194 = vadd.f32 0.0, %v1193
        %v1195 = vpop.f32.mrf.mxu0
        %v1196 = vpop.f32.mrf.mxu0
        %v1197 = vadd.f32 0.0, %v1196
        %v1198 = vpop.f32.mrf.mxu0
        %1199 = vmatprep.mubr.bf16.mxu0 0
        %1200 = vmatmul.mubr.bf16.gmra.mxu0 %v1130
        %v1201 = vpop.f32.mrf.mxu0
        %v1202 = vadd.f32 0.0, %v1201
        %v1203 = vpop.f32.mrf.mxu0
        %v1204 = vpop.f32.mrf.mxu0
        %v1205 = vadd.f32 0.0, %v1204
        %v1206 = vpop.f32.mrf.mxu0
        %1207 = vmatprep.mubr.bf16.mxu0 0
        %1208 = vmatmul.mubr.bf16.gmra.mxu0 %v1131
        %v1209 = vpop.f32.mrf.mxu0
        %v1210 = vadd.f32 0.0, %v1209
        %v1211 = vpop.f32.mrf.mxu0
        %v1212 = vpop.f32.mrf.mxu0
        %v1213 = vadd.f32 0.0, %v1212
        %v1214 = vpop.f32.mrf.mxu0
        %1215 = vmatprep.mubr.bf16.mxu0 0
        %1216 = vmatmul.mubr.bf16.gmra.mxu0 %v1132
        %v1217 = vpop.f32.mrf.mxu0
        %v1218 = vadd.f32 0.0, %v1217
        %v1219 = vpop.f32.mrf.mxu0
        %v1220 = vpop.f32.mrf.mxu0
        %v1221 = vadd.f32 0.0, %v1220
        %v1222 = vpop.f32.mrf.mxu0
        %1223 = vmatprep.mubr.bf16.mxu0 0
        %1224 = vmatmul.mubr.bf16.gmra.mxu0 %v1133
        %v1225 = vpop.f32.mrf.mxu0
        %v1226 = vadd.f32 0.0, %v1225
        %v1227 = vpop.f32.mrf.mxu0
        %v1228 = vpop.f32.mrf.mxu0
        %v1229 = vadd.f32 0.0, %v1228
        %v1230 = vpop.f32.mrf.mxu0
        %1231 = vmatprep.mubr.bf16.mxu0 0
        %1232 = vmatmul.mubr.bf16.gmra.mxu0 %v1134
        %v1233 = vpop.f32.mrf.mxu0
        %v1234 = vadd.f32 0.0, %v1233
        %v1235 = vpop.f32.mrf.mxu0
        %v1236 = vpop.f32.mrf.mxu0
        %v1237 = vadd.f32 0.0, %v1236
        %v1238 = vpop.f32.mrf.mxu0
        %1239 = vdwg.mxu0
        %v1240 = vmul.f32 %v1178, 0.9
        %v1241 = vmul.f32 %v1181, 0.9
        %v1242 = vmul.f32 %v1186, 0.9
        %v1243 = vmul.f32 %v1189, 0.9
        %v1244 = vmul.f32 %v1194, 0.9
        %v1245 = vmul.f32 %v1197, 0.9
        %v1246 = vmul.f32 %v1202, 0.9
        %v1247 = vmul.f32 %v1205, 0.9
        %v1248 = vmul.f32 %v1210, 0.9
        %v1249 = vmul.f32 %v1213, 0.9
        %v1250 = vmul.f32 %v1218, 0.9
        %v1251 = vmul.f32 %v1221, 0.9
        %v1252 = vmul.f32 %v1226, 0.9
        %v1253 = vmul.f32 %v1229, 0.9
        %v1254 = vmul.f32 %v1234, 0.9
        %v1255 = vmul.f32 %v1237, 0.9
        %v1256 = vld [vmem:[#allocation2 + $0x8] sm:$0xff]
        %v1257 = vld [vmem:[#allocation2 + $0x18] sm:$0xff]
        %v1258 = vld [vmem:[#allocation2 + $0x28] sm:$0xff]
        %v1259 = vld [vmem:[#allocation2 + $0x38] sm:$0xff]
        %v1260 = vld [vmem:[#allocation2 + $0x48] sm:$0xff]
        %v1261 = vld [vmem:[#allocation2 + $0x58] sm:$0xff]
        %v1262 = vld [vmem:[#allocation2 + $0x68] sm:$0xff]
        %v1263 = vld [vmem:[#allocation2 + $0x78] sm:$0xff]
        %v1264 = vld [vmem:[#allocation2 + $0x88] sm:$0xff]
        %v1265 = vld [vmem:[#allocation2 + $0x98] sm:$0xff]
        %v1266 = vld [vmem:[#allocation2 + $0xa8] sm:$0xff]
        %v1267 = vld [vmem:[#allocation2 + $0xb8] sm:$0xff]
        %v1268 = vld [vmem:[#allocation2 + $0xc8] sm:$0xff]
        %v1269 = vld [vmem:[#allocation2 + $0xd8] sm:$0xff]
        %v1270 = vld [vmem:[#allocation2 + $0xe8] sm:$0xff]
        %v1271 = vld [vmem:[#allocation2 + $0xf8] sm:$0xff]
        %v1272 = vadd.f32 %v1240, %v1256
        %v1273 = vadd.f32 %v1241, %v1257
        %v1274 = vadd.f32 %v1242, %v1258
        %v1275 = vadd.f32 %v1243, %v1259
        %v1276 = vadd.f32 %v1244, %v1260
        %v1277 = vadd.f32 %v1245, %v1261
        %v1278 = vadd.f32 %v1246, %v1262
        %v1279 = vadd.f32 %v1247, %v1263
        %v1280 = vadd.f32 %v1248, %v1264
        %v1281 = vadd.f32 %v1249, %v1265
        %v1282 = vadd.f32 %v1250, %v1266
        %v1283 = vadd.f32 %v1251, %v1267
        %v1284 = vadd.f32 %v1252, %v1268
        %v1285 = vadd.f32 %v1253, %v1269
        %v1286 = vadd.f32 %v1254, %v1270
        %v1287 = vadd.f32 %v1255, %v1271
        %1288 = vst [vmem:[%s176 + $0x8] sm:$0xff] %v1272
        %1289 = vst [vmem:[%s176 + $0x18] sm:$0xff] %v1273
        %1290 = vst [vmem:[%s176 + $0x28] sm:$0xff] %v1274
        %1291 = vst [vmem:[%s176 + $0x38] sm:$0xff] %v1275
        %1292 = vst [vmem:[%s176 + $0x48] sm:$0xff] %v1276
        %1293 = vst [vmem:[%s176 + $0x58] sm:$0xff] %v1277
        %1294 = vst [vmem:[%s176 + $0x68] sm:$0xff] %v1278
        %1295 = vst [vmem:[%s176 + $0x78] sm:$0xff] %v1279
        %1296 = vst [vmem:[%s176 + $0x88] sm:$0xff] %v1280
        %1297 = vst [vmem:[%s176 + $0x98] sm:$0xff] %v1281
        %1298 = vst [vmem:[%s176 + $0xa8] sm:$0xff] %v1282
        %1299 = vst [vmem:[%s176 + $0xb8] sm:$0xff] %v1283
        %1300 = vst [vmem:[%s176 + $0xc8] sm:$0xff] %v1284
        %1301 = vst [vmem:[%s176 + $0xd8] sm:$0xff] %v1285
        %1302 = vst [vmem:[%s176 + $0xe8] sm:$0xff] %v1286
        %1303 = vst [vmem:[%s176 + $0xf8] sm:$0xff] %v1287
        %v1304 = vld [vmem:[%s176] sm:$0xff]
        %v1305 = vld [vmem:[%s176 + $0x10] sm:$0xff]
        %v1306 = vld [vmem:[%s176 + $0x20] sm:$0xff]
        %v1307 = vld [vmem:[%s176 + $0x30] sm:$0xff]
        %v1308 = vld [vmem:[%s176 + $0x40] sm:$0xff]
        %v1309 = vld [vmem:[%s176 + $0x50] sm:$0xff]
        %v1310 = vld [vmem:[%s176 + $0x60] sm:$0xff]
        %v1311 = vld [vmem:[%s176 + $0x70] sm:$0xff]
        %v1312 = vld [vmem:[%s176 + $0x80] sm:$0xff]
        %v1313 = vld [vmem:[%s176 + $0x90] sm:$0xff]
        %v1314 = vld [vmem:[%s176 + $0xa0] sm:$0xff]
        %v1315 = vld [vmem:[%s176 + $0xb0] sm:$0xff]
        %v1316 = vld [vmem:[%s176 + $0xc0] sm:$0xff]
        %v1317 = vld [vmem:[%s176 + $0xd0] sm:$0xff]
        %v1318 = vld [vmem:[%s176 + $0xe0] sm:$0xff]
        %v1319 = vld [vmem:[%s176 + $0xf0] sm:$0xff]
        %v1320 = vpack.c.bf16 %v1305, %v1304
        %v1321 = vpack.c.bf16 %v1307, %v1306
        %v1322 = vpack.c.bf16 %v1309, %v1308
        %v1323 = vpack.c.bf16 %v1311, %v1310
        %v1324 = vpack.c.bf16 %v1313, %v1312
        %v1325 = vpack.c.bf16 %v1315, %v1314
        %v1326 = vpack.c.bf16 %v1317, %v1316
        %v1327 = vpack.c.bf16 %v1319, %v1318
        %v1328 = vld [vmem:[#allocation3] sm:$0xf]
        %v1329 = vld [vmem:[#allocation3 + $0x4] sm:$0xf]
        %v1330 = vld [vmem:[#allocation3 + $0x8] sm:$0xf]
        %v1331 = vld [vmem:[#allocation3 + $0xc] sm:$0xf]
        %v1332 = vld [vmem:[#allocation3 + $0x10] sm:$0xf]
        %v1333 = vld [vmem:[#allocation3 + $0x14] sm:$0xf]
        %v1334 = vld [vmem:[#allocation3 + $0x18] sm:$0xf]
        %v1335 = vld [vmem:[#allocation3 + $0x1c] sm:$0xf]
        %v1336 = vld [vmem:[#allocation3 + $0x20] sm:$0xf]
        %v1337 = vld [vmem:[#allocation3 + $0x24] sm:$0xf]
        %v1338 = vld [vmem:[#allocation3 + $0x28] sm:$0xf]
        %v1339 = vld [vmem:[#allocation3 + $0x2c] sm:$0xf]
        %v1340 = vld [vmem:[#allocation3 + $0x30] sm:$0xf]
        %v1341 = vld [vmem:[#allocation3 + $0x34] sm:$0xf]
        %v1342 = vld [vmem:[#allocation3 + $0x38] sm:$0xf]
        %v1343 = vld [vmem:[#allocation3 + $0x3c] sm:$0xf]
        %v1360 = vunpack.c.l.b16 %v1328
        %v1361 = vunpack.c.l.b16 %v1329
        %v1362 = vunpack.c.l.b16 %v1330
        %v1363 = vunpack.c.l.b16 %v1331
        %v1364 = vunpack.c.l.b16 %v1332
        %v1365 = vunpack.c.l.b16 %v1333
        %v1366 = vunpack.c.l.b16 %v1334
        %v1367 = vunpack.c.l.b16 %v1335
        %v1368 = vunpack.c.l.b16 %v1336
        %v1369 = vunpack.c.l.b16 %v1337
        %v1370 = vunpack.c.l.b16 %v1338
        %v1371 = vunpack.c.l.b16 %v1339
        %v1372 = vunpack.c.l.b16 %v1340
        %v1373 = vunpack.c.l.b16 %v1341
        %v1374 = vunpack.c.l.b16 %v1342
        %v1375 = vunpack.c.l.b16 %v1343
        %v1376 = vpack.c.b16 %v1361, %v1360
        %v1377 = vpack.c.b16 %v1363, %v1362
        %v1378 = vpack.c.b16 %v1365, %v1364
        %v1379 = vpack.c.b16 %v1367, %v1366
        %v1380 = vpack.c.b16 %v1369, %v1368
        %v1381 = vpack.c.b16 %v1371, %v1370
        %v1382 = vpack.c.b16 %v1373, %v1372
        %v1383 = vpack.c.b16 %v1375, %v1374
        %1392 = vmatprep.subr.bf16.mxu0 0
        %1393 = vmatpush1.bf16.msra.mxu0 %v1327
        %1394 = vmatprep.subr.bf16.mxu0 0
        %1395 = vmatpush1.bf16.msra.mxu0 %v1326
        %1396 = vmatprep.subr.bf16.mxu0 0
        %1397 = vmatpush1.bf16.msra.mxu0 %v1325
        %1398 = vmatprep.subr.bf16.mxu0 0
        %1399 = vmatpush1.bf16.msra.mxu0 %v1324
        %1400 = vmatprep.subr.bf16.mxu0 0
        %1401 = vmatpush1.bf16.msra.mxu0 %v1323
        %1402 = vmatprep.subr.bf16.mxu0 0
        %1403 = vmatpush1.bf16.msra.mxu0 %v1322
        %1404 = vmatprep.subr.bf16.mxu0 0
        %1405 = vmatpush1.bf16.msra.mxu0 %v1321
        %1406 = vmatprep.subr.bf16.mxu0 0
        %1407 = vmatpush1.bf16.msra.mxu0 %v1320
        %1408 = vmatprep.subr.bf16.mxu0 0
        %1409 = vmatpush2.bf16.msra.mxu0 0
        %1410 = vmatprep.subr.bf16.mxu0 0
        %1411 = vmatpush2.bf16.msra.mxu0 0
        %1412 = vmatprep.subr.bf16.mxu0 0
        %1413 = vmatpush2.bf16.msra.mxu0 0
        %1414 = vmatprep.subr.bf16.mxu0 0
        %1415 = vmatpush2.bf16.msra.mxu0 0
        %1416 = vmatprep.subr.bf16.mxu0 0
        %1417 = vmatpush2.bf16.msra.mxu0 0
        %1418 = vmatprep.subr.bf16.mxu0 0
        %1419 = vmatpush2.bf16.msra.mxu0 0
        %1420 = vmatprep.subr.bf16.mxu0 0
        %1421 = vmatpush2.bf16.msra.mxu0 0
        %1422 = vmatprep.subr.bf16.mxu0 0
        %1423 = vmatpush2.bf16.msra.mxu0 0
        %1424 = vmatprep.mubr.bf16.mxu0 0
        %1425 = vmatmul.mubr.bf16.gmra.mxu0 %v1376
        %v1426 = vpop.f32.mrf.mxu0
        %v1427 = vadd.f32 0.0, %v1426
        %v1428 = vpop.f32.mrf.mxu0
        %v1429 = vpop.f32.mrf.mxu0
        %v1430 = vadd.f32 0.0, %v1429
        %v1431 = vpop.f32.mrf.mxu0
        %1432 = vmatprep.mubr.bf16.mxu0 0
        %1433 = vmatmul.mubr.bf16.gmra.mxu0 %v1377
        %v1434 = vpop.f32.mrf.mxu0
        %v1435 = vadd.f32 0.0, %v1434
        %v1436 = vpop.f32.mrf.mxu0
        %v1437 = vpop.f32.mrf.mxu0
        %v1438 = vadd.f32 0.0, %v1437
        %v1439 = vpop.f32.mrf.mxu0
        %1440 = vmatprep.mubr.bf16.mxu0 0
        %1441 = vmatmul.mubr.bf16.gmra.mxu0 %v1378
        %v1442 = vpop.f32.mrf.mxu0
        %v1443 = vadd.f32 0.0, %v1442
        %v1444 = vpop.f32.mrf.mxu0
        %v1445 = vpop.f32.mrf.mxu0
        %v1446 = vadd.f32 0.0, %v1445
        %v1447 = vpop.f32.mrf.mxu0
        %1448 = vmatprep.mubr.bf16.mxu0 0
        %1449 = vmatmul.mubr.bf16.gmra.mxu0 %v1379
        %v1450 = vpop.f32.mrf.mxu0
        %v1451 = vadd.f32 0.0, %v1450
        %v1452 = vpop.f32.mrf.mxu0
        %v1453 = vpop.f32.mrf.mxu0
        %v1454 = vadd.f32 0.0, %v1453
        %v1455 = vpop.f32.mrf.mxu0
        %1456 = vmatprep.mubr.bf16.mxu0 0
        %1457 = vmatmul.mubr.bf16.gmra.mxu0 %v1380
        %v1458 = vpop.f32.mrf.mxu0
        %v1459 = vadd.f32 0.0, %v1458
        %v1460 = vpop.f32.mrf.mxu0
        %v1461 = vpop.f32.mrf.mxu0
        %v1462 = vadd.f32 0.0, %v1461
        %v1463 = vpop.f32.mrf.mxu0
        %1464 = vmatprep.mubr.bf16.mxu0 0
        %1465 = vmatmul.mubr.bf16.gmra.mxu0 %v1381
        %v1466 = vpop.f32.mrf.mxu0
        %v1467 = vadd.f32 0.0, %v1466
        %v1468 = vpop.f32.mrf.mxu0
        %v1469 = vpop.f32.mrf.mxu0
        %v1470 = vadd.f32 0.0, %v1469
        %v1471 = vpop.f32.mrf.mxu0
        %1472 = vmatprep.mubr.bf16.mxu0 0
        %1473 = vmatmul.mubr.bf16.gmra.mxu0 %v1382
        %v1474 = vpop.f32.mrf.mxu0
        %v1475 = vadd.f32 0.0, %v1474
        %v1476 = vpop.f32.mrf.mxu0
        %v1477 = vpop.f32.mrf.mxu0
        %v1478 = vadd.f32 0.0, %v1477
        %v1479 = vpop.f32.mrf.mxu0
        %1480 = vmatprep.mubr.bf16.mxu0 0
        %1481 = vmatmul.mubr.bf16.gmra.mxu0 %v1383
        %v1482 = vpop.f32.mrf.mxu0
        %v1483 = vadd.f32 0.0, %v1482
        %v1484 = vpop.f32.mrf.mxu0
        %v1485 = vpop.f32.mrf.mxu0
        %v1486 = vadd.f32 0.0, %v1485
        %v1487 = vpop.f32.mrf.mxu0
        %1488 = vdwg.mxu0
        %v1489 = vmul.f32 %v1427, 0.9
        %v1490 = vmul.f32 %v1430, 0.9
        %v1491 = vmul.f32 %v1435, 0.9
        %v1492 = vmul.f32 %v1438, 0.9
        %v1493 = vmul.f32 %v1443, 0.9
        %v1494 = vmul.f32 %v1446, 0.9
        %v1495 = vmul.f32 %v1451, 0.9
        %v1496 = vmul.f32 %v1454, 0.9
        %v1497 = vmul.f32 %v1459, 0.9
        %v1498 = vmul.f32 %v1462, 0.9
        %v1499 = vmul.f32 %v1467, 0.9
        %v1500 = vmul.f32 %v1470, 0.9
        %v1501 = vmul.f32 %v1475, 0.9
        %v1502 = vmul.f32 %v1478, 0.9
        %v1503 = vmul.f32 %v1483, 0.9
        %v1504 = vmul.f32 %v1486, 0.9
        %v1505 = vld [vmem:[#allocation2] sm:$0xff]
        %v1506 = vld [vmem:[#allocation2 + $0x10] sm:$0xff]
        %v1507 = vld [vmem:[#allocation2 + $0x20] sm:$0xff]
        %v1508 = vld [vmem:[#allocation2 + $0x30] sm:$0xff]
        %v1509 = vld [vmem:[#allocation2 + $0x40] sm:$0xff]
        %v1510 = vld [vmem:[#allocation2 + $0x50] sm:$0xff]
        %v1511 = vld [vmem:[#allocation2 + $0x60] sm:$0xff]
        %v1512 = vld [vmem:[#allocation2 + $0x70] sm:$0xff]
        %v1513 = vld [vmem:[#allocation2 + $0x80] sm:$0xff]
        %v1514 = vld [vmem:[#allocation2 + $0x90] sm:$0xff]
        %v1515 = vld [vmem:[#allocation2 + $0xa0] sm:$0xff]
        %v1516 = vld [vmem:[#allocation2 + $0xb0] sm:$0xff]
        %v1517 = vld [vmem:[#allocation2 + $0xc0] sm:$0xff]
        %v1518 = vld [vmem:[#allocation2 + $0xd0] sm:$0xff]
        %v1519 = vld [vmem:[#allocation2 + $0xe0] sm:$0xff]
        %v1520 = vld [vmem:[#allocation2 + $0xf0] sm:$0xff]
        %v1521 = vadd.f32 %v1489, %v1505
        %v1522 = vadd.f32 %v1490, %v1506
        %v1523 = vadd.f32 %v1491, %v1507
        %v1524 = vadd.f32 %v1492, %v1508
        %v1525 = vadd.f32 %v1493, %v1509
        %v1526 = vadd.f32 %v1494, %v1510
        %v1527 = vadd.f32 %v1495, %v1511
        %v1528 = vadd.f32 %v1496, %v1512
        %v1529 = vadd.f32 %v1497, %v1513
        %v1530 = vadd.f32 %v1498, %v1514
        %v1531 = vadd.f32 %v1499, %v1515
        %v1532 = vadd.f32 %v1500, %v1516
        %v1533 = vadd.f32 %v1501, %v1517
        %v1534 = vadd.f32 %v1502, %v1518
        %v1535 = vadd.f32 %v1503, %v1519
        %v1536 = vadd.f32 %v1504, %v1520
        %1537 = vst [vmem:[%s176] sm:$0xff] %v1521
        %1538 = vst [vmem:[%s176 + $0x10] sm:$0xff] %v1522
        %1539 = vst [vmem:[%s176 + $0x20] sm:$0xff] %v1523
        %1540 = vst [vmem:[%s176 + $0x30] sm:$0xff] %v1524
        %1541 = vst [vmem:[%s176 + $0x40] sm:$0xff] %v1525
        %1542 = vst [vmem:[%s176 + $0x50] sm:$0xff] %v1526
        %1543 = vst [vmem:[%s176 + $0x60] sm:$0xff] %v1527
        %1544 = vst [vmem:[%s176 + $0x70] sm:$0xff] %v1528
        %1545 = vst [vmem:[%s176 + $0x80] sm:$0xff] %v1529
        %1546 = vst [vmem:[%s176 + $0x90] sm:$0xff] %v1530
        %1547 = vst [vmem:[%s176 + $0xa0] sm:$0xff] %v1531
        %1548 = vst [vmem:[%s176 + $0xb0] sm:$0xff] %v1532
        %1549 = vst [vmem:[%s176 + $0xc0] sm:$0xff] %v1533
        %1550 = vst [vmem:[%s176 + $0xd0] sm:$0xff] %v1534
        %1551 = vst [vmem:[%s176 + $0xe0] sm:$0xff] %v1535
        %1552 = vst [vmem:[%s176 + $0xf0] sm:$0xff] %v1536
        %v1553 = vld [vmem:[%s176 + $0x8] sm:$0xff]
        %v1554 = vld [vmem:[%s176 + $0x18] sm:$0xff]
        %v1555 = vld [vmem:[%s176 + $0x28] sm:$0xff]
        %v1556 = vld [vmem:[%s176 + $0x38] sm:$0xff]
        %v1557 = vld [vmem:[%s176 + $0x48] sm:$0xff]
        %v1558 = vld [vmem:[%s176 + $0x58] sm:$0xff]
        %v1559 = vld [vmem:[%s176 + $0x68] sm:$0xff]
        %v1560 = vld [vmem:[%s176 + $0x78] sm:$0xff]
        %v1561 = vld [vmem:[%s176 + $0x88] sm:$0xff]
        %v1562 = vld [vmem:[%s176 + $0x98] sm:$0xff]
        %v1563 = vld [vmem:[%s176 + $0xa8] sm:$0xff]
        %v1564 = vld [vmem:[%s176 + $0xb8] sm:$0xff]
        %v1565 = vld [vmem:[%s176 + $0xc8] sm:$0xff]
        %v1566 = vld [vmem:[%s176 + $0xd8] sm:$0xff]
        %v1567 = vld [vmem:[%s176 + $0xe8] sm:$0xff]
        %v1568 = vld [vmem:[%s176 + $0xf8] sm:$0xff]
        %v1569 = vpack.c.bf16 %v1554, %v1553
        %v1570 = vpack.c.bf16 %v1556, %v1555
        %v1571 = vpack.c.bf16 %v1558, %v1557
        %v1572 = vpack.c.bf16 %v1560, %v1559
        %v1573 = vpack.c.bf16 %v1562, %v1561
        %v1574 = vpack.c.bf16 %v1564, %v1563
        %v1575 = vpack.c.bf16 %v1566, %v1565
        %v1576 = vpack.c.bf16 %v1568, %v1567
        %v1577 = vld [vmem:[#allocation3] sm:$0xf]
        %v1578 = vld [vmem:[#allocation3 + $0x4] sm:$0xf]
        %v1579 = vld [vmem:[#allocation3 + $0x8] sm:$0xf]
        %v1580 = vld [vmem:[#allocation3 + $0xc] sm:$0xf]
        %v1581 = vld [vmem:[#allocation3 + $0x10] sm:$0xf]
        %v1582 = vld [vmem:[#allocation3 + $0x14] sm:$0xf]
        %v1583 = vld [vmem:[#allocation3 + $0x18] sm:$0xf]
        %v1584 = vld [vmem:[#allocation3 + $0x1c] sm:$0xf]
        %v1585 = vld [vmem:[#allocation3 + $0x20] sm:$0xf]
        %v1586 = vld [vmem:[#allocation3 + $0x24] sm:$0xf]
        %v1587 = vld [vmem:[#allocation3 + $0x28] sm:$0xf]
        %v1588 = vld [vmem:[#allocation3 + $0x2c] sm:$0xf]
        %v1589 = vld [vmem:[#allocation3 + $0x30] sm:$0xf]
        %v1590 = vld [vmem:[#allocation3 + $0x34] sm:$0xf]
        %v1591 = vld [vmem:[#allocation3 + $0x38] sm:$0xf]
        %v1592 = vld [vmem:[#allocation3 + $0x3c] sm:$0xf]
        %v1609 = vunpack.c.l.b16 %v1577
        %v1610 = vunpack.c.l.b16 %v1578
        %v1611 = vunpack.c.l.b16 %v1579
        %v1612 = vunpack.c.l.b16 %v1580
        %v1613 = vunpack.c.l.b16 %v1581
        %v1614 = vunpack.c.l.b16 %v1582
        %v1615 = vunpack.c.l.b16 %v1583
        %v1616 = vunpack.c.l.b16 %v1584
        %v1617 = vunpack.c.l.b16 %v1585
        %v1618 = vunpack.c.l.b16 %v1586
        %v1619 = vunpack.c.l.b16 %v1587
        %v1620 = vunpack.c.l.b16 %v1588
        %v1621 = vunpack.c.l.b16 %v1589
        %v1622 = vunpack.c.l.b16 %v1590
        %v1623 = vunpack.c.l.b16 %v1591
        %v1624 = vunpack.c.l.b16 %v1592
        %v1625 = vpack.c.b16 %v1610, %v1609
        %v1626 = vpack.c.b16 %v1612, %v1611
        %v1627 = vpack.c.b16 %v1614, %v1613
        %v1628 = vpack.c.b16 %v1616, %v1615
        %v1629 = vpack.c.b16 %v1618, %v1617
        %v1630 = vpack.c.b16 %v1620, %v1619
        %v1631 = vpack.c.b16 %v1622, %v1621
        %v1632 = vpack.c.b16 %v1624, %v1623
        %1641 = vmatprep.subr.bf16.mxu0 0
        %1642 = vmatpush1.bf16.msra.mxu0 %v1576
        %1643 = vmatprep.subr.bf16.mxu0 0
        %1644 = vmatpush1.bf16.msra.mxu0 %v1575
        %1645 = vmatprep.subr.bf16.mxu0 0
        %1646 = vmatpush1.bf16.msra.mxu0 %v1574
        %1647 = vmatprep.subr.bf16.mxu0 0
        %1648 = vmatpush1.bf16.msra.mxu0 %v1573
        %1649 = vmatprep.subr.bf16.mxu0 0
        %1650 = vmatpush1.bf16.msra.mxu0 %v1572
        %1651 = vmatprep.subr.bf16.mxu0 0
        %1652 = vmatpush1.bf16.msra.mxu0 %v1571
        %1653 = vmatprep.subr.bf16.mxu0 0
        %1654 = vmatpush1.bf16.msra.mxu0 %v1570
        %1655 = vmatprep.subr.bf16.mxu0 0
        %1656 = vmatpush1.bf16.msra.mxu0 %v1569
        %1657 = vmatprep.subr.bf16.mxu0 0
        %1658 = vmatpush2.bf16.msra.mxu0 0
        %1659 = vmatprep.subr.bf16.mxu0 0
        %1660 = vmatpush2.bf16.msra.mxu0 0
        %1661 = vmatprep.subr.bf16.mxu0 0
        %1662 = vmatpush2.bf16.msra.mxu0 0
        %1663 = vmatprep.subr.bf16.mxu0 0
        %1664 = vmatpush2.bf16.msra.mxu0 0
        %1665 = vmatprep.subr.bf16.mxu0 0
        %1666 = vmatpush2.bf16.msra.mxu0 0
        %1667 = vmatprep.subr.bf16.mxu0 0
        %1668 = vmatpush2.bf16.msra.mxu0 0
        %1669 = vmatprep.subr.bf16.mxu0 0
        %1670 = vmatpush2.bf16.msra.mxu0 0
        %1671 = vmatprep.subr.bf16.mxu0 0
        %1672 = vmatpush2.bf16.msra.mxu0 0
        %1673 = vmatprep.mubr.bf16.mxu0 0
        %1674 = vmatmul.mubr.bf16.gmra.mxu0 %v1625
        %v1675 = vpop.f32.mrf.mxu0
        %v1676 = vadd.f32 0.0, %v1675
        %v1677 = vpop.f32.mrf.mxu0
        %v1678 = vpop.f32.mrf.mxu0
        %v1679 = vadd.f32 0.0, %v1678
        %v1680 = vpop.f32.mrf.mxu0
        %1681 = vmatprep.mubr.bf16.mxu0 0
        %1682 = vmatmul.mubr.bf16.gmra.mxu0 %v1626
        %v1683 = vpop.f32.mrf.mxu0
        %v1684 = vadd.f32 0.0, %v1683
        %v1685 = vpop.f32.mrf.mxu0
        %v1686 = vpop.f32.mrf.mxu0
        %v1687 = vadd.f32 0.0, %v1686
        %v1688 = vpop.f32.mrf.mxu0
        %1689 = vmatprep.mubr.bf16.mxu0 0
        %1690 = vmatmul.mubr.bf16.gmra.mxu0 %v1627
        %v1691 = vpop.f32.mrf.mxu0
        %v1692 = vadd.f32 0.0, %v1691
        %v1693 = vpop.f32.mrf.mxu0
        %v1694 = vpop.f32.mrf.mxu0
        %v1695 = vadd.f32 0.0, %v1694
        %v1696 = vpop.f32.mrf.mxu0
        %1697 = vmatprep.mubr.bf16.mxu0 0
        %1698 = vmatmul.mubr.bf16.gmra.mxu0 %v1628
        %v1699 = vpop.f32.mrf.mxu0
        %v1700 = vadd.f32 0.0, %v1699
        %v1701 = vpop.f32.mrf.mxu0
        %v1702 = vpop.f32.mrf.mxu0
        %v1703 = vadd.f32 0.0, %v1702
        %v1704 = vpop.f32.mrf.mxu0
        %1705 = vmatprep.mubr.bf16.mxu0 0
        %1706 = vmatmul.mubr.bf16.gmra.mxu0 %v1629
        %v1707 = vpop.f32.mrf.mxu0
        %v1708 = vadd.f32 0.0, %v1707
        %v1709 = vpop.f32.mrf.mxu0
        %v1710 = vpop.f32.mrf.mxu0
        %v1711 = vadd.f32 0.0, %v1710
        %v1712 = vpop.f32.mrf.mxu0
        %1713 = vmatprep.mubr.bf16.mxu0 0
        %1714 = vmatmul.mubr.bf16.gmra.mxu0 %v1630
        %v1715 = vpop.f32.mrf.mxu0
        %v1716 = vadd.f32 0.0, %v1715
        %v1717 = vpop.f32.mrf.mxu0
        %v1718 = vpop.f32.mrf.mxu0
        %v1719 = vadd.f32 0.0, %v1718
        %v1720 = vpop.f32.mrf.mxu0
        %1721 = vmatprep.mubr.bf16.mxu0 0
        %1722 = vmatmul.mubr.bf16.gmra.mxu0 %v1631
        %v1723 = vpop.f32.mrf.mxu0
        %v1724 = vadd.f32 0.0, %v1723
        %v1725 = vpop.f32.mrf.mxu0
        %v1726 = vpop.f32.mrf.mxu0
        %v1727 = vadd.f32 0.0, %v1726
        %v1728 = vpop.f32.mrf.mxu0
        %1729 = vmatprep.mubr.bf16.mxu0 0
        %1730 = vmatmul.mubr.bf16.gmra.mxu0 %v1632
        %v1731 = vpop.f32.mrf.mxu0
        %v1732 = vadd.f32 0.0, %v1731
        %v1733 = vpop.f32.mrf.mxu0
        %v1734 = vpop.f32.mrf.mxu0
        %v1735 = vadd.f32 0.0, %v1734
        %v1736 = vpop.f32.mrf.mxu0
        %1737 = vdwg.mxu0
        %v1738 = vmul.f32 %v1676, 0.9
        %v1739 = vmul.f32 %v1679, 0.9
        %v1740 = vmul.f32 %v1684, 0.9
        %v1741 = vmul.f32 %v1687, 0.9
        %v1742 = vmul.f32 %v1692, 0.9
        %v1743 = vmul.f32 %v1695, 0.9
        %v1744 = vmul.f32 %v1700, 0.9
        %v1745 = vmul.f32 %v1703, 0.9
        %v1746 = vmul.f32 %v1708, 0.9
        %v1747 = vmul.f32 %v1711, 0.9
        %v1748 = vmul.f32 %v1716, 0.9
        %v1749 = vmul.f32 %v1719, 0.9
        %v1750 = vmul.f32 %v1724, 0.9
        %v1751 = vmul.f32 %v1727, 0.9
        %v1752 = vmul.f32 %v1732, 0.9
        %v1753 = vmul.f32 %v1735, 0.9
        %v1754 = vld [vmem:[#allocation2 + $0x8] sm:$0xff]
        %v1755 = vld [vmem:[#allocation2 + $0x18] sm:$0xff]
        %v1756 = vld [vmem:[#allocation2 + $0x28] sm:$0xff]
        %v1757 = vld [vmem:[#allocation2 + $0x38] sm:$0xff]
        %v1758 = vld [vmem:[#allocation2 + $0x48] sm:$0xff]
        %v1759 = vld [vmem:[#allocation2 + $0x58] sm:$0xff]
        %v1760 = vld [vmem:[#allocation2 + $0x68] sm:$0xff]
        %v1761 = vld [vmem:[#allocation2 + $0x78] sm:$0xff]
        %v1762 = vld [vmem:[#allocation2 + $0x88] sm:$0xff]
        %v1763 = vld [vmem:[#allocation2 + $0x98] sm:$0xff]
        %v1764 = vld [vmem:[#allocation2 + $0xa8] sm:$0xff]
        %v1765 = vld [vmem:[#allocation2 + $0xb8] sm:$0xff]
        %v1766 = vld [vmem:[#allocation2 + $0xc8] sm:$0xff]
        %v1767 = vld [vmem:[#allocation2 + $0xd8] sm:$0xff]
        %v1768 = vld [vmem:[#allocation2 + $0xe8] sm:$0xff]
        %v1769 = vld [vmem:[#allocation2 + $0xf8] sm:$0xff]
        %v1770 = vadd.f32 %v1738, %v1754
        %v1771 = vadd.f32 %v1739, %v1755
        %v1772 = vadd.f32 %v1740, %v1756
        %v1773 = vadd.f32 %v1741, %v1757
        %v1774 = vadd.f32 %v1742, %v1758
        %v1775 = vadd.f32 %v1743, %v1759
        %v1776 = vadd.f32 %v1744, %v1760
        %v1777 = vadd.f32 %v1745, %v1761
        %v1778 = vadd.f32 %v1746, %v1762
        %v1779 = vadd.f32 %v1747, %v1763
        %v1780 = vadd.f32 %v1748, %v1764
        %v1781 = vadd.f32 %v1749, %v1765
        %v1782 = vadd.f32 %v1750, %v1766
        %v1783 = vadd.f32 %v1751, %v1767
        %v1784 = vadd.f32 %v1752, %v1768
        %v1785 = vadd.f32 %v1753, %v1769
        %1786 = vst [vmem:[%s176 + $0x8] sm:$0xff] %v1770
        %1787 = vst [vmem:[%s176 + $0x18] sm:$0xff] %v1771
        %1788 = vst [vmem:[%s176 + $0x28] sm:$0xff] %v1772
        %1789 = vst [vmem:[%s176 + $0x38] sm:$0xff] %v1773
        %1790 = vst [vmem:[%s176 + $0x48] sm:$0xff] %v1774
        %1791 = vst [vmem:[%s176 + $0x58] sm:$0xff] %v1775
        %1792 = vst [vmem:[%s176 + $0x68] sm:$0xff] %v1776
        %1793 = vst [vmem:[%s176 + $0x78] sm:$0xff] %v1777
        %1794 = vst [vmem:[%s176 + $0x88] sm:$0xff] %v1778
        %1795 = vst [vmem:[%s176 + $0x98] sm:$0xff] %v1779
        %1796 = vst [vmem:[%s176 + $0xa8] sm:$0xff] %v1780
        %1797 = vst [vmem:[%s176 + $0xb8] sm:$0xff] %v1781
        %1798 = vst [vmem:[%s176 + $0xc8] sm:$0xff] %v1782
        %1799 = vst [vmem:[%s176 + $0xd8] sm:$0xff] %v1783
        %1800 = vst [vmem:[%s176 + $0xe8] sm:$0xff] %v1784
        %1801 = vst [vmem:[%s176 + $0xf8] sm:$0xff] %v1785
        %v1802 = vld [vmem:[%s176] sm:$0xff]
        %v1803 = vld [vmem:[%s176 + $0x10] sm:$0xff]
        %v1804 = vld [vmem:[%s176 + $0x20] sm:$0xff]
        %v1805 = vld [vmem:[%s176 + $0x30] sm:$0xff]
        %v1806 = vld [vmem:[%s176 + $0x40] sm:$0xff]
        %v1807 = vld [vmem:[%s176 + $0x50] sm:$0xff]
        %v1808 = vld [vmem:[%s176 + $0x60] sm:$0xff]
        %v1809 = vld [vmem:[%s176 + $0x70] sm:$0xff]
        %v1810 = vld [vmem:[%s176 + $0x80] sm:$0xff]
        %v1811 = vld [vmem:[%s176 + $0x90] sm:$0xff]
        %v1812 = vld [vmem:[%s176 + $0xa0] sm:$0xff]
        %v1813 = vld [vmem:[%s176 + $0xb0] sm:$0xff]
        %v1814 = vld [vmem:[%s176 + $0xc0] sm:$0xff]
        %v1815 = vld [vmem:[%s176 + $0xd0] sm:$0xff]
        %v1816 = vld [vmem:[%s176 + $0xe0] sm:$0xff]
        %v1817 = vld [vmem:[%s176 + $0xf0] sm:$0xff]
        %v1818 = vpack.c.bf16 %v1803, %v1802
        %v1819 = vpack.c.bf16 %v1805, %v1804
        %v1820 = vpack.c.bf16 %v1807, %v1806
        %v1821 = vpack.c.bf16 %v1809, %v1808
        %v1822 = vpack.c.bf16 %v1811, %v1810
        %v1823 = vpack.c.bf16 %v1813, %v1812
        %v1824 = vpack.c.bf16 %v1815, %v1814
        %v1825 = vpack.c.bf16 %v1817, %v1816
        %v1826 = vld [vmem:[#allocation3] sm:$0xf]
        %v1827 = vld [vmem:[#allocation3 + $0x4] sm:$0xf]
        %v1828 = vld [vmem:[#allocation3 + $0x8] sm:$0xf]
        %v1829 = vld [vmem:[#allocation3 + $0xc] sm:$0xf]
        %v1830 = vld [vmem:[#allocation3 + $0x10] sm:$0xf]
        %v1831 = vld [vmem:[#allocation3 + $0x14] sm:$0xf]
        %v1832 = vld [vmem:[#allocation3 + $0x18] sm:$0xf]
        %v1833 = vld [vmem:[#allocation3 + $0x1c] sm:$0xf]
        %v1834 = vld [vmem:[#allocation3 + $0x20] sm:$0xf]
        %v1835 = vld [vmem:[#allocation3 + $0x24] sm:$0xf]
        %v1836 = vld [vmem:[#allocation3 + $0x28] sm:$0xf]
        %v1837 = vld [vmem:[#allocation3 + $0x2c] sm:$0xf]
        %v1838 = vld [vmem:[#allocation3 + $0x30] sm:$0xf]
        %v1839 = vld [vmem:[#allocation3 + $0x34] sm:$0xf]
        %v1840 = vld [vmem:[#allocation3 + $0x38] sm:$0xf]
        %v1841 = vld [vmem:[#allocation3 + $0x3c] sm:$0xf]
        %v1858 = vunpack.c.l.b16 %v1826
        %v1859 = vunpack.c.l.b16 %v1827
        %v1860 = vunpack.c.l.b16 %v1828
        %v1861 = vunpack.c.l.b16 %v1829
        %v1862 = vunpack.c.l.b16 %v1830
        %v1863 = vunpack.c.l.b16 %v1831
        %v1864 = vunpack.c.l.b16 %v1832
        %v1865 = vunpack.c.l.b16 %v1833
        %v1866 = vunpack.c.l.b16 %v1834
        %v1867 = vunpack.c.l.b16 %v1835
        %v1868 = vunpack.c.l.b16 %v1836
        %v1869 = vunpack.c.l.b16 %v1837
        %v1870 = vunpack.c.l.b16 %v1838
        %v1871 = vunpack.c.l.b16 %v1839
        %v1872 = vunpack.c.l.b16 %v1840
        %v1873 = vunpack.c.l.b16 %v1841
        %v1874 = vpack.c.b16 %v1859, %v1858
        %v1875 = vpack.c.b16 %v1861, %v1860
        %v1876 = vpack.c.b16 %v1863, %v1862
        %v1877 = vpack.c.b16 %v1865, %v1864
        %v1878 = vpack.c.b16 %v1867, %v1866
        %v1879 = vpack.c.b16 %v1869, %v1868
        %v1880 = vpack.c.b16 %v1871, %v1870
        %v1881 = vpack.c.b16 %v1873, %v1872
        %1890 = vmatprep.subr.bf16.mxu0 0
        %1891 = vmatpush1.bf16.msra.mxu0 %v1825
        %1892 = vmatprep.subr.bf16.mxu0 0
        %1893 = vmatpush1.bf16.msra.mxu0 %v1824
        %1894 = vmatprep.subr.bf16.mxu0 0
        %1895 = vmatpush1.bf16.msra.mxu0 %v1823
        %1896 = vmatprep.subr.bf16.mxu0 0
        %1897 = vmatpush1.bf16.msra.mxu0 %v1822
        %1898 = vmatprep.subr.bf16.mxu0 0
        %1899 = vmatpush1.bf16.msra.mxu0 %v1821
        %1900 = vmatprep.subr.bf16.mxu0 0
        %1901 = vmatpush1.bf16.msra.mxu0 %v1820
        %1902 = vmatprep.subr.bf16.mxu0 0
        %1903 = vmatpush1.bf16.msra.mxu0 %v1819
        %1904 = vmatprep.subr.bf16.mxu0 0
        %1905 = vmatpush1.bf16.msra.mxu0 %v1818
        %1906 = vmatprep.subr.bf16.mxu0 0
        %1907 = vmatpush2.bf16.msra.mxu0 0
        %1908 = vmatprep.subr.bf16.mxu0 0
        %1909 = vmatpush2.bf16.msra.mxu0 0
        %1910 = vmatprep.subr.bf16.mxu0 0
        %1911 = vmatpush2.bf16.msra.mxu0 0
        %1912 = vmatprep.subr.bf16.mxu0 0
        %1913 = vmatpush2.bf16.msra.mxu0 0
        %1914 = vmatprep.subr.bf16.mxu0 0
        %1915 = vmatpush2.bf16.msra.mxu0 0
        %1916 = vmatprep.subr.bf16.mxu0 0
        %1917 = vmatpush2.bf16.msra.mxu0 0
        %1918 = vmatprep.subr.bf16.mxu0 0
        %1919 = vmatpush2.bf16.msra.mxu0 0
        %1920 = vmatprep.subr.bf16.mxu0 0
        %1921 = vmatpush2.bf16.msra.mxu0 0
        %1922 = vmatprep.mubr.bf16.mxu0 0
        %1923 = vmatmul.mubr.bf16.gmra.mxu0 %v1874
        %v1924 = vpop.f32.mrf.mxu0
        %v1925 = vadd.f32 0.0, %v1924
        %v1926 = vpop.f32.mrf.mxu0
        %v1927 = vpop.f32.mrf.mxu0
        %v1928 = vadd.f32 0.0, %v1927
        %v1929 = vpop.f32.mrf.mxu0
        %1930 = vmatprep.mubr.bf16.mxu0 0
        %1931 = vmatmul.mubr.bf16.gmra.mxu0 %v1875
        %v1932 = vpop.f32.mrf.mxu0
        %v1933 = vadd.f32 0.0, %v1932
        %v1934 = vpop.f32.mrf.mxu0
        %v1935 = vpop.f32.mrf.mxu0
        %v1936 = vadd.f32 0.0, %v1935
        %v1937 = vpop.f32.mrf.mxu0
        %1938 = vmatprep.mubr.bf16.mxu0 0
        %1939 = vmatmul.mubr.bf16.gmra.mxu0 %v1876
        %v1940 = vpop.f32.mrf.mxu0
        %v1941 = vadd.f32 0.0, %v1940
        %v1942 = vpop.f32.mrf.mxu0
        %v1943 = vpop.f32.mrf.mxu0
        %v1944 = vadd.f32 0.0, %v1943
        %v1945 = vpop.f32.mrf.mxu0
        %1946 = vmatprep.mubr.bf16.mxu0 0
        %1947 = vmatmul.mubr.bf16.gmra.mxu0 %v1877
        %v1948 = vpop.f32.mrf.mxu0
        %v1949 = vadd.f32 0.0, %v1948
        %v1950 = vpop.f32.mrf.mxu0
        %v1951 = vpop.f32.mrf.mxu0
        %v1952 = vadd.f32 0.0, %v1951
        %v1953 = vpop.f32.mrf.mxu0
        %1954 = vmatprep.mubr.bf16.mxu0 0
        %1955 = vmatmul.mubr.bf16.gmra.mxu0 %v1878
        %v1956 = vpop.f32.mrf.mxu0
        %v1957 = vadd.f32 0.0, %v1956
        %v1958 = vpop.f32.mrf.mxu0
        %v1959 = vpop.f32.mrf.mxu0
        %v1960 = vadd.f32 0.0, %v1959
        %v1961 = vpop.f32.mrf.mxu0
        %1962 = vmatprep.mubr.bf16.mxu0 0
        %1963 = vmatmul.mubr.bf16.gmra.mxu0 %v1879
        %v1964 = vpop.f32.mrf.mxu0
        %v1965 = vadd.f32 0.0, %v1964
        %v1966 = vpop.f32.mrf.mxu0
        %v1967 = vpop.f32.mrf.mxu0
        %v1968 = vadd.f32 0.0, %v1967
        %v1969 = vpop.f32.mrf.mxu0
        %1970 = vmatprep.mubr.bf16.mxu0 0
        %1971 = vmatmul.mubr.bf16.gmra.mxu0 %v1880
        %v1972 = vpop.f32.mrf.mxu0
        %v1973 = vadd.f32 0.0, %v1972
        %v1974 = vpop.f32.mrf.mxu0
        %v1975 = vpop.f32.mrf.mxu0
        %v1976 = vadd.f32 0.0, %v1975
        %v1977 = vpop.f32.mrf.mxu0
        %1978 = vmatprep.mubr.bf16.mxu0 0
        %1979 = vmatmul.mubr.bf16.gmra.mxu0 %v1881
        %v1980 = vpop.f32.mrf.mxu0
        %v1981 = vadd.f32 0.0, %v1980
        %v1982 = vpop.f32.mrf.mxu0
        %v1983 = vpop.f32.mrf.mxu0
        %v1984 = vadd.f32 0.0, %v1983
        %v1985 = vpop.f32.mrf.mxu0
        %1986 = vdwg.mxu0
        %v1987 = vmul.f32 %v1925, 0.9
        %v1988 = vmul.f32 %v1928, 0.9
        %v1989 = vmul.f32 %v1933, 0.9
        %v1990 = vmul.f32 %v1936, 0.9
        %v1991 = vmul.f32 %v1941, 0.9
        %v1992 = vmul.f32 %v1944, 0.9
        %v1993 = vmul.f32 %v1949, 0.9
        %v1994 = vmul.f32 %v1952, 0.9
        %v1995 = vmul.f32 %v1957, 0.9
        %v1996 = vmul.f32 %v1960, 0.9
        %v1997 = vmul.f32 %v1965, 0.9
        %v1998 = vmul.f32 %v1968, 0.9
        %v1999 = vmul.f32 %v1973, 0.9
        %v2000 = vmul.f32 %v1976, 0.9
        %v2001 = vmul.f32 %v1981, 0.9
        %v2002 = vmul.f32 %v1984, 0.9
        %v2003 = vld [vmem:[#allocation2] sm:$0xff]
        %v2004 = vld [vmem:[#allocation2 + $0x10] sm:$0xff]
        %v2005 = vld [vmem:[#allocation2 + $0x20] sm:$0xff]
        %v2006 = vld [vmem:[#allocation2 + $0x30] sm:$0xff]
        %v2007 = vld [vmem:[#allocation2 + $0x40] sm:$0xff]
        %v2008 = vld [vmem:[#allocation2 + $0x50] sm:$0xff]
        %v2009 = vld [vmem:[#allocation2 + $0x60] sm:$0xff]
        %v2010 = vld [vmem:[#allocation2 + $0x70] sm:$0xff]
        %v2011 = vld [vmem:[#allocation2 + $0x80] sm:$0xff]
        %v2012 = vld [vmem:[#allocation2 + $0x90] sm:$0xff]
        %v2013 = vld [vmem:[#allocation2 + $0xa0] sm:$0xff]
        %v2014 = vld [vmem:[#allocation2 + $0xb0] sm:$0xff]
        %v2015 = vld [vmem:[#allocation2 + $0xc0] sm:$0xff]
        %v2016 = vld [vmem:[#allocation2 + $0xd0] sm:$0xff]
        %v2017 = vld [vmem:[#allocation2 + $0xe0] sm:$0xff]
        %v2018 = vld [vmem:[#allocation2 + $0xf0] sm:$0xff]
        %v2019 = vadd.f32 %v1987, %v2003
        %v2020 = vadd.f32 %v1988, %v2004
        %v2021 = vadd.f32 %v1989, %v2005
        %v2022 = vadd.f32 %v1990, %v2006
        %v2023 = vadd.f32 %v1991, %v2007
        %v2024 = vadd.f32 %v1992, %v2008
        %v2025 = vadd.f32 %v1993, %v2009
        %v2026 = vadd.f32 %v1994, %v2010
        %v2027 = vadd.f32 %v1995, %v2011
        %v2028 = vadd.f32 %v1996, %v2012
        %v2029 = vadd.f32 %v1997, %v2013
        %v2030 = vadd.f32 %v1998, %v2014
        %v2031 = vadd.f32 %v1999, %v2015
        %v2032 = vadd.f32 %v2000, %v2016
        %v2033 = vadd.f32 %v2001, %v2017
        %v2034 = vadd.f32 %v2002, %v2018
        %2035 = vst [vmem:[%s176] sm:$0xff] %v2019
        %2036 = vst [vmem:[%s176 + $0x10] sm:$0xff] %v2020
        %2037 = vst [vmem:[%s176 + $0x20] sm:$0xff] %v2021
        %2038 = vst [vmem:[%s176 + $0x30] sm:$0xff] %v2022
        %2039 = vst [vmem:[%s176 + $0x40] sm:$0xff] %v2023
        %2040 = vst [vmem:[%s176 + $0x50] sm:$0xff] %v2024
        %2041 = vst [vmem:[%s176 + $0x60] sm:$0xff] %v2025
        %2042 = vst [vmem:[%s176 + $0x70] sm:$0xff] %v2026
        %2043 = vst [vmem:[%s176 + $0x80] sm:$0xff] %v2027
        %2044 = vst [vmem:[%s176 + $0x90] sm:$0xff] %v2028
        %2045 = vst [vmem:[%s176 + $0xa0] sm:$0xff] %v2029
        %2046 = vst [vmem:[%s176 + $0xb0] sm:$0xff] %v2030
        %2047 = vst [vmem:[%s176 + $0xc0] sm:$0xff] %v2031
        %2048 = vst [vmem:[%s176 + $0xd0] sm:$0xff] %v2032
        %2049 = vst [vmem:[%s176 + $0xe0] sm:$0xff] %v2033
        %2050 = vst [vmem:[%s176 + $0xf0] sm:$0xff] %v2034
        %v2051 = vld [vmem:[%s176 + $0x8] sm:$0xff]
        %v2052 = vld [vmem:[%s176 + $0x18] sm:$0xff]
        %v2053 = vld [vmem:[%s176 + $0x28] sm:$0xff]
        %v2054 = vld [vmem:[%s176 + $0x38] sm:$0xff]
        %v2055 = vld [vmem:[%s176 + $0x48] sm:$0xff]
        %v2056 = vld [vmem:[%s176 + $0x58] sm:$0xff]
        %v2057 = vld [vmem:[%s176 + $0x68] sm:$0xff]
        %v2058 = vld [vmem:[%s176 + $0x78] sm:$0xff]
        %v2059 = vld [vmem:[%s176 + $0x88] sm:$0xff]
        %v2060 = vld [vmem:[%s176 + $0x98] sm:$0xff]
        %v2061 = vld [vmem:[%s176 + $0xa8] sm:$0xff]
        %v2062 = vld [vmem:[%s176 + $0xb8] sm:$0xff]
        %v2063 = vld [vmem:[%s176 + $0xc8] sm:$0xff]
        %v2064 = vld [vmem:[%s176 + $0xd8] sm:$0xff]
        %v2065 = vld [vmem:[%s176 + $0xe8] sm:$0xff]
        %v2066 = vld [vmem:[%s176 + $0xf8] sm:$0xff]
        %v2067 = vpack.c.bf16 %v2052, %v2051
        %v2068 = vpack.c.bf16 %v2054, %v2053
        %v2069 = vpack.c.bf16 %v2056, %v2055
        %v2070 = vpack.c.bf16 %v2058, %v2057
        %v2071 = vpack.c.bf16 %v2060, %v2059
        %v2072 = vpack.c.bf16 %v2062, %v2061
        %v2073 = vpack.c.bf16 %v2064, %v2063
        %v2074 = vpack.c.bf16 %v2066, %v2065
        %v2075 = vld [vmem:[#allocation3] sm:$0xf]
        %v2076 = vld [vmem:[#allocation3 + $0x4] sm:$0xf]
        %v2077 = vld [vmem:[#allocation3 + $0x8] sm:$0xf]
        %v2078 = vld [vmem:[#allocation3 + $0xc] sm:$0xf]
        %v2079 = vld [vmem:[#allocation3 + $0x10] sm:$0xf]
        %v2080 = vld [vmem:[#allocation3 + $0x14] sm:$0xf]
        %v2081 = vld [vmem:[#allocation3 + $0x18] sm:$0xf]
        %v2082 = vld [vmem:[#allocation3 + $0x1c] sm:$0xf]
        %v2083 = vld [vmem:[#allocation3 + $0x20] sm:$0xf]
        %v2084 = vld [vmem:[#allocation3 + $0x24] sm:$0xf]
        %v2085 = vld [vmem:[#allocation3 + $0x28] sm:$0xf]
        %v2086 = vld [vmem:[#allocation3 + $0x2c] sm:$0xf]
        %v2087 = vld [vmem:[#allocation3 + $0x30] sm:$0xf]
        %v2088 = vld [vmem:[#allocation3 + $0x34] sm:$0xf]
        %v2089 = vld [vmem:[#allocation3 + $0x38] sm:$0xf]
        %v2090 = vld [vmem:[#allocation3 + $0x3c] sm:$0xf]
        %v2107 = vunpack.c.l.b16 %v2075
        %v2108 = vunpack.c.l.b16 %v2076
        %v2109 = vunpack.c.l.b16 %v2077
        %v2110 = vunpack.c.l.b16 %v2078
        %v2111 = vunpack.c.l.b16 %v2079
        %v2112 = vunpack.c.l.b16 %v2080
        %v2113 = vunpack.c.l.b16 %v2081
        %v2114 = vunpack.c.l.b16 %v2082
        %v2115 = vunpack.c.l.b16 %v2083
        %v2116 = vunpack.c.l.b16 %v2084
        %v2117 = vunpack.c.l.b16 %v2085
        %v2118 = vunpack.c.l.b16 %v2086
        %v2119 = vunpack.c.l.b16 %v2087
        %v2120 = vunpack.c.l.b16 %v2088
        %v2121 = vunpack.c.l.b16 %v2089
        %v2122 = vunpack.c.l.b16 %v2090
        %v2123 = vpack.c.b16 %v2108, %v2107
        %v2124 = vpack.c.b16 %v2110, %v2109
        %v2125 = vpack.c.b16 %v2112, %v2111
        %v2126 = vpack.c.b16 %v2114, %v2113
        %v2127 = vpack.c.b16 %v2116, %v2115
        %v2128 = vpack.c.b16 %v2118, %v2117
        %v2129 = vpack.c.b16 %v2120, %v2119
        %v2130 = vpack.c.b16 %v2122, %v2121
        %2139 = vmatprep.subr.bf16.mxu0 0
        %2140 = vmatpush1.bf16.msra.mxu0 %v2074
        %2141 = vmatprep.subr.bf16.mxu0 0
        %2142 = vmatpush1.bf16.msra.mxu0 %v2073
        %2143 = vmatprep.subr.bf16.mxu0 0
        %2144 = vmatpush1.bf16.msra.mxu0 %v2072
        %2145 = vmatprep.subr.bf16.mxu0 0
        %2146 = vmatpush1.bf16.msra.mxu0 %v2071
        %2147 = vmatprep.subr.bf16.mxu0 0
        %2148 = vmatpush1.bf16.msra.mxu0 %v2070
        %2149 = vmatprep.subr.bf16.mxu0 0
        %2150 = vmatpush1.bf16.msra.mxu0 %v2069
        %2151 = vmatprep.subr.bf16.mxu0 0
        %2152 = vmatpush1.bf16.msra.mxu0 %v2068
        %2153 = vmatprep.subr.bf16.mxu0 0
        %2154 = vmatpush1.bf16.msra.mxu0 %v2067
        %2155 = vmatprep.subr.bf16.mxu0 0
        %2156 = vmatpush2.bf16.msra.mxu0 0
        %2157 = vmatprep.subr.bf16.mxu0 0
        %2158 = vmatpush2.bf16.msra.mxu0 0
        %2159 = vmatprep.subr.bf16.mxu0 0
        %2160 = vmatpush2.bf16.msra.mxu0 0
        %2161 = vmatprep.subr.bf16.mxu0 0
        %2162 = vmatpush2.bf16.msra.mxu0 0
        %2163 = vmatprep.subr.bf16.mxu0 0
        %2164 = vmatpush2.bf16.msra.mxu0 0
        %2165 = vmatprep.subr.bf16.mxu0 0
        %2166 = vmatpush2.bf16.msra.mxu0 0
        %2167 = vmatprep.subr.bf16.mxu0 0
        %2168 = vmatpush2.bf16.msra.mxu0 0
        %2169 = vmatprep.subr.bf16.mxu0 0
        %2170 = vmatpush2.bf16.msra.mxu0 0
        %2171 = vmatprep.mubr.bf16.mxu0 0
        %2172 = vmatmul.mubr.bf16.gmra.mxu0 %v2123
        %v2173 = vpop.f32.mrf.mxu0
        %v2174 = vadd.f32 0.0, %v2173
        %v2175 = vpop.f32.mrf.mxu0
        %v2176 = vpop.f32.mrf.mxu0
        %v2177 = vadd.f32 0.0, %v2176
        %v2178 = vpop.f32.mrf.mxu0
        %2179 = vmatprep.mubr.bf16.mxu0 0
        %2180 = vmatmul.mubr.bf16.gmra.mxu0 %v2124
        %v2181 = vpop.f32.mrf.mxu0
        %v2182 = vadd.f32 0.0, %v2181
        %v2183 = vpop.f32.mrf.mxu0
        %v2184 = vpop.f32.mrf.mxu0
        %v2185 = vadd.f32 0.0, %v2184
        %v2186 = vpop.f32.mrf.mxu0
        %2187 = vmatprep.mubr.bf16.mxu0 0
        %2188 = vmatmul.mubr.bf16.gmra.mxu0 %v2125
        %v2189 = vpop.f32.mrf.mxu0
        %v2190 = vadd.f32 0.0, %v2189
        %v2191 = vpop.f32.mrf.mxu0
        %v2192 = vpop.f32.mrf.mxu0
        %v2193 = vadd.f32 0.0, %v2192
        %v2194 = vpop.f32.mrf.mxu0
        %2195 = vmatprep.mubr.bf16.mxu0 0
        %2196 = vmatmul.mubr.bf16.gmra.mxu0 %v2126
        %v2197 = vpop.f32.mrf.mxu0
        %v2198 = vadd.f32 0.0, %v2197
        %v2199 = vpop.f32.mrf.mxu0
        %v2200 = vpop.f32.mrf.mxu0
        %v2201 = vadd.f32 0.0, %v2200
        %v2202 = vpop.f32.mrf.mxu0
        %2203 = vmatprep.mubr.bf16.mxu0 0
        %2204 = vmatmul.mubr.bf16.gmra.mxu0 %v2127
        %v2205 = vpop.f32.mrf.mxu0
        %v2206 = vadd.f32 0.0, %v2205
        %v2207 = vpop.f32.mrf.mxu0
        %v2208 = vpop.f32.mrf.mxu0
        %v2209 = vadd.f32 0.0, %v2208
        %v2210 = vpop.f32.mrf.mxu0
        %2211 = vmatprep.mubr.bf16.mxu0 0
        %2212 = vmatmul.mubr.bf16.gmra.mxu0 %v2128
        %v2213 = vpop.f32.mrf.mxu0
        %v2214 = vadd.f32 0.0, %v2213
        %v2215 = vpop.f32.mrf.mxu0
        %v2216 = vpop.f32.mrf.mxu0
        %v2217 = vadd.f32 0.0, %v2216
        %v2218 = vpop.f32.mrf.mxu0
        %2219 = vmatprep.mubr.bf16.mxu0 0
        %2220 = vmatmul.mubr.bf16.gmra.mxu0 %v2129
        %v2221 = vpop.f32.mrf.mxu0
        %v2222 = vadd.f32 0.0, %v2221
        %v2223 = vpop.f32.mrf.mxu0
        %v2224 = vpop.f32.mrf.mxu0
        %v2225 = vadd.f32 0.0, %v2224
        %v2226 = vpop.f32.mrf.mxu0
        %2227 = vmatprep.mubr.bf16.mxu0 0
        %2228 = vmatmul.mubr.bf16.gmra.mxu0 %v2130
        %v2229 = vpop.f32.mrf.mxu0
        %v2230 = vadd.f32 0.0, %v2229
        %v2231 = vpop.f32.mrf.mxu0
        %v2232 = vpop.f32.mrf.mxu0
        %v2233 = vadd.f32 0.0, %v2232
        %v2234 = vpop.f32.mrf.mxu0
        %2235 = vdwg.mxu0
        %v2236 = vmul.f32 %v2174, 0.9
        %v2237 = vmul.f32 %v2177, 0.9
        %v2238 = vmul.f32 %v2182, 0.9
        %v2239 = vmul.f32 %v2185, 0.9
        %v2240 = vmul.f32 %v2190, 0.9
        %v2241 = vmul.f32 %v2193, 0.9
        %v2242 = vmul.f32 %v2198, 0.9
        %v2243 = vmul.f32 %v2201, 0.9
        %v2244 = vmul.f32 %v2206, 0.9
        %v2245 = vmul.f32 %v2209, 0.9
        %v2246 = vmul.f32 %v2214, 0.9
        %v2247 = vmul.f32 %v2217, 0.9
        %v2248 = vmul.f32 %v2222, 0.9
        %v2249 = vmul.f32 %v2225, 0.9
        %v2250 = vmul.f32 %v2230, 0.9
        %v2251 = vmul.f32 %v2233, 0.9
        %v2252 = vld [vmem:[#allocation2 + $0x8] sm:$0xff]
        %v2253 = vld [vmem:[#allocation2 + $0x18] sm:$0xff]
        %v2254 = vld [vmem:[#allocation2 + $0x28] sm:$0xff]
        %v2255 = vld [vmem:[#allocation2 + $0x38] sm:$0xff]
        %v2256 = vld [vmem:[#allocation2 + $0x48] sm:$0xff]
        %v2257 = vld [vmem:[#allocation2 + $0x58] sm:$0xff]
        %v2258 = vld [vmem:[#allocation2 + $0x68] sm:$0xff]
        %v2259 = vld [vmem:[#allocation2 + $0x78] sm:$0xff]
        %v2260 = vld [vmem:[#allocation2 + $0x88] sm:$0xff]
        %v2261 = vld [vmem:[#allocation2 + $0x98] sm:$0xff]
        %v2262 = vld [vmem:[#allocation2 + $0xa8] sm:$0xff]
        %v2263 = vld [vmem:[#allocation2 + $0xb8] sm:$0xff]
        %v2264 = vld [vmem:[#allocation2 + $0xc8] sm:$0xff]
        %v2265 = vld [vmem:[#allocation2 + $0xd8] sm:$0xff]
        %v2266 = vld [vmem:[#allocation2 + $0xe8] sm:$0xff]
        %v2267 = vld [vmem:[#allocation2 + $0xf8] sm:$0xff]
        %v2268 = vadd.f32 %v2236, %v2252
        %v2269 = vadd.f32 %v2237, %v2253
        %v2270 = vadd.f32 %v2238, %v2254
        %v2271 = vadd.f32 %v2239, %v2255
        %v2272 = vadd.f32 %v2240, %v2256
        %v2273 = vadd.f32 %v2241, %v2257
        %v2274 = vadd.f32 %v2242, %v2258
        %v2275 = vadd.f32 %v2243, %v2259
        %v2276 = vadd.f32 %v2244, %v2260
        %v2277 = vadd.f32 %v2245, %v2261
        %v2278 = vadd.f32 %v2246, %v2262
        %v2279 = vadd.f32 %v2247, %v2263
        %v2280 = vadd.f32 %v2248, %v2264
        %v2281 = vadd.f32 %v2249, %v2265
        %v2282 = vadd.f32 %v2250, %v2266
        %v2283 = vadd.f32 %v2251, %v2267
        %2284 = vst [vmem:[%s176 + $0x8] sm:$0xff] %v2268
        %2285 = vst [vmem:[%s176 + $0x18] sm:$0xff] %v2269
        %2286 = vst [vmem:[%s176 + $0x28] sm:$0xff] %v2270
        %2287 = vst [vmem:[%s176 + $0x38] sm:$0xff] %v2271
        %2288 = vst [vmem:[%s176 + $0x48] sm:$0xff] %v2272
        %2289 = vst [vmem:[%s176 + $0x58] sm:$0xff] %v2273
        %2290 = vst [vmem:[%s176 + $0x68] sm:$0xff] %v2274
        %2291 = vst [vmem:[%s176 + $0x78] sm:$0xff] %v2275
        %2292 = vst [vmem:[%s176 + $0x88] sm:$0xff] %v2276
        %2293 = vst [vmem:[%s176 + $0x98] sm:$0xff] %v2277
        %2294 = vst [vmem:[%s176 + $0xa8] sm:$0xff] %v2278
        %2295 = vst [vmem:[%s176 + $0xb8] sm:$0xff] %v2279
        %2296 = vst [vmem:[%s176 + $0xc8] sm:$0xff] %v2280
        %2297 = vst [vmem:[%s176 + $0xd8] sm:$0xff] %v2281
        %2298 = vst [vmem:[%s176 + $0xe8] sm:$0xff] %v2282
        %2299 = vst [vmem:[%s176 + $0xf8] sm:$0xff] %v2283
        %s2300 = sand.u32 %s75, 1
        %s2301 = scalar_lea.sflag [#allocation5], %s2300
        %s2302 = sand.u32 %s75, 1
        %s2303 = smul.addr %s2302, 256
        %s2304 = scalar_lea.vmem [#allocation8], %s2303
        // Predicated region
        $region37: #{tpu_custom_call.1} parent=27 // pred_check
          %p2305 = pneg %p85
        $region38: #{tpu_custom_call.1} parent=27 // pred_check_branch
          %2307 = sbr.rel (%p2305) target = $region40
        $region39: #{tpu_custom_call.1} parent=27 // pred_region
          %s2308 = smul.u32 2, %s20
          %s2310 = ssub.s32 4096, 4096
          %2311 = vsyncadd %s2301, %s2310
          %s2312 = smul.addr %s2308, 128
          %s2313 = scalar_lea.hbm %s2, %s2312
          %s2314 = sshll.u32 %s2304, 4
          %s2315 = int_to_ptr.vmem [resolvable:$true] %s2314
          %2320 = dma.vmem_to_hbm [thread:$0]  %s2315, 4096, %s2313, %s2301, 256, 512, 16
        $region40: #{tpu_custom_call.1} parent=27 // pred_fallthru
          _
      $region28: #{tpu_custom_call.1} parent=5 // pred_fallthru
        _
      %p2321 = scmp.le.s32.totalorder 2, %s15
      // Predicated region
      $region41: #{tpu_custom_call.1} parent=5 // pred_check
        %p2322 = pneg %p2321
      $region42: #{tpu_custom_call.1} parent=5 // pred_check_branch
        %2324 = sbr.rel (%p2322) target = $region44
      $region43: #{tpu_custom_call.1} parent=5 // pred_region
        %s2325 = ssub.s32 %s15, 2
        // Predicated region
        $region45: #{tpu_custom_call.1} parent=43 // pred_check
          %p2326 = pneg %p91
        $region46: #{tpu_custom_call.1} parent=43 // pred_check_branch
          %2328 = sbr.rel (%p2326) target = $region48
        $region47: #{tpu_custom_call.1} parent=43 // pred_region
          %s2329 = sand.u32 %s76, 1
          %s2330 = scalar_lea.sflag [#allocation5], %s2329
          %s2331 = sand.u32 %s76, 1
          %s2332 = smul.addr %s2331, 256
          %s2333 = scalar_lea.vmem [#allocation8], %s2332
          %2334 = dma.done %s2330, 4096
        $region48: #{tpu_custom_call.1} parent=43 // pred_fallthru
          _
      $region44: #{tpu_custom_call.1} parent=5 // pred_fallthru
        _
    $region6: #{tpu_custom_call.1} parent=1 // loop_footer
      %s19 = sadd.s32 1, %s15
    $region7: #{tpu_custom_call.1} parent=1 // loop_footer_branch
      %14 = sbr.rel target = $region3
    $region8: #{tpu_custom_call.1} parent=1 // loop_exit
      _
    %2335 = vsyncpa [#allocation4], 1
    %s2336 = scalar_lea.sflag [#allocation4], 1
    %2337 = vsyncpa %s2336, 1
    %2338 = vsyncpa [#allocation7], 1
    %s2339 = scalar_lea.sflag [#allocation7], 1
    %2340 = vsyncpa %s2339, 1
    %2341 = vsyncpa [#allocation5], 1
    %s2342 = scalar_lea.sflag [#allocation5], 1
    %2343 = vsyncpa %s2342, 1

</llo_original>
